<compile_context>
chip_gen: v6e
topology: v6e:2x2x1
jax: 0.10.0
libtpu: 0.0.40
codegen_flags: <defaults>
</compile_context>

<pallas_src>
import numpy as np
import jax
import jax.numpy as jnp
from jax.experimental import pallas as pl
from jax.experimental.pallas import tpu as pltpu


# ----------------------------------------------------------------------------
# Parameter construction (deterministic, matches HiPPO 'lmu' transition +
# scipy.signal.cont2discrete(..., method='bilinear'), reimplemented in numpy).
# ----------------------------------------------------------------------------
def lmu_transition(N):
    Q = np.arange(N, dtype=np.float64)
    R = (2.0 * Q + 1.0)[:, None]
    j, i = np.meshgrid(Q, Q)
    A = np.where(i < j, -1.0, (-1.0) ** (i - j + 1)) * R
    B = (-1.0) ** Q[:, None] * R
    return A, B


def bilinear_discretize(A, B, dt):
    # scipy gbt with alpha = 0.5 (Tustin / bilinear)
    N = A.shape[0]
    I = np.eye(N)
    M = I - 0.5 * dt * A
    Ad = np.linalg.solve(M, I + 0.5 * dt * A)
    Bd = np.linalg.solve(M, dt * B)
    return Ad, Bd.squeeze(-1)  # (N, N), (N,)


# ----------------------------------------------------------------------------
# Host-side chunk operators for the chunked scan (numpy, float64).
# ----------------------------------------------------------------------------
def build_chunk_operators(A, B, T):
    """Returns
      P: (N, T*N)  with P[:, j*N:(j+1)*N]  = (A^T)^(j+1)
      K: (T, T*N)  with K[i, j*N:(j+1)*N]  = B^T @ (A^T)^(j-i) for j >= i, else 0
    so that for a chunk of inputs F (Bt, T) and entering state c_in (Bt, N):
      C = c_in @ P + F @ K   gives C[:, j*N:(j+1)*N] = state after step j+1.
    """
    A = np.asarray(A, np.float64)
    B = np.asarray(B, np.float64).reshape(1, -1)
    N = A.shape[0]
    At = A.T

    powers = [np.eye(N)]
    for _ in range(T):
        powers.append(powers[-1] @ At)           # (A^T)^k, k = 0..T

    P = np.concatenate(powers[1:], axis=1)       # (N, T*N)

    R = np.concatenate([B @ powers[k] for k in range(T)], axis=0)  # (T, N)
    K = np.zeros((T, T, N), np.float64)
    for d in range(T):                           # diagonal offset d = j - i
        ii = np.arange(T - d)
        K[ii, ii + d, :] = R[d]
    return P, K.reshape(T, T * N)


# ----------------------------------------------------------------------------
# Pallas kernel: one time-chunk per grid iteration.
# ----------------------------------------------------------------------------
def hippo_legt_chunk_kernel(f_ref, p_ref, k_ref, out_ref, c_ref):
    # f_ref  : (Bt, T)      chunk inputs, time-last (lane-dense)
    # p_ref  : (N, T*N)     stacked powers of A^T (resident across grid)
    # k_ref  : (T, T*N)     lower-triangular input operator (resident)
    # out_ref: (1, Bt, T*N) output chunk (lane-dense)
    # c_ref  : (Bt, N)      VMEM scratch, state carried across chunks
    @pl.when(pl.program_id(0) == 0)
    def _():
        c_ref[...] = jnp.zeros_like(c_ref)

    n = c_ref.shape[1]
    tn = p_ref.shape[1]

    c_chunk = (
        jnp.dot(c_ref[...], p_ref[...], preferred_element_type=jnp.float32)
        + jnp.dot(f_ref[...], k_ref[...], preferred_element_type=jnp.float32)
    )
    out_ref[0] = c_chunk.astype(out_ref.dtype)
    # Carry = state after the last step of the chunk (last N columns).
    c_ref[...] = c_chunk[:, tn - n:]


def hippo_legt_forward(inputs, A, B, *, chunk=128):
    """inputs: (L, Bt) float32; A: (N, N); B: (N,). Returns (L, Bt, N) float32."""
    L, Bt = inputs.shape
    A = np.asarray(A, np.float32)
    B = np.asarray(B, np.float32)
    N = A.shape[0]
    T = int(chunk)

    num_chunks = int(pl.cdiv(L, T))
    L_pad = num_chunks * T

    # Time-last, zero-padded input: each grid step reads one lane-dense
    # (Bt, T) block.  Zero padding is harmless (recurrence is causal and the
    # padded outputs are dropped below).
    x = jnp.zeros((Bt, L_pad), jnp.float32).at[:, :L].set(
        jnp.asarray(inputs, jnp.float32).T
    )

    # Build chunk operators in float64 from the (float32) discretized A, B.
    P_np, K_np = build_chunk_operators(A.astype(np.float64), B.astype(np.float64), T)
    P = jnp.asarray(P_np, jnp.float32)   # (N, T*N)
    K = jnp.asarray(K_np, jnp.float32)   # (T, T*N)

    out_chunks = pl.pallas_call(
        hippo_legt_chunk_kernel,
        out_shape=jax.ShapeDtypeStruct((num_chunks, Bt, T * N), jnp.float32),
        grid_spec=pltpu.PrefetchScalarGridSpec(
            num_scalar_prefetch=0,
            grid=(num_chunks,),
            in_specs=[
                pl.BlockSpec((Bt, T), lambda t: (0, t)),      # inputs, chunk t
                pl.BlockSpec((N, T * N), lambda t: (0, 0)),   # P (resident)
                pl.BlockSpec((T, T * N), lambda t: (0, 0)),   # K (resident)
            ],
            out_specs=pl.BlockSpec((1, Bt, T * N), lambda t: (t, 0, 0)),
            scratch_shapes=[pltpu.VMEM((Bt, N), jnp.float32)],
        ),
        compiler_params=pltpu.CompilerParams(
            # The VMEM carry makes the time axis strictly sequential;
            # it must NOT be marked "parallel".
            dimension_semantics=("arbitrary",),
        ),
    )(x, P, K)

    # (num_chunks, Bt, T*N) -> (num_chunks, Bt, T, N) -> (L_pad, Bt, N); drop pad.
    out = (
        out_chunks.reshape(num_chunks, Bt, T, N)
        .transpose(0, 2, 1, 3)
        .reshape(L_pad, Bt, N)
    )
    return out[:L]


# ----------------------------------------------------------------------------
# Pure-JAX reference (mirrors the PyTorch loop exactly, fp32)
# ----------------------------------------------------------------------------
def hippo_legt_reference(inputs, A, B):
    A = jnp.asarray(A, jnp.float32)
    Bv = jnp.asarray(B, jnp.float32)
    Bt = inputs.shape[1]
    N = A.shape[0]

    def step(c, f):
        c = c @ A.T + Bv * f[:, None]   # F.linear(c, A) + B * f
        return c, c

    c0 = jnp.zeros((Bt, N), jnp.float32)
    _, cs = jax.lax.scan(step, c0, jnp.asarray(inputs, jnp.float32))
    return cs


if __name__ == "__main__":
    N = 32
    L = 300          # not a multiple of the chunk -> exercises padding path
    Bt = 8
    T = 128
    dt = 1.0 / L

    A_cont, B_cont = lmu_transition(N)
    A_d, B_d = bilinear_discretize(A_cont, B_cont, dt)
    A_d = A_d.astype(np.float32)
    B_d = B_d.astype(np.float32)

    key = jax.random.PRNGKey(0)
    inputs = jax.random.normal(key, (L, Bt), dtype=jnp.float32)

    out = hippo_legt_forward(inputs, A_d, B_d, chunk=T)
    out = jax.block_until_ready(out)

    ref = jax.block_until_ready(hippo_legt_reference(inputs, A_d, B_d))

    assert out.shape == (L, Bt, N), out.shape
    # Chunked (f64-precomputed operator) math vs. sequential fp32 scan: allow
    # for fp32 accumulation differences over L steps.
    np.testing.assert_allclose(np.asarray(out), np.asarray(ref),
                               rtol=2e-3, atol=2e-3)
    print("KERNEL_OK")
</pallas_src>

<mosaic_0001>
module attributes {stable_mosaic.version = 11 : i64} {
  func.func @hippo_legt_chunk_kernel(%arg0: i32, %arg1: memref<8x128xf32, #tpu.memory_space<vmem>>, %arg2: memref<32x4096xf32, #tpu.memory_space<vmem>>, %arg3: memref<128x4096xf32, #tpu.memory_space<vmem>>, %arg4: memref<1x8x4096xf32, #tpu.memory_space<vmem>>, %arg5: memref<8x32xf32, #tpu.memory_space<vmem>>) attributes {dimension_semantics = [#tpu.dimension_semantics<arbitrary>], iteration_bounds = array<i64: 3>, scalar_prefetch = 0 : i64, scratch_operands = 1 : i64, tpu.core_type = #tpu.core_type<tc>, window_params = [{transform_indices = @transform_0, window_bounds = array<i64: 8, 128>}, {pipeline_mode = #tpu.pipeline_mode<synchronous>, transform_indices = @transform_1, window_bounds = array<i64: 32, 4096>}, {pipeline_mode = #tpu.pipeline_mode<synchronous>, transform_indices = @transform_2, window_bounds = array<i64: 128, 4096>}, {transform_indices = @transform_3, window_bounds = array<i64: 1, 8, 4096>}]} {
    %c0_i32 = arith.constant 0 : i32
    %0 = arith.cmpi eq, %arg0, %c0_i32 : i32
    %1 = arith.extui %0 : i1 to i32
    %c0_i32_0 = arith.constant 0 : i32
    %2 = arith.cmpi ne, %1, %c0_i32_0 : i32
    scf.if %2 {
      %cst_14 = arith.constant 0.000000e+00 : f32
      %15 = vector.broadcast %cst_14 : f32 to vector<8x32xf32>
      %c0_15 = arith.constant 0 : index
      %c0_16 = arith.constant 0 : index
      %16 = vector.load %arg5[%c0_15, %c0_16] : memref<8x32xf32, #tpu.memory_space<vmem>>, vector<8x32xf32>
      tpu.vector_store %arg5[%c0_15, %c0_16], %15 {strides = array<i32>} : memref<8x32xf32, #tpu.memory_space<vmem>>, vector<8x32xf32>,
    } else {
    }
    %c0 = arith.constant 0 : index
    %c0_1 = arith.constant 0 : index
    %3 = vector.load %arg5[%c0, %c0_1] : memref<8x32xf32, #tpu.memory_space<vmem>>, vector<8x32xf32>
    %c0_2 = arith.constant 0 : index
    %c0_3 = arith.constant 0 : index
    %4 = vector.load %arg2[%c0_2, %c0_3] : memref<32x4096xf32, #tpu.memory_space<vmem>>, vector<32x4096xf32>
    %cst = arith.constant dense<0.000000e+00> : vector<8x4096xf32>
    %5 = tpu.matmul %3, %4, %cst {dimension_numbers = #tpu.dot_dimension_numbers<[1], [0], [0], [1], [0, 0, 1, 1], [], []>} : vector<8x32xf32>, vector<32x4096xf32>, vector<8x4096xf32> -> vector<8x4096xf32>
    %c0_4 = arith.constant 0 : index
    %c0_5 = arith.constant 0 : index
    %6 = vector.load %arg1[%c0_4, %c0_5] : memref<8x128xf32, #tpu.memory_space<vmem>>, vector<8x128xf32>
    %c0_6 = arith.constant 0 : index
    %c0_7 = arith.constant 0 : index
    %7 = vector.load %arg3[%c0_6, %c0_7] : memref<128x4096xf32, #tpu.memory_space<vmem>>, vector<128x4096xf32>
    %cst_8 = arith.constant dense<0.000000e+00> : vector<8x4096xf32>
    %8 = tpu.matmul %6, %7, %cst_8 {dimension_numbers = #tpu.dot_dimension_numbers<[1], [0], [0], [1], [0, 0, 1, 1], [], []>} : vector<8x128xf32>, vector<128x4096xf32>, vector<8x4096xf32> -> vector<8x4096xf32>
    %9 = arith.addf %5, %8 : vector<8x4096xf32>
    %c0_9 = arith.constant 0 : index
    %c0_10 = arith.constant 0 : index
    %c0_11 = arith.constant 0 : index
    %10 = vector.load %arg4[%c0_9, %c0_10, %c0_11] : memref<1x8x4096xf32, #tpu.memory_space<vmem>>, vector<1x8x4096xf32>
    %11 = vector.shape_cast %10 : vector<1x8x4096xf32> to vector<8x4096xf32>
    %12 = vector.shape_cast %9 : vector<8x4096xf32> to vector<1x8x4096xf32>
    tpu.vector_store %arg4[%c0_9, %c0_10, %c0_11], %12 {strides = array<i32>} : memref<1x8x4096xf32, #tpu.memory_space<vmem>>, vector<1x8x4096xf32>,
    %13 = vector.extract_strided_slice %9 {offsets = [0, 4064], sizes = [8, 32], strides = [1, 1]} : vector<8x4096xf32> to vector<8x32xf32>
    %c0_12 = arith.constant 0 : index
    %c0_13 = arith.constant 0 : index
    %14 = vector.load %arg5[%c0_12, %c0_13] : memref<8x32xf32, #tpu.memory_space<vmem>>, vector<8x32xf32>
    tpu.vector_store %arg5[%c0_12, %c0_13], %13 {strides = array<i32>} : memref<8x32xf32, #tpu.memory_space<vmem>>, vector<8x32xf32>,
    return
  }
  func.func @transform_0(%arg0: i32) -> (i32, i32) {
    %c0_i32 = arith.constant 0 : i32
    %c0_i32_0 = arith.constant 0 : i32
    return %c0_i32, %arg0 : i32, i32
  }
  func.func @transform_1(%arg0: i32) -> (i32, i32) {
    %c0_i32 = arith.constant 0 : i32
    %c0_i32_0 = arith.constant 0 : i32
    %c0_i32_1 = arith.constant 0 : i32
    return %c0_i32, %c0_i32_0 : i32, i32
  }
  func.func @transform_2(%arg0: i32) -> (i32, i32) {
    %c0_i32 = arith.constant 0 : i32
    %c0_i32_0 = arith.constant 0 : i32
    %c0_i32_1 = arith.constant 0 : i32
    return %c0_i32, %c0_i32_0 : i32, i32
  }
  func.func @transform_3(%arg0: i32) -> (i32, i32, i32) {
    %c0_i32 = arith.constant 0 : i32
    %c0_i32_0 = arith.constant 0 : i32
    %c0_i32_1 = arith.constant 0 : i32
    return %arg0, %c0_i32, %c0_i32_0 : i32, i32, i32
  }
}

</mosaic_0001>

<llo_original>
// kernel: tpu_custom_call.1
$region0: #{tpu_custom_call.1}
  #allocation0 [shape = 'u32[]', space=smem, size = 0x4, offset = 0x4, fixed_abs, tag = 'smem constant byte address 0x4 - core index']
  #allocation1 [shape = 'u32[144,128]{1,0:T(1,128)}', space=vmem, size = 0x12000, scoped, tag = 'internal scratch']
  #allocation2 [shape = 'f32[8,32]{1,0:T(8,128)}', space=vmem, size = 0x1000, scoped, tag = 'scratch operand']
  %s0 = inlined_call_operand.hbm [shape: f32[8,384], index: 0, kind: input, shape index: {}]
  %s1 = inlined_call_operand.hbm [shape: f32[32,4096], index: 1, kind: input, shape index: {}]
  %s2 = inlined_call_operand.hbm [shape: f32[128,4096], index: 2, kind: input, shape index: {}]
  %s3 = inlined_call_operand.hbm [shape: f32[3,8,4096], index: 3, kind: output, shape index: {}]
  %s4 = sld [smem:[#allocation0]]
  $region61: #{tpu_custom_call.1} parent=0
    _
  %s6 = ssub.s32 1, %s4
  %s7 = scalar_select 0, %s6, %s4
  $region1: #{tpu_custom_call.1} parent=0
    #allocation3 [shape = 'u8[8192]{0}', space=vmem, size = 0x2000, scoped, tag = 'input window, operand 0']
    #allocation4 [shape = 's32[2]{0}', space=sflag, size = 0x8, scoped, tag = 'scoped memory for tpu_custom_call.1']
    #allocation5 [shape = 's32[2]{0}', space=sflag, size = 0x8, scoped, tag = 'scoped memory for tpu_custom_call.1']
    #allocation6 [shape = 'u8[524288]{0}', space=vmem, size = 0x80000, scoped, tag = 'input window, operand 1, single buffered']
    #allocation7 [shape = 's32[1]{0}', space=sflag, size = 0x4, scoped, tag = 'scoped memory for tpu_custom_call.1']
    #allocation8 [shape = 'u8[2097152]{0}', space=vmem, size = 0x200000, scoped, tag = 'input window, operand 2, single buffered']
    #allocation9 [shape = 'u8[262144]{0}', space=vmem, size = 0x40000, scoped, tag = 'output window, operand 0']
    %8 = vsyncpa [#allocation4], 0
    %s9 = scalar_lea.sflag [#allocation4], 1
    %10 = vsyncpa %s9, 0
    %11 = vsyncpa [#allocation7], 0
    %12 = vsyncpa [#allocation5], 0
    %s13 = scalar_lea.sflag [#allocation5], 1
    %14 = vsyncpa %s13, 0
    loop: start=0, step=1, limit=5
    $region2: #{tpu_custom_call.1} parent=1 // loop_pre_header
      _
    $region3: #{tpu_custom_call.1} parent=1 // loop_header
      %s16 = sphi 0, %s20
      %p17 = scmp.ge.s32.totalorder %s16, 5
      %s26 = sphi 0, %s28
      %s29 = sphi 0, %s26
      %s30 = sphi 0, %s29
      %s46 = sphi 0, %s30
      %s50 = sphi 0, %s50
      %s52 = sphi 0, %s50
      %s53 = sphi 0, %s52
      %s67 = sphi 0, %s53
      %s71 = sphi 0, %s71
      %s73 = sphi 0, %s71
      %s74 = sphi 0, %s73
      %s88 = sphi 0, %s74
      %s94 = sphi 0, %s96
      %s97 = sphi 0, %s94
      %s98 = sphi 0, %s97
      %s114 = sphi 0, %s98
    $region4: #{tpu_custom_call.1} parent=1 // loop_header_branch
      %19 = sbr.rel (%p17) target = $region8
    $region5: #{tpu_custom_call.1} parent=1 // loop_body
      %s21 = ssub.s32 %s16, 1
      %s22 = ssub.s32 %s16, 2
      %s23 = sadd.s32 %s16, 1
      %s24 = ssub.s32 %s16, %s23
      %p25 = scmp.eq.s32.totalorder %s24, 0
      %s27 = sadd.s32 %s26, 1
      %s28 = scalar_select %p25, %s26, %s27
      %p31 = pneg %p25
      %p32 = scmp.eq.s32.totalorder %s16, 2
      %p33 = por %p31, %p32
      %p34 = scmp.ne.s32.totalorder %s26, %s29
      %p35 = scmp.eq.s32.totalorder %s16, 0
      %p36 = por %p34, %p35
      %p37 = scmp.ne.s32.totalorder %s26, %s29
      %p38 = scmp.eq.s32.totalorder %s21, 2
      %p39 = por %p37, %p38
      %p40 = scmp.ne.s32.totalorder %s29, %s30
      %p41 = scmp.eq.s32.totalorder %s21, 0
      %p42 = por %p40, %p41
      %p43 = scmp.ne.s32.totalorder %s29, %s30
      %p44 = scmp.eq.s32.totalorder %s22, 2
      %p45 = por %p43, %p44
      %p47 = scmp.ne.s32.totalorder %s30, %s46
      %p48 = scmp.eq.s32.totalorder %s22, 0
      %p49 = por %p47, %p48
      %s51 = sadd.s32 %s50, 1
      %p54 = scmp.eq.s32.totalorder %s16, 2
      %p55 = scmp.ne.s32.totalorder %s50, %s52
      %p56 = scmp.eq.s32.totalorder %s16, 0
      %p57 = por %p55, %p56
      %p58 = scmp.ne.s32.totalorder %s50, %s52
      %p59 = scmp.eq.s32.totalorder %s21, 2
      %p60 = por %p58, %p59
      %p61 = scmp.ne.s32.totalorder %s52, %s53
      %p62 = scmp.eq.s32.totalorder %s21, 0
      %p63 = por %p61, %p62
      %p64 = scmp.ne.s32.totalorder %s52, %s53
      %p65 = scmp.eq.s32.totalorder %s22, 2
      %p66 = por %p64, %p65
      %p68 = scmp.ne.s32.totalorder %s53, %s67
      %p69 = scmp.eq.s32.totalorder %s22, 0
      %p70 = por %p68, %p69
      %s72 = sadd.s32 %s71, 1
      %p75 = scmp.eq.s32.totalorder %s16, 2
      %p76 = scmp.ne.s32.totalorder %s71, %s73
      %p77 = scmp.eq.s32.totalorder %s16, 0
      %p78 = por %p76, %p77
      %p79 = scmp.ne.s32.totalorder %s71, %s73
      %p80 = scmp.eq.s32.totalorder %s21, 2
      %p81 = por %p79, %p80
      %p82 = scmp.ne.s32.totalorder %s73, %s74
      %p83 = scmp.eq.s32.totalorder %s21, 0
      %p84 = por %p82, %p83
      %p85 = scmp.ne.s32.totalorder %s73, %s74
      %p86 = scmp.eq.s32.totalorder %s22, 2
      %p87 = por %p85, %p86
      %p89 = scmp.ne.s32.totalorder %s74, %s88
      %p90 = scmp.eq.s32.totalorder %s22, 0
      %p91 = por %p89, %p90
      %s92 = ssub.s32 %s16, %s23
      %p93 = scmp.eq.s32.totalorder %s92, 0
      %s95 = sadd.s32 %s94, 1
      %s96 = scalar_select %p93, %s94, %s95
      %p99 = pneg %p93
      %p100 = scmp.eq.s32.totalorder %s16, 2
      %p101 = por %p99, %p100
      %p102 = scmp.ne.s32.totalorder %s94, %s97
      %p103 = scmp.eq.s32.totalorder %s16, 0
      %p104 = por %p102, %p103
      %p105 = scmp.ne.s32.totalorder %s94, %s97
      %p106 = scmp.eq.s32.totalorder %s21, 2
      %p107 = por %p105, %p106
      %p108 = scmp.ne.s32.totalorder %s97, %s98
      %p109 = scmp.eq.s32.totalorder %s21, 0
      %p110 = por %p108, %p109
      %p111 = scmp.ne.s32.totalorder %s97, %s98
      %p112 = scmp.eq.s32.totalorder %s22, 2
      %p113 = por %p111, %p112
      %p115 = scmp.ne.s32.totalorder %s98, %s114
      %p116 = scmp.eq.s32.totalorder %s22, 0
      %p117 = por %p115, %p116
      %p118 = scmp.le.s32.totalorder 1, %s16
      %p119 = scmp.lt.s32.totalorder %s16, 4
      %p120 = pnand %p118, %p119
      %p121 = pneg %p120
      // Predicated region
      $region9: #{tpu_custom_call.1} parent=5 // pred_check
        _
      $region10: #{tpu_custom_call.1} parent=5 // pred_check_branch
        %123 = sbr.rel (%p120) target = $region12
      $region11: #{tpu_custom_call.1} parent=5 // pred_region
        %s124 = ssub.s32 %s16, 1
        // Predicated region
        $region13: #{tpu_custom_call.1} parent=11 // pred_check
          %p125 = pneg %p63
        $region14: #{tpu_custom_call.1} parent=11 // pred_check_branch
          %127 = sbr.rel (%p125) target = $region16
        $region15: #{tpu_custom_call.1} parent=11 // pred_region
          %s129 = ssub.s32 16384, 16384
          %130 = vsyncadd [#allocation7], %s129
          %s131 = sshll.u32 [#allocation6], 4
          %s132 = int_to_ptr.vmem [resolvable:$true] %s131
          %137 = dma.hbm_to_vmem [thread:$0]  %s1, 16384, %s132, [#allocation7], 4096, 4096, 256
        $region16: #{tpu_custom_call.1} parent=11 // pred_fallthru
          _
        // Predicated region
        $region17: #{tpu_custom_call.1} parent=11 // pred_check
          %p138 = pneg %p84
        $region18: #{tpu_custom_call.1} parent=11 // pred_check_branch
          %140 = sbr.rel (%p138) target = $region20
        $region19: #{tpu_custom_call.1} parent=11 // pred_region
          %s142 = ssub.s32 65536, 65536
          %143 = vsyncadd [#allocation7], %s142
          %s144 = sshll.u32 [#allocation8], 4
          %s145 = int_to_ptr.vmem [resolvable:$true] %s144
          %150 = dma.hbm_to_vmem [thread:$0]  %s2, 65536, %s145, [#allocation7], 4096, 4096, 256
        $region20: #{tpu_custom_call.1} parent=11 // pred_fallthru
          _
      $region12: #{tpu_custom_call.1} parent=5 // pred_fallthru
        _
      %p151 = scmp.lt.s32.totalorder %s16, 3
      // Predicated region
      $region21: #{tpu_custom_call.1} parent=5 // pred_check
        %p152 = pneg %p151
      $region22: #{tpu_custom_call.1} parent=5 // pred_check_branch
        %154 = sbr.rel (%p152) target = $region24
      $region23: #{tpu_custom_call.1} parent=5 // pred_region
        // Predicated region
        $region25: #{tpu_custom_call.1} parent=23 // pred_check
          %p155 = pneg %p36
        $region26: #{tpu_custom_call.1} parent=23 // pred_check_branch
          %157 = sbr.rel (%p155) target = $region28
        $region27: #{tpu_custom_call.1} parent=23 // pred_region
          %s158 = sand.u32 %s26, 1
          %s159 = scalar_lea.sflag [#allocation4], %s158
          %s160 = sand.u32 %s26, 1
          %s161 = smul.addr %s160, 8
          %s162 = scalar_lea.vmem [#allocation3], %s161
          %s164 = ssub.s32 128, 128
          %165 = vsyncadd %s159, %s164
          %s166 = smul.addr %s16, 128
          %s167 = scalar_lea.hbm %s0, %s166
          %s169 = sshll.u32 %s162, 4
          %s170 = int_to_ptr.vmem [resolvable:$true] %s169
          %172 = dma.hbm_to_vmem [thread:$0]  %s167, 128, %s170, %s159
        $region28: #{tpu_custom_call.1} parent=23 // pred_fallthru
          _
      $region24: #{tpu_custom_call.1} parent=5 // pred_fallthru
        _
      %p173 = scmp.le.s32.totalorder 1, %s16
      %p174 = scmp.lt.s32.totalorder %s16, 4
      %p175 = pnand %p173, %p174
      %p176 = pneg %p175
      // Predicated region
      $region29: #{tpu_custom_call.1} parent=5 // pred_check
        _
      $region30: #{tpu_custom_call.1} parent=5 // pred_check_branch
        %178 = sbr.rel (%p175) target = $region32
      $region31: #{tpu_custom_call.1} parent=5 // pred_region
        %s179 = ssub.s32 %s16, 1
        %s180 = sand.u32 %s29, 1
        %s181 = scalar_lea.sflag [#allocation4], %s180
        %s182 = sand.u32 %s29, 1
        %s183 = smul.addr %s182, 8
        %s184 = scalar_lea.vmem [#allocation3], %s183
        // Predicated region
        $region33: #{tpu_custom_call.1} parent=31 // pred_check
          %p185 = pneg %p42
        $region34: #{tpu_custom_call.1} parent=31 // pred_check_branch
          %187 = sbr.rel (%p185) target = $region36
        $region35: #{tpu_custom_call.1} parent=31 // pred_region
          %188 = dma.done %s181, 128
        $region36: #{tpu_custom_call.1} parent=31 // pred_fallthru
          _
        // Predicated region
        $region37: #{tpu_custom_call.1} parent=31 // pred_check
          %p189 = pneg %p63
        $region38: #{tpu_custom_call.1} parent=31 // pred_check_branch
          %191 = sbr.rel (%p189) target = $region40
        $region39: #{tpu_custom_call.1} parent=31 // pred_region
          %192 = dma.done [#allocation7], 16384
        $region40: #{tpu_custom_call.1} parent=31 // pred_fallthru
          _
        // Predicated region
        $region41: #{tpu_custom_call.1} parent=31 // pred_check
          %p193 = pneg %p84
        $region42: #{tpu_custom_call.1} parent=31 // pred_check_branch
          %195 = sbr.rel (%p193) target = $region44
        $region43: #{tpu_custom_call.1} parent=31 // pred_region
          %196 = dma.done [#allocation7], 65536
        $region44: #{tpu_custom_call.1} parent=31 // pred_fallthru
          _
        %s197 = sand.u32 %s29, 1
        %s198 = scalar_lea.sflag [#allocation4], %s197
        %s199 = sand.u32 %s29, 1
        %s200 = smul.addr %s199, 8
        %s201 = scalar_lea.vmem [#allocation3], %s200
        %p202 = pneg %p42
        %p203 = pneg %p39
        %p204 = pneg %p63
        %p205 = pneg %p60
        %p206 = pneg %p84
        %p207 = pneg %p81
        %p208 = pneg %p110
        %p209 = pneg %p107
        %s210 = sand.u32 %s97, 1
        %s211 = scalar_lea.sflag [#allocation5], %s210
        %s212 = sand.u32 %s97, 1
        %s213 = smul.addr %s212, 256
        %s214 = scalar_lea.vmem [#allocation9], %s213
        %p215 = scmp.eq.s32.totalorder %s21, 0
        // Predicated region
        $region45: #{tpu_custom_call.1} parent=31 // pred_check
          %p216 = pneg %p215
        $region46: #{tpu_custom_call.1} parent=31 // pred_check_branch
          %218 = sbr.rel (%p216) target = $region48
        $region47: #{tpu_custom_call.1} parent=31 // pred_region
          %vm219 = vcmask 261120
          %220 = vst.msk [vmem:[#allocation2] sm:$0xff] %vm219, 0.0
        $region48: #{tpu_custom_call.1} parent=31 // pred_fallthru
          _
        %v221 = vld [vmem:[#allocation2] sm:$0xff]
        %v222 = vld [vmem:[#allocation6] sm:$0xff]
        %v223 = vld [vmem:[#allocation6 + $0x8] sm:$0xff]
        %v224 = vld [vmem:[#allocation6 + $0x10] sm:$0xff]
        %v225 = vld [vmem:[#allocation6 + $0x18] sm:$0xff]
        %v226 = vld [vmem:[#allocation6 + $0x20] sm:$0xff]
        %v227 = vld [vmem:[#allocation6 + $0x28] sm:$0xff]
        %v228 = vld [vmem:[#allocation6 + $0x30] sm:$0xff]
        %v229 = vld [vmem:[#allocation6 + $0x38] sm:$0xff]
        %v230 = vld [vmem:[#allocation6 + $0x40] sm:$0xff]
        %v231 = vld [vmem:[#allocation6 + $0x48] sm:$0xff]
        %v232 = vld [vmem:[#allocation6 + $0x50] sm:$0xff]
        %v233 = vld [vmem:[#allocation6 + $0x58] sm:$0xff]
        %v234 = vld [vmem:[#allocation6 + $0x60] sm:$0xff]
        %v235 = vld [vmem:[#allocation6 + $0x68] sm:$0xff]
        %v236 = vld [vmem:[#allocation6 + $0x70] sm:$0xff]
        %v237 = vld [vmem:[#allocation6 + $0x78] sm:$0xff]
        %v238 = vld [vmem:[#allocation6 + $0x80] sm:$0xff]
        %v239 = vld [vmem:[#allocation6 + $0x88] sm:$0xff]
        %v240 = vld [vmem:[#allocation6 + $0x90] sm:$0xff]
        %v241 = vld [vmem:[#allocation6 + $0x98] sm:$0xff]
        %v242 = vld [vmem:[#allocation6 + $0xa0] sm:$0xff]
        %v243 = vld [vmem:[#allocation6 + $0xa8] sm:$0xff]
        %v244 = vld [vmem:[#allocation6 + $0xb0] sm:$0xff]
        %v245 = vld [vmem:[#allocation6 + $0xb8] sm:$0xff]
        %v246 = vld [vmem:[#allocation6 + $0xc0] sm:$0xff]
        %v247 = vld [vmem:[#allocation6 + $0xc8] sm:$0xff]
        %v248 = vld [vmem:[#allocation6 + $0xd0] sm:$0xff]
        %v249 = vld [vmem:[#allocation6 + $0xd8] sm:$0xff]
        %v250 = vld [vmem:[#allocation6 + $0xe0] sm:$0xff]
        %v251 = vld [vmem:[#allocation6 + $0xe8] sm:$0xff]
        %v252 = vld [vmem:[#allocation6 + $0xf0] sm:$0xff]
        %v253 = vld [vmem:[#allocation6 + $0xf8] sm:$0xff]
        %v254 = vld [vmem:[#allocation6 + $0x100] sm:$0xff]
        %v255 = vld [vmem:[#allocation6 + $0x108] sm:$0xff]
        %v256 = vld [vmem:[#allocation6 + $0x110] sm:$0xff]
        %v257 = vld [vmem:[#allocation6 + $0x118] sm:$0xff]
        %v258 = vld [vmem:[#allocation6 + $0x120] sm:$0xff]
        %v259 = vld [vmem:[#allocation6 + $0x128] sm:$0xff]
        %v260 = vld [vmem:[#allocation6 + $0x130] sm:$0xff]
        %v261 = vld [vmem:[#allocation6 + $0x138] sm:$0xff]
        %v262 = vld [vmem:[#allocation6 + $0x140] sm:$0xff]
        %v263 = vld [vmem:[#allocation6 + $0x148] sm:$0xff]
        %v264 = vld [vmem:[#allocation6 + $0x150] sm:$0xff]
        %v265 = vld [vmem:[#allocation6 + $0x158] sm:$0xff]
        %v266 = vld [vmem:[#allocation6 + $0x160] sm:$0xff]
        %v267 = vld [vmem:[#allocation6 + $0x168] sm:$0xff]
        %v268 = vld [vmem:[#allocation6 + $0x170] sm:$0xff]
        %v269 = vld [vmem:[#allocation6 + $0x178] sm:$0xff]
        %v270 = vld [vmem:[#allocation6 + $0x180] sm:$0xff]
        %v271 = vld [vmem:[#allocation6 + $0x188] sm:$0xff]
        %v272 = vld [vmem:[#allocation6 + $0x190] sm:$0xff]
        %v273 = vld [vmem:[#allocation6 + $0x198] sm:$0xff]
        %v274 = vld [vmem:[#allocation6 + $0x1a0] sm:$0xff]
        %v275 = vld [vmem:[#allocation6 + $0x1a8] sm:$0xff]
        %v276 = vld [vmem:[#allocation6 + $0x1b0] sm:$0xff]
        %v277 = vld [vmem:[#allocation6 + $0x1b8] sm:$0xff]
        %v278 = vld [vmem:[#allocation6 + $0x1c0] sm:$0xff]
        %v279 = vld [vmem:[#allocation6 + $0x1c8] sm:$0xff]
        %v280 = vld [vmem:[#allocation6 + $0x1d0] sm:$0xff]
        %v281 = vld [vmem:[#allocation6 + $0x1d8] sm:$0xff]
        %v282 = vld [vmem:[#allocation6 + $0x1e0] sm:$0xff]
        %v283 = vld [vmem:[#allocation6 + $0x1e8] sm:$0xff]
        %v284 = vld [vmem:[#allocation6 + $0x1f0] sm:$0xff]
        %v285 = vld [vmem:[#allocation6 + $0x1f8] sm:$0xff]
        %v286 = vld [vmem:[#allocation6 + $0x200] sm:$0xff]
        %v287 = vld [vmem:[#allocation6 + $0x208] sm:$0xff]
        %v288 = vld [vmem:[#allocation6 + $0x210] sm:$0xff]
        %v289 = vld [vmem:[#allocation6 + $0x218] sm:$0xff]
        %v290 = vld [vmem:[#allocation6 + $0x220] sm:$0xff]
        %v291 = vld [vmem:[#allocation6 + $0x228] sm:$0xff]
        %v292 = vld [vmem:[#allocation6 + $0x230] sm:$0xff]
        %v293 = vld [vmem:[#allocation6 + $0x238] sm:$0xff]
        %v294 = vld [vmem:[#allocation6 + $0x240] sm:$0xff]
        %v295 = vld [vmem:[#allocation6 + $0x248] sm:$0xff]
        %v296 = vld [vmem:[#allocation6 + $0x250] sm:$0xff]
        %v297 = vld [vmem:[#allocation6 + $0x258] sm:$0xff]
        %v298 = vld [vmem:[#allocation6 + $0x260] sm:$0xff]
        %v299 = vld [vmem:[#allocation6 + $0x268] sm:$0xff]
        %v300 = vld [vmem:[#allocation6 + $0x270] sm:$0xff]
        %v301 = vld [vmem:[#allocation6 + $0x278] sm:$0xff]
        %v302 = vld [vmem:[#allocation6 + $0x280] sm:$0xff]
        %v303 = vld [vmem:[#allocation6 + $0x288] sm:$0xff]
        %v304 = vld [vmem:[#allocation6 + $0x290] sm:$0xff]
        %v305 = vld [vmem:[#allocation6 + $0x298] sm:$0xff]
        %v306 = vld [vmem:[#allocation6 + $0x2a0] sm:$0xff]
        %v307 = vld [vmem:[#allocation6 + $0x2a8] sm:$0xff]
        %v308 = vld [vmem:[#allocation6 + $0x2b0] sm:$0xff]
        %v309 = vld [vmem:[#allocation6 + $0x2b8] sm:$0xff]
        %v310 = vld [vmem:[#allocation6 + $0x2c0] sm:$0xff]
        %v311 = vld [vmem:[#allocation6 + $0x2c8] sm:$0xff]
        %v312 = vld [vmem:[#allocation6 + $0x2d0] sm:$0xff]
        %v313 = vld [vmem:[#allocation6 + $0x2d8] sm:$0xff]
        %v314 = vld [vmem:[#allocation6 + $0x2e0] sm:$0xff]
        %v315 = vld [vmem:[#allocation6 + $0x2e8] sm:$0xff]
        %v316 = vld [vmem:[#allocation6 + $0x2f0] sm:$0xff]
        %v317 = vld [vmem:[#allocation6 + $0x2f8] sm:$0xff]
        %v318 = vld [vmem:[#allocation6 + $0x300] sm:$0xff]
        %v319 = vld [vmem:[#allocation6 + $0x308] sm:$0xff]
        %v320 = vld [vmem:[#allocation6 + $0x310] sm:$0xff]
        %v321 = vld [vmem:[#allocation6 + $0x318] sm:$0xff]
        %v322 = vld [vmem:[#allocation6 + $0x320] sm:$0xff]
        %v323 = vld [vmem:[#allocation6 + $0x328] sm:$0xff]
        %v324 = vld [vmem:[#allocation6 + $0x330] sm:$0xff]
        %v325 = vld [vmem:[#allocation6 + $0x338] sm:$0xff]
        %v326 = vld [vmem:[#allocation6 + $0x340] sm:$0xff]
        %v327 = vld [vmem:[#allocation6 + $0x348] sm:$0xff]
        %v328 = vld [vmem:[#allocation6 + $0x350] sm:$0xff]
        %v329 = vld [vmem:[#allocation6 + $0x358] sm:$0xff]
        %v330 = vld [vmem:[#allocation6 + $0x360] sm:$0xff]
        %v331 = vld [vmem:[#allocation6 + $0x368] sm:$0xff]
        %v332 = vld [vmem:[#allocation6 + $0x370] sm:$0xff]
        %v333 = vld [vmem:[#allocation6 + $0x378] sm:$0xff]
        %v334 = vld [vmem:[#allocation6 + $0x380] sm:$0xff]
        %v335 = vld [vmem:[#allocation6 + $0x388] sm:$0xff]
        %v336 = vld [vmem:[#allocation6 + $0x390] sm:$0xff]
        %v337 = vld [vmem:[#allocation6 + $0x398] sm:$0xff]
        %v338 = vld [vmem:[#allocation6 + $0x3a0] sm:$0xff]
        %v339 = vld [vmem:[#allocation6 + $0x3a8] sm:$0xff]
        %v340 = vld [vmem:[#allocation6 + $0x3b0] sm:$0xff]
        %v341 = vld [vmem:[#allocation6 + $0x3b8] sm:$0xff]
        %v342 = vld [vmem:[#allocation6 + $0x3c0] sm:$0xff]
        %v343 = vld [vmem:[#allocation6 + $0x3c8] sm:$0xff]
        %v344 = vld [vmem:[#allocation6 + $0x3d0] sm:$0xff]
        %v345 = vld [vmem:[#allocation6 + $0x3d8] sm:$0xff]
        %v346 = vld [vmem:[#allocation6 + $0x3e0] sm:$0xff]
        %v347 = vld [vmem:[#allocation6 + $0x3e8] sm:$0xff]
        %v348 = vld [vmem:[#allocation6 + $0x3f0] sm:$0xff]
        %v349 = vld [vmem:[#allocation6 + $0x3f8] sm:$0xff]
        %v350 = vld [vmem:[%s184] sm:$0xff]
        %v351 = vld [vmem:[#allocation8] sm:$0xff]
        %v352 = vld [vmem:[#allocation8 + $0x8] sm:$0xff]
        %v353 = vld [vmem:[#allocation8 + $0x10] sm:$0xff]
        %v354 = vld [vmem:[#allocation8 + $0x18] sm:$0xff]
        %v355 = vld [vmem:[#allocation8 + $0x20] sm:$0xff]
        %v356 = vld [vmem:[#allocation8 + $0x28] sm:$0xff]
        %v357 = vld [vmem:[#allocation8 + $0x30] sm:$0xff]
        %v358 = vld [vmem:[#allocation8 + $0x38] sm:$0xff]
        %v359 = vld [vmem:[#allocation8 + $0x40] sm:$0xff]
        %v360 = vld [vmem:[#allocation8 + $0x48] sm:$0xff]
        %v361 = vld [vmem:[#allocation8 + $0x50] sm:$0xff]
        %v362 = vld [vmem:[#allocation8 + $0x58] sm:$0xff]
        %v363 = vld [vmem:[#allocation8 + $0x60] sm:$0xff]
        %v364 = vld [vmem:[#allocation8 + $0x68] sm:$0xff]
        %v365 = vld [vmem:[#allocation8 + $0x70] sm:$0xff]
        %v366 = vld [vmem:[#allocation8 + $0x78] sm:$0xff]
        %v367 = vld [vmem:[#allocation8 + $0x80] sm:$0xff]
        %v368 = vld [vmem:[#allocation8 + $0x88] sm:$0xff]
        %v369 = vld [vmem:[#allocation8 + $0x90] sm:$0xff]
        %v370 = vld [vmem:[#allocation8 + $0x98] sm:$0xff]
        %v371 = vld [vmem:[#allocation8 + $0xa0] sm:$0xff]
        %v372 = vld [vmem:[#allocation8 + $0xa8] sm:$0xff]
        %v373 = vld [vmem:[#allocation8 + $0xb0] sm:$0xff]
        %v374 = vld [vmem:[#allocation8 + $0xb8] sm:$0xff]
        %v375 = vld [vmem:[#allocation8 + $0xc0] sm:$0xff]
        %v376 = vld [vmem:[#allocation8 + $0xc8] sm:$0xff]
        %v377 = vld [vmem:[#allocation8 + $0xd0] sm:$0xff]
        %v378 = vld [vmem:[#allocation8 + $0xd8] sm:$0xff]
        %v379 = vld [vmem:[#allocation8 + $0xe0] sm:$0xff]
        %v380 = vld [vmem:[#allocation8 + $0xe8] sm:$0xff]
        %v381 = vld [vmem:[#allocation8 + $0xf0] sm:$0xff]
        %v382 = vld [vmem:[#allocation8 + $0xf8] sm:$0xff]
        %v383 = vld [vmem:[#allocation8 + $0x100] sm:$0xff]
        %v384 = vld [vmem:[#allocation8 + $0x108] sm:$0xff]
        %v385 = vld [vmem:[#allocation8 + $0x110] sm:$0xff]
        %v386 = vld [vmem:[#allocation8 + $0x118] sm:$0xff]
        %v387 = vld [vmem:[#allocation8 + $0x120] sm:$0xff]
        %v388 = vld [vmem:[#allocation8 + $0x128] sm:$0xff]
        %v389 = vld [vmem:[#allocation8 + $0x130] sm:$0xff]
        %v390 = vld [vmem:[#allocation8 + $0x138] sm:$0xff]
        %v391 = vld [vmem:[#allocation8 + $0x140] sm:$0xff]
        %v392 = vld [vmem:[#allocation8 + $0x148] sm:$0xff]
        %v393 = vld [vmem:[#allocation8 + $0x150] sm:$0xff]
        %v394 = vld [vmem:[#allocation8 + $0x158] sm:$0xff]
        %v395 = vld [vmem:[#allocation8 + $0x160] sm:$0xff]
        %v396 = vld [vmem:[#allocation8 + $0x168] sm:$0xff]
        %v397 = vld [vmem:[#allocation8 + $0x170] sm:$0xff]
        %v398 = vld [vmem:[#allocation8 + $0x178] sm:$0xff]
        %v399 = vld [vmem:[#allocation8 + $0x180] sm:$0xff]
        %v400 = vld [vmem:[#allocation8 + $0x188] sm:$0xff]
        %v401 = vld [vmem:[#allocation8 + $0x190] sm:$0xff]
        %v402 = vld [vmem:[#allocation8 + $0x198] sm:$0xff]
        %v403 = vld [vmem:[#allocation8 + $0x1a0] sm:$0xff]
        %v404 = vld [vmem:[#allocation8 + $0x1a8] sm:$0xff]
        %v405 = vld [vmem:[#allocation8 + $0x1b0] sm:$0xff]
        %v406 = vld [vmem:[#allocation8 + $0x1b8] sm:$0xff]
        %v407 = vld [vmem:[#allocation8 + $0x1c0] sm:$0xff]
        %v408 = vld [vmem:[#allocation8 + $0x1c8] sm:$0xff]
        %v409 = vld [vmem:[#allocation8 + $0x1d0] sm:$0xff]
        %v410 = vld [vmem:[#allocation8 + $0x1d8] sm:$0xff]
        %v411 = vld [vmem:[#allocation8 + $0x1e0] sm:$0xff]
        %v412 = vld [vmem:[#allocation8 + $0x1e8] sm:$0xff]
        %v413 = vld [vmem:[#allocation8 + $0x1f0] sm:$0xff]
        %v414 = vld [vmem:[#allocation8 + $0x1f8] sm:$0xff]
        %v415 = vld [vmem:[#allocation8 + $0x200] sm:$0xff]
        %v416 = vld [vmem:[#allocation8 + $0x208] sm:$0xff]
        %v417 = vld [vmem:[#allocation8 + $0x210] sm:$0xff]
        %v418 = vld [vmem:[#allocation8 + $0x218] sm:$0xff]
        %v419 = vld [vmem:[#allocation8 + $0x220] sm:$0xff]
        %v420 = vld [vmem:[#allocation8 + $0x228] sm:$0xff]
        %v421 = vld [vmem:[#allocation8 + $0x230] sm:$0xff]
        %v422 = vld [vmem:[#allocation8 + $0x238] sm:$0xff]
        %v423 = vld [vmem:[#allocation8 + $0x240] sm:$0xff]
        %v424 = vld [vmem:[#allocation8 + $0x248] sm:$0xff]
        %v425 = vld [vmem:[#allocation8 + $0x250] sm:$0xff]
        %v426 = vld [vmem:[#allocation8 + $0x258] sm:$0xff]
        %v427 = vld [vmem:[#allocation8 + $0x260] sm:$0xff]
        %v428 = vld [vmem:[#allocation8 + $0x268] sm:$0xff]
        %v429 = vld [vmem:[#allocation8 + $0x270] sm:$0xff]
        %v430 = vld [vmem:[#allocation8 + $0x278] sm:$0xff]
        %v431 = vld [vmem:[#allocation8 + $0x280] sm:$0xff]
        %v432 = vld [vmem:[#allocation8 + $0x288] sm:$0xff]
        %v433 = vld [vmem:[#allocation8 + $0x290] sm:$0xff]
        %v434 = vld [vmem:[#allocation8 + $0x298] sm:$0xff]
        %v435 = vld [vmem:[#allocation8 + $0x2a0] sm:$0xff]
        %v436 = vld [vmem:[#allocation8 + $0x2a8] sm:$0xff]
        %v437 = vld [vmem:[#allocation8 + $0x2b0] sm:$0xff]
        %v438 = vld [vmem:[#allocation8 + $0x2b8] sm:$0xff]
        %v439 = vld [vmem:[#allocation8 + $0x2c0] sm:$0xff]
        %v440 = vld [vmem:[#allocation8 + $0x2c8] sm:$0xff]
        %v441 = vld [vmem:[#allocation8 + $0x2d0] sm:$0xff]
        %v442 = vld [vmem:[#allocation8 + $0x2d8] sm:$0xff]
        %v443 = vld [vmem:[#allocation8 + $0x2e0] sm:$0xff]
        %v444 = vld [vmem:[#allocation8 + $0x2e8] sm:$0xff]
        %v445 = vld [vmem:[#allocation8 + $0x2f0] sm:$0xff]
        %v446 = vld [vmem:[#allocation8 + $0x2f8] sm:$0xff]
        %v447 = vld [vmem:[#allocation8 + $0x300] sm:$0xff]
        %v448 = vld [vmem:[#allocation8 + $0x308] sm:$0xff]
        %v449 = vld [vmem:[#allocation8 + $0x310] sm:$0xff]
        %v450 = vld [vmem:[#allocation8 + $0x318] sm:$0xff]
        %v451 = vld [vmem:[#allocation8 + $0x320] sm:$0xff]
        %v452 = vld [vmem:[#allocation8 + $0x328] sm:$0xff]
        %v453 = vld [vmem:[#allocation8 + $0x330] sm:$0xff]
        %v454 = vld [vmem:[#allocation8 + $0x338] sm:$0xff]
        %v455 = vld [vmem:[#allocation8 + $0x340] sm:$0xff]
        %v456 = vld [vmem:[#allocation8 + $0x348] sm:$0xff]
        %v457 = vld [vmem:[#allocation8 + $0x350] sm:$0xff]
        %v458 = vld [vmem:[#allocation8 + $0x358] sm:$0xff]
        %v459 = vld [vmem:[#allocation8 + $0x360] sm:$0xff]
        %v460 = vld [vmem:[#allocation8 + $0x368] sm:$0xff]
        %v461 = vld [vmem:[#allocation8 + $0x370] sm:$0xff]
        %v462 = vld [vmem:[#allocation8 + $0x378] sm:$0xff]
        %v463 = vld [vmem:[#allocation8 + $0x380] sm:$0xff]
        %v464 = vld [vmem:[#allocation8 + $0x388] sm:$0xff]
        %v465 = vld [vmem:[#allocation8 + $0x390] sm:$0xff]
        %v466 = vld [vmem:[#allocation8 + $0x398] sm:$0xff]
        %v467 = vld [vmem:[#allocation8 + $0x3a0] sm:$0xff]
        %v468 = vld [vmem:[#allocation8 + $0x3a8] sm:$0xff]
        %v469 = vld [vmem:[#allocation8 + $0x3b0] sm:$0xff]
        %v470 = vld [vmem:[#allocation8 + $0x3b8] sm:$0xff]
        %v471 = vld [vmem:[#allocation8 + $0x3c0] sm:$0xff]
        %v472 = vld [vmem:[#allocation8 + $0x3c8] sm:$0xff]
        %v473 = vld [vmem:[#allocation8 + $0x3d0] sm:$0xff]
        %v474 = vld [vmem:[#allocation8 + $0x3d8] sm:$0xff]
        %v475 = vld [vmem:[#allocation8 + $0x3e0] sm:$0xff]
        %v476 = vld [vmem:[#allocation8 + $0x3e8] sm:$0xff]
        %v477 = vld [vmem:[#allocation8 + $0x3f0] sm:$0xff]
        %v478 = vld [vmem:[#allocation8 + $0x3f8] sm:$0xff]
        %v479 = vld [vmem:[#allocation8 + $0x400] sm:$0xff]
        %v480 = vld [vmem:[#allocation8 + $0x408] sm:$0xff]
        %v481 = vld [vmem:[#allocation8 + $0x410] sm:$0xff]
        %v482 = vld [vmem:[#allocation8 + $0x418] sm:$0xff]
        %v483 = vld [vmem:[#allocation8 + $0x420] sm:$0xff]
        %v484 = vld [vmem:[#allocation8 + $0x428] sm:$0xff]
        %v485 = vld [vmem:[#allocation8 + $0x430] sm:$0xff]
        %v486 = vld [vmem:[#allocation8 + $0x438] sm:$0xff]
        %v487 = vld [vmem:[#allocation8 + $0x440] sm:$0xff]
        %v488 = vld [vmem:[#allocation8 + $0x448] sm:$0xff]
        %v489 = vld [vmem:[#allocation8 + $0x450] sm:$0xff]
        %v490 = vld [vmem:[#allocation8 + $0x458] sm:$0xff]
        %v491 = vld [vmem:[#allocation8 + $0x460] sm:$0xff]
        %v492 = vld [vmem:[#allocation8 + $0x468] sm:$0xff]
        %v493 = vld [vmem:[#allocation8 + $0x470] sm:$0xff]
        %v494 = vld [vmem:[#allocation8 + $0x478] sm:$0xff]
        %v495 = vld [vmem:[#allocation8 + $0x480] sm:$0xff]
        %v496 = vld [vmem:[#allocation8 + $0x488] sm:$0xff]
        %v497 = vld [vmem:[#allocation8 + $0x490] sm:$0xff]
        %v498 = vld [vmem:[#allocation8 + $0x498] sm:$0xff]
        %v499 = vld [vmem:[#allocation8 + $0x4a0] sm:$0xff]
        %v500 = vld [vmem:[#allocation8 + $0x4a8] sm:$0xff]
        %v501 = vld [vmem:[#allocation8 + $0x4b0] sm:$0xff]
        %v502 = vld [vmem:[#allocation8 + $0x4b8] sm:$0xff]
        %v503 = vld [vmem:[#allocation8 + $0x4c0] sm:$0xff]
        %v504 = vld [vmem:[#allocation8 + $0x4c8] sm:$0xff]
        %v505 = vld [vmem:[#allocation8 + $0x4d0] sm:$0xff]
        %v506 = vld [vmem:[#allocation8 + $0x4d8] sm:$0xff]
        %v507 = vld [vmem:[#allocation8 + $0x4e0] sm:$0xff]
        %v508 = vld [vmem:[#allocation8 + $0x4e8] sm:$0xff]
        %v509 = vld [vmem:[#allocation8 + $0x4f0] sm:$0xff]
        %v510 = vld [vmem:[#allocation8 + $0x4f8] sm:$0xff]
        %v511 = vld [vmem:[#allocation8 + $0x500] sm:$0xff]
        %v512 = vld [vmem:[#allocation8 + $0x508] sm:$0xff]
        %v513 = vld [vmem:[#allocation8 + $0x510] sm:$0xff]
        %v514 = vld [vmem:[#allocation8 + $0x518] sm:$0xff]
        %v515 = vld [vmem:[#allocation8 + $0x520] sm:$0xff]
        %v516 = vld [vmem:[#allocation8 + $0x528] sm:$0xff]
        %v517 = vld [vmem:[#allocation8 + $0x530] sm:$0xff]
        %v518 = vld [vmem:[#allocation8 + $0x538] sm:$0xff]
        %v519 = vld [vmem:[#allocation8 + $0x540] sm:$0xff]
        %v520 = vld [vmem:[#allocation8 + $0x548] sm:$0xff]
        %v521 = vld [vmem:[#allocation8 + $0x550] sm:$0xff]
        %v522 = vld [vmem:[#allocation8 + $0x558] sm:$0xff]
        %v523 = vld [vmem:[#allocation8 + $0x560] sm:$0xff]
        %v524 = vld [vmem:[#allocation8 + $0x568] sm:$0xff]
        %v525 = vld [vmem:[#allocation8 + $0x570] sm:$0xff]
        %v526 = vld [vmem:[#allocation8 + $0x578] sm:$0xff]
        %v527 = vld [vmem:[#allocation8 + $0x580] sm:$0xff]
        %v528 = vld [vmem:[#allocation8 + $0x588] sm:$0xff]
        %v529 = vld [vmem:[#allocation8 + $0x590] sm:$0xff]
        %v530 = vld [vmem:[#allocation8 + $0x598] sm:$0xff]
        %v531 = vld [vmem:[#allocation8 + $0x5a0] sm:$0xff]
        %v532 = vld [vmem:[#allocation8 + $0x5a8] sm:$0xff]
        %v533 = vld [vmem:[#allocation8 + $0x5b0] sm:$0xff]
        %v534 = vld [vmem:[#allocation8 + $0x5b8] sm:$0xff]
        %v535 = vld [vmem:[#allocation8 + $0x5c0] sm:$0xff]
        %v536 = vld [vmem:[#allocation8 + $0x5c8] sm:$0xff]
        %v537 = vld [vmem:[#allocation8 + $0x5d0] sm:$0xff]
        %v538 = vld [vmem:[#allocation8 + $0x5d8] sm:$0xff]
        %v539 = vld [vmem:[#allocation8 + $0x5e0] sm:$0xff]
        %v540 = vld [vmem:[#allocation8 + $0x5e8] sm:$0xff]
        %v541 = vld [vmem:[#allocation8 + $0x5f0] sm:$0xff]
        %v542 = vld [vmem:[#allocation8 + $0x5f8] sm:$0xff]
        %v543 = vld [vmem:[#allocation8 + $0x600] sm:$0xff]
        %v544 = vld [vmem:[#allocation8 + $0x608] sm:$0xff]
        %v545 = vld [vmem:[#allocation8 + $0x610] sm:$0xff]
        %v546 = vld [vmem:[#allocation8 + $0x618] sm:$0xff]
        %v547 = vld [vmem:[#allocation8 + $0x620] sm:$0xff]
        %v548 = vld [vmem:[#allocation8 + $0x628] sm:$0xff]
        %v549 = vld [vmem:[#allocation8 + $0x630] sm:$0xff]
        %v550 = vld [vmem:[#allocation8 + $0x638] sm:$0xff]
        %v551 = vld [vmem:[#allocation8 + $0x640] sm:$0xff]
        %v552 = vld [vmem:[#allocation8 + $0x648] sm:$0xff]
        %v553 = vld [vmem:[#allocation8 + $0x650] sm:$0xff]
        %v554 = vld [vmem:[#allocation8 + $0x658] sm:$0xff]
        %v555 = vld [vmem:[#allocation8 + $0x660] sm:$0xff]
        %v556 = vld [vmem:[#allocation8 + $0x668] sm:$0xff]
        %v557 = vld [vmem:[#allocation8 + $0x670] sm:$0xff]
        %v558 = vld [vmem:[#allocation8 + $0x678] sm:$0xff]
        %v559 = vld [vmem:[#allocation8 + $0x680] sm:$0xff]
        %v560 = vld [vmem:[#allocation8 + $0x688] sm:$0xff]
        %v561 = vld [vmem:[#allocation8 + $0x690] sm:$0xff]
        %v562 = vld [vmem:[#allocation8 + $0x698] sm:$0xff]
        %v563 = vld [vmem:[#allocation8 + $0x6a0] sm:$0xff]
        %v564 = vld [vmem:[#allocation8 + $0x6a8] sm:$0xff]
        %v565 = vld [vmem:[#allocation8 + $0x6b0] sm:$0xff]
        %v566 = vld [vmem:[#allocation8 + $0x6b8] sm:$0xff]
        %v567 = vld [vmem:[#allocation8 + $0x6c0] sm:$0xff]
        %v568 = vld [vmem:[#allocation8 + $0x6c8] sm:$0xff]
        %v569 = vld [vmem:[#allocation8 + $0x6d0] sm:$0xff]
        %v570 = vld [vmem:[#allocation8 + $0x6d8] sm:$0xff]
        %v571 = vld [vmem:[#allocation8 + $0x6e0] sm:$0xff]
        %v572 = vld [vmem:[#allocation8 + $0x6e8] sm:$0xff]
        %v573 = vld [vmem:[#allocation8 + $0x6f0] sm:$0xff]
        %v574 = vld [vmem:[#allocation8 + $0x6f8] sm:$0xff]
        %v575 = vld [vmem:[#allocation8 + $0x700] sm:$0xff]
        %v576 = vld [vmem:[#allocation8 + $0x708] sm:$0xff]
        %v577 = vld [vmem:[#allocation8 + $0x710] sm:$0xff]
        %v578 = vld [vmem:[#allocation8 + $0x718] sm:$0xff]
        %v579 = vld [vmem:[#allocation8 + $0x720] sm:$0xff]
        %v580 = vld [vmem:[#allocation8 + $0x728] sm:$0xff]
        %v581 = vld [vmem:[#allocation8 + $0x730] sm:$0xff]
        %v582 = vld [vmem:[#allocation8 + $0x738] sm:$0xff]
        %v583 = vld [vmem:[#allocation8 + $0x740] sm:$0xff]
        %v584 = vld [vmem:[#allocation8 + $0x748] sm:$0xff]
        %v585 = vld [vmem:[#allocation8 + $0x750] sm:$0xff]
        %v586 = vld [vmem:[#allocation8 + $0x758] sm:$0xff]
        %v587 = vld [vmem:[#allocation8 + $0x760] sm:$0xff]
        %v588 = vld [vmem:[#allocation8 + $0x768] sm:$0xff]
        %v589 = vld [vmem:[#allocation8 + $0x770] sm:$0xff]
        %v590 = vld [vmem:[#allocation8 + $0x778] sm:$0xff]
        %v591 = vld [vmem:[#allocation8 + $0x780] sm:$0xff]
        %v592 = vld [vmem:[#allocation8 + $0x788] sm:$0xff]
        %v593 = vld [vmem:[#allocation8 + $0x790] sm:$0xff]
        %v594 = vld [vmem:[#allocation8 + $0x798] sm:$0xff]
        %v595 = vld [vmem:[#allocation8 + $0x7a0] sm:$0xff]
        %v596 = vld [vmem:[#allocation8 + $0x7a8] sm:$0xff]
        %v597 = vld [vmem:[#allocation8 + $0x7b0] sm:$0xff]
        %v598 = vld [vmem:[#allocation8 + $0x7b8] sm:$0xff]
        %v599 = vld [vmem:[#allocation8 + $0x7c0] sm:$0xff]
        %v600 = vld [vmem:[#allocation8 + $0x7c8] sm:$0xff]
        %v601 = vld [vmem:[#allocation8 + $0x7d0] sm:$0xff]
        %v602 = vld [vmem:[#allocation8 + $0x7d8] sm:$0xff]
        %v603 = vld [vmem:[#allocation8 + $0x7e0] sm:$0xff]
        %v604 = vld [vmem:[#allocation8 + $0x7e8] sm:$0xff]
        %v605 = vld [vmem:[#allocation8 + $0x7f0] sm:$0xff]
        %v606 = vld [vmem:[#allocation8 + $0x7f8] sm:$0xff]
        %v607 = vld [vmem:[#allocation8 + $0x800] sm:$0xff]
        %v608 = vld [vmem:[#allocation8 + $0x808] sm:$0xff]
        %v609 = vld [vmem:[#allocation8 + $0x810] sm:$0xff]
        %v610 = vld [vmem:[#allocation8 + $0x818] sm:$0xff]
        %v611 = vld [vmem:[#allocation8 + $0x820] sm:$0xff]
        %v612 = vld [vmem:[#allocation8 + $0x828] sm:$0xff]
        %v613 = vld [vmem:[#allocation8 + $0x830] sm:$0xff]
        %v614 = vld [vmem:[#allocation8 + $0x838] sm:$0xff]
        %v615 = vld [vmem:[#allocation8 + $0x840] sm:$0xff]
        %v616 = vld [vmem:[#allocation8 + $0x848] sm:$0xff]
        %v617 = vld [vmem:[#allocation8 + $0x850] sm:$0xff]
        %v618 = vld [vmem:[#allocation8 + $0x858] sm:$0xff]
        %v619 = vld [vmem:[#allocation8 + $0x860] sm:$0xff]
        %v620 = vld [vmem:[#allocation8 + $0x868] sm:$0xff]
        %v621 = vld [vmem:[#allocation8 + $0x870] sm:$0xff]
        %v622 = vld [vmem:[#allocation8 + $0x878] sm:$0xff]
        %v623 = vld [vmem:[#allocation8 + $0x880] sm:$0xff]
        %v624 = vld [vmem:[#allocation8 + $0x888] sm:$0xff]
        %v625 = vld [vmem:[#allocation8 + $0x890] sm:$0xff]
        %v626 = vld [vmem:[#allocation8 + $0x898] sm:$0xff]
        %v627 = vld [vmem:[#allocation8 + $0x8a0] sm:$0xff]
        %v628 = vld [vmem:[#allocation8 + $0x8a8] sm:$0xff]
        %v629 = vld [vmem:[#allocation8 + $0x8b0] sm:$0xff]
        %v630 = vld [vmem:[#allocation8 + $0x8b8] sm:$0xff]
        %v631 = vld [vmem:[#allocation8 + $0x8c0] sm:$0xff]
        %v632 = vld [vmem:[#allocation8 + $0x8c8] sm:$0xff]
        %v633 = vld [vmem:[#allocation8 + $0x8d0] sm:$0xff]
        %v634 = vld [vmem:[#allocation8 + $0x8d8] sm:$0xff]
        %v635 = vld [vmem:[#allocation8 + $0x8e0] sm:$0xff]
        %v636 = vld [vmem:[#allocation8 + $0x8e8] sm:$0xff]
        %v637 = vld [vmem:[#allocation8 + $0x8f0] sm:$0xff]
        %v638 = vld [vmem:[#allocation8 + $0x8f8] sm:$0xff]
        %v639 = vld [vmem:[#allocation8 + $0x900] sm:$0xff]
        %v640 = vld [vmem:[#allocation8 + $0x908] sm:$0xff]
        %v641 = vld [vmem:[#allocation8 + $0x910] sm:$0xff]
        %v642 = vld [vmem:[#allocation8 + $0x918] sm:$0xff]
        %v643 = vld [vmem:[#allocation8 + $0x920] sm:$0xff]
        %v644 = vld [vmem:[#allocation8 + $0x928] sm:$0xff]
        %v645 = vld [vmem:[#allocation8 + $0x930] sm:$0xff]
        %v646 = vld [vmem:[#allocation8 + $0x938] sm:$0xff]
        %v647 = vld [vmem:[#allocation8 + $0x940] sm:$0xff]
        %v648 = vld [vmem:[#allocation8 + $0x948] sm:$0xff]
        %v649 = vld [vmem:[#allocation8 + $0x950] sm:$0xff]
        %v650 = vld [vmem:[#allocation8 + $0x958] sm:$0xff]
        %v651 = vld [vmem:[#allocation8 + $0x960] sm:$0xff]
        %v652 = vld [vmem:[#allocation8 + $0x968] sm:$0xff]
        %v653 = vld [vmem:[#allocation8 + $0x970] sm:$0xff]
        %v654 = vld [vmem:[#allocation8 + $0x978] sm:$0xff]
        %v655 = vld [vmem:[#allocation8 + $0x980] sm:$0xff]
        %v656 = vld [vmem:[#allocation8 + $0x988] sm:$0xff]
        %v657 = vld [vmem:[#allocation8 + $0x990] sm:$0xff]
        %v658 = vld [vmem:[#allocation8 + $0x998] sm:$0xff]
        %v659 = vld [vmem:[#allocation8 + $0x9a0] sm:$0xff]
        %v660 = vld [vmem:[#allocation8 + $0x9a8] sm:$0xff]
        %v661 = vld [vmem:[#allocation8 + $0x9b0] sm:$0xff]
        %v662 = vld [vmem:[#allocation8 + $0x9b8] sm:$0xff]
        %v663 = vld [vmem:[#allocation8 + $0x9c0] sm:$0xff]
        %v664 = vld [vmem:[#allocation8 + $0x9c8] sm:$0xff]
        %v665 = vld [vmem:[#allocation8 + $0x9d0] sm:$0xff]
        %v666 = vld [vmem:[#allocation8 + $0x9d8] sm:$0xff]
        %v667 = vld [vmem:[#allocation8 + $0x9e0] sm:$0xff]
        %v668 = vld [vmem:[#allocation8 + $0x9e8] sm:$0xff]
        %v669 = vld [vmem:[#allocation8 + $0x9f0] sm:$0xff]
        %v670 = vld [vmem:[#allocation8 + $0x9f8] sm:$0xff]
        %v671 = vld [vmem:[#allocation8 + $0xa00] sm:$0xff]
        %v672 = vld [vmem:[#allocation8 + $0xa08] sm:$0xff]
        %v673 = vld [vmem:[#allocation8 + $0xa10] sm:$0xff]
        %v674 = vld [vmem:[#allocation8 + $0xa18] sm:$0xff]
        %v675 = vld [vmem:[#allocation8 + $0xa20] sm:$0xff]
        %v676 = vld [vmem:[#allocation8 + $0xa28] sm:$0xff]
        %v677 = vld [vmem:[#allocation8 + $0xa30] sm:$0xff]
        %v678 = vld [vmem:[#allocation8 + $0xa38] sm:$0xff]
        %v679 = vld [vmem:[#allocation8 + $0xa40] sm:$0xff]
        %v680 = vld [vmem:[#allocation8 + $0xa48] sm:$0xff]
        %v681 = vld [vmem:[#allocation8 + $0xa50] sm:$0xff]
        %v682 = vld [vmem:[#allocation8 + $0xa58] sm:$0xff]
        %v683 = vld [vmem:[#allocation8 + $0xa60] sm:$0xff]
        %v684 = vld [vmem:[#allocation8 + $0xa68] sm:$0xff]
        %v685 = vld [vmem:[#allocation8 + $0xa70] sm:$0xff]
        %v686 = vld [vmem:[#allocation8 + $0xa78] sm:$0xff]
        %v687 = vld [vmem:[#allocation8 + $0xa80] sm:$0xff]
        %v688 = vld [vmem:[#allocation8 + $0xa88] sm:$0xff]
        %v689 = vld [vmem:[#allocation8 + $0xa90] sm:$0xff]
        %v690 = vld [vmem:[#allocation8 + $0xa98] sm:$0xff]
        %v691 = vld [vmem:[#allocation8 + $0xaa0] sm:$0xff]
        %v692 = vld [vmem:[#allocation8 + $0xaa8] sm:$0xff]
        %v693 = vld [vmem:[#allocation8 + $0xab0] sm:$0xff]
        %v694 = vld [vmem:[#allocation8 + $0xab8] sm:$0xff]
        %v695 = vld [vmem:[#allocation8 + $0xac0] sm:$0xff]
        %v696 = vld [vmem:[#allocation8 + $0xac8] sm:$0xff]
        %v697 = vld [vmem:[#allocation8 + $0xad0] sm:$0xff]
        %v698 = vld [vmem:[#allocation8 + $0xad8] sm:$0xff]
        %v699 = vld [vmem:[#allocation8 + $0xae0] sm:$0xff]
        %v700 = vld [vmem:[#allocation8 + $0xae8] sm:$0xff]
        %v701 = vld [vmem:[#allocation8 + $0xaf0] sm:$0xff]
        %v702 = vld [vmem:[#allocation8 + $0xaf8] sm:$0xff]
        %v703 = vld [vmem:[#allocation8 + $0xb00] sm:$0xff]
        %v704 = vld [vmem:[#allocation8 + $0xb08] sm:$0xff]
        %v705 = vld [vmem:[#allocation8 + $0xb10] sm:$0xff]
        %v706 = vld [vmem:[#allocation8 + $0xb18] sm:$0xff]
        %v707 = vld [vmem:[#allocation8 + $0xb20] sm:$0xff]
        %v708 = vld [vmem:[#allocation8 + $0xb28] sm:$0xff]
        %v709 = vld [vmem:[#allocation8 + $0xb30] sm:$0xff]
        %v710 = vld [vmem:[#allocation8 + $0xb38] sm:$0xff]
        %v711 = vld [vmem:[#allocation8 + $0xb40] sm:$0xff]
        %v712 = vld [vmem:[#allocation8 + $0xb48] sm:$0xff]
        %v713 = vld [vmem:[#allocation8 + $0xb50] sm:$0xff]
        %v714 = vld [vmem:[#allocation8 + $0xb58] sm:$0xff]
        %v715 = vld [vmem:[#allocation8 + $0xb60] sm:$0xff]
        %v716 = vld [vmem:[#allocation8 + $0xb68] sm:$0xff]
        %v717 = vld [vmem:[#allocation8 + $0xb70] sm:$0xff]
        %v718 = vld [vmem:[#allocation8 + $0xb78] sm:$0xff]
        %v719 = vld [vmem:[#allocation8 + $0xb80] sm:$0xff]
        %v720 = vld [vmem:[#allocation8 + $0xb88] sm:$0xff]
        %v721 = vld [vmem:[#allocation8 + $0xb90] sm:$0xff]
        %v722 = vld [vmem:[#allocation8 + $0xb98] sm:$0xff]
        %v723 = vld [vmem:[#allocation8 + $0xba0] sm:$0xff]
        %v724 = vld [vmem:[#allocation8 + $0xba8] sm:$0xff]
        %v725 = vld [vmem:[#allocation8 + $0xbb0] sm:$0xff]
        %v726 = vld [vmem:[#allocation8 + $0xbb8] sm:$0xff]
        %v727 = vld [vmem:[#allocation8 + $0xbc0] sm:$0xff]
        %v728 = vld [vmem:[#allocation8 + $0xbc8] sm:$0xff]
        %v729 = vld [vmem:[#allocation8 + $0xbd0] sm:$0xff]
        %v730 = vld [vmem:[#allocation8 + $0xbd8] sm:$0xff]
        %v731 = vld [vmem:[#allocation8 + $0xbe0] sm:$0xff]
        %v732 = vld [vmem:[#allocation8 + $0xbe8] sm:$0xff]
        %v733 = vld [vmem:[#allocation8 + $0xbf0] sm:$0xff]
        %v734 = vld [vmem:[#allocation8 + $0xbf8] sm:$0xff]
        %v735 = vld [vmem:[#allocation8 + $0xc00] sm:$0xff]
        %v736 = vld [vmem:[#allocation8 + $0xc08] sm:$0xff]
        %v737 = vld [vmem:[#allocation8 + $0xc10] sm:$0xff]
        %v738 = vld [vmem:[#allocation8 + $0xc18] sm:$0xff]
        %v739 = vld [vmem:[#allocation8 + $0xc20] sm:$0xff]
        %v740 = vld [vmem:[#allocation8 + $0xc28] sm:$0xff]
        %v741 = vld [vmem:[#allocation8 + $0xc30] sm:$0xff]
        %v742 = vld [vmem:[#allocation8 + $0xc38] sm:$0xff]
        %v743 = vld [vmem:[#allocation8 + $0xc40] sm:$0xff]
        %v744 = vld [vmem:[#allocation8 + $0xc48] sm:$0xff]
        %v745 = vld [vmem:[#allocation8 + $0xc50] sm:$0xff]
        %v746 = vld [vmem:[#allocation8 + $0xc58] sm:$0xff]
        %v747 = vld [vmem:[#allocation8 + $0xc60] sm:$0xff]
        %v748 = vld [vmem:[#allocation8 + $0xc68] sm:$0xff]
        %v749 = vld [vmem:[#allocation8 + $0xc70] sm:$0xff]
        %v750 = vld [vmem:[#allocation8 + $0xc78] sm:$0xff]
        %v751 = vld [vmem:[#allocation8 + $0xc80] sm:$0xff]
        %v752 = vld [vmem:[#allocation8 + $0xc88] sm:$0xff]
        %v753 = vld [vmem:[#allocation8 + $0xc90] sm:$0xff]
        %v754 = vld [vmem:[#allocation8 + $0xc98] sm:$0xff]
        %v755 = vld [vmem:[#allocation8 + $0xca0] sm:$0xff]
        %v756 = vld [vmem:[#allocation8 + $0xca8] sm:$0xff]
        %v757 = vld [vmem:[#allocation8 + $0xcb0] sm:$0xff]
        %v758 = vld [vmem:[#allocation8 + $0xcb8] sm:$0xff]
        %v759 = vld [vmem:[#allocation8 + $0xcc0] sm:$0xff]
        %v760 = vld [vmem:[#allocation8 + $0xcc8] sm:$0xff]
        %v761 = vld [vmem:[#allocation8 + $0xcd0] sm:$0xff]
        %v762 = vld [vmem:[#allocation8 + $0xcd8] sm:$0xff]
        %v763 = vld [vmem:[#allocation8 + $0xce0] sm:$0xff]
        %v764 = vld [vmem:[#allocation8 + $0xce8] sm:$0xff]
        %v765 = vld [vmem:[#allocation8 + $0xcf0] sm:$0xff]
        %v766 = vld [vmem:[#allocation8 + $0xcf8] sm:$0xff]
        %v767 = vld [vmem:[#allocation8 + $0xd00] sm:$0xff]
        %v768 = vld [vmem:[#allocation8 + $0xd08] sm:$0xff]
        %v769 = vld [vmem:[#allocation8 + $0xd10] sm:$0xff]
        %v770 = vld [vmem:[#allocation8 + $0xd18] sm:$0xff]
        %v771 = vld [vmem:[#allocation8 + $0xd20] sm:$0xff]
        %v772 = vld [vmem:[#allocation8 + $0xd28] sm:$0xff]
        %v773 = vld [vmem:[#allocation8 + $0xd30] sm:$0xff]
        %v774 = vld [vmem:[#allocation8 + $0xd38] sm:$0xff]
        %v775 = vld [vmem:[#allocation8 + $0xd40] sm:$0xff]
        %v776 = vld [vmem:[#allocation8 + $0xd48] sm:$0xff]
        %v777 = vld [vmem:[#allocation8 + $0xd50] sm:$0xff]
        %v778 = vld [vmem:[#allocation8 + $0xd58] sm:$0xff]
        %v779 = vld [vmem:[#allocation8 + $0xd60] sm:$0xff]
        %v780 = vld [vmem:[#allocation8 + $0xd68] sm:$0xff]
        %v781 = vld [vmem:[#allocation8 + $0xd70] sm:$0xff]
        %v782 = vld [vmem:[#allocation8 + $0xd78] sm:$0xff]
        %v783 = vld [vmem:[#allocation8 + $0xd80] sm:$0xff]
        %v784 = vld [vmem:[#allocation8 + $0xd88] sm:$0xff]
        %v785 = vld [vmem:[#allocation8 + $0xd90] sm:$0xff]
        %v786 = vld [vmem:[#allocation8 + $0xd98] sm:$0xff]
        %v787 = vld [vmem:[#allocation8 + $0xda0] sm:$0xff]
        %v788 = vld [vmem:[#allocation8 + $0xda8] sm:$0xff]
        %v789 = vld [vmem:[#allocation8 + $0xdb0] sm:$0xff]
        %v790 = vld [vmem:[#allocation8 + $0xdb8] sm:$0xff]
        %v791 = vld [vmem:[#allocation8 + $0xdc0] sm:$0xff]
        %v792 = vld [vmem:[#allocation8 + $0xdc8] sm:$0xff]
        %v793 = vld [vmem:[#allocation8 + $0xdd0] sm:$0xff]
        %v794 = vld [vmem:[#allocation8 + $0xdd8] sm:$0xff]
        %v795 = vld [vmem:[#allocation8 + $0xde0] sm:$0xff]
        %v796 = vld [vmem:[#allocation8 + $0xde8] sm:$0xff]
        %v797 = vld [vmem:[#allocation8 + $0xdf0] sm:$0xff]
        %v798 = vld [vmem:[#allocation8 + $0xdf8] sm:$0xff]
        %v799 = vld [vmem:[#allocation8 + $0xe00] sm:$0xff]
        %v800 = vld [vmem:[#allocation8 + $0xe08] sm:$0xff]
        %v801 = vld [vmem:[#allocation8 + $0xe10] sm:$0xff]
        %v802 = vld [vmem:[#allocation8 + $0xe18] sm:$0xff]
        %v803 = vld [vmem:[#allocation8 + $0xe20] sm:$0xff]
        %v804 = vld [vmem:[#allocation8 + $0xe28] sm:$0xff]
        %v805 = vld [vmem:[#allocation8 + $0xe30] sm:$0xff]
        %v806 = vld [vmem:[#allocation8 + $0xe38] sm:$0xff]
        %v807 = vld [vmem:[#allocation8 + $0xe40] sm:$0xff]
        %v808 = vld [vmem:[#allocation8 + $0xe48] sm:$0xff]
        %v809 = vld [vmem:[#allocation8 + $0xe50] sm:$0xff]
        %v810 = vld [vmem:[#allocation8 + $0xe58] sm:$0xff]
        %v811 = vld [vmem:[#allocation8 + $0xe60] sm:$0xff]
        %v812 = vld [vmem:[#allocation8 + $0xe68] sm:$0xff]
        %v813 = vld [vmem:[#allocation8 + $0xe70] sm:$0xff]
        %v814 = vld [vmem:[#allocation8 + $0xe78] sm:$0xff]
        %v815 = vld [vmem:[#allocation8 + $0xe80] sm:$0xff]
        %v816 = vld [vmem:[#allocation8 + $0xe88] sm:$0xff]
        %v817 = vld [vmem:[#allocation8 + $0xe90] sm:$0xff]
        %v818 = vld [vmem:[#allocation8 + $0xe98] sm:$0xff]
        %v819 = vld [vmem:[#allocation8 + $0xea0] sm:$0xff]
        %v820 = vld [vmem:[#allocation8 + $0xea8] sm:$0xff]
        %v821 = vld [vmem:[#allocation8 + $0xeb0] sm:$0xff]
        %v822 = vld [vmem:[#allocation8 + $0xeb8] sm:$0xff]
        %v823 = vld [vmem:[#allocation8 + $0xec0] sm:$0xff]
        %v824 = vld [vmem:[#allocation8 + $0xec8] sm:$0xff]
        %v825 = vld [vmem:[#allocation8 + $0xed0] sm:$0xff]
        %v826 = vld [vmem:[#allocation8 + $0xed8] sm:$0xff]
        %v827 = vld [vmem:[#allocation8 + $0xee0] sm:$0xff]
        %v828 = vld [vmem:[#allocation8 + $0xee8] sm:$0xff]
        %v829 = vld [vmem:[#allocation8 + $0xef0] sm:$0xff]
        %v830 = vld [vmem:[#allocation8 + $0xef8] sm:$0xff]
        %v831 = vld [vmem:[#allocation8 + $0xf00] sm:$0xff]
        %v832 = vld [vmem:[#allocation8 + $0xf08] sm:$0xff]
        %v833 = vld [vmem:[#allocation8 + $0xf10] sm:$0xff]
        %v834 = vld [vmem:[#allocation8 + $0xf18] sm:$0xff]
        %v835 = vld [vmem:[#allocation8 + $0xf20] sm:$0xff]
        %v836 = vld [vmem:[#allocation8 + $0xf28] sm:$0xff]
        %v837 = vld [vmem:[#allocation8 + $0xf30] sm:$0xff]
        %v838 = vld [vmem:[#allocation8 + $0xf38] sm:$0xff]
        %v839 = vld [vmem:[#allocation8 + $0xf40] sm:$0xff]
        %v840 = vld [vmem:[#allocation8 + $0xf48] sm:$0xff]
        %v841 = vld [vmem:[#allocation8 + $0xf50] sm:$0xff]
        %v842 = vld [vmem:[#allocation8 + $0xf58] sm:$0xff]
        %v843 = vld [vmem:[#allocation8 + $0xf60] sm:$0xff]
        %v844 = vld [vmem:[#allocation8 + $0xf68] sm:$0xff]
        %v845 = vld [vmem:[#allocation8 + $0xf70] sm:$0xff]
        %v846 = vld [vmem:[#allocation8 + $0xf78] sm:$0xff]
        %v847 = vld [vmem:[#allocation8 + $0xf80] sm:$0xff]
        %v848 = vld [vmem:[#allocation8 + $0xf88] sm:$0xff]
        %v849 = vld [vmem:[#allocation8 + $0xf90] sm:$0xff]
        %v850 = vld [vmem:[#allocation8 + $0xf98] sm:$0xff]
        %v851 = vld [vmem:[#allocation8 + $0xfa0] sm:$0xff]
        %v852 = vld [vmem:[#allocation8 + $0xfa8] sm:$0xff]
        %v853 = vld [vmem:[#allocation8 + $0xfb0] sm:$0xff]
        %v854 = vld [vmem:[#allocation8 + $0xfb8] sm:$0xff]
        %v855 = vld [vmem:[#allocation8 + $0xfc0] sm:$0xff]
        %v856 = vld [vmem:[#allocation8 + $0xfc8] sm:$0xff]
        %v857 = vld [vmem:[#allocation8 + $0xfd0] sm:$0xff]
        %v858 = vld [vmem:[#allocation8 + $0xfd8] sm:$0xff]
        %v859 = vld [vmem:[#allocation8 + $0xfe0] sm:$0xff]
        %v860 = vld [vmem:[#allocation8 + $0xfe8] sm:$0xff]
        %v861 = vld [vmem:[#allocation8 + $0xff0] sm:$0xff]
        %v862 = vld [vmem:[#allocation8 + $0xff8] sm:$0xff]
        %863 = vmatprep.subr.mxu0 %v832
        %864 = vmatpush1.msra.mxu0 %v831
        %865 = vmatprep.subr.mxu0 %v800
        %866 = vmatpush1.msra.mxu0 %v799
        %867 = vmatprep.subr.mxu0 %v768
        %868 = vmatpush1.msra.mxu0 %v767
        %869 = vmatprep.subr.mxu0 %v736
        %870 = vmatpush1.msra.mxu0 %v735
        %871 = vmatprep.subr.mxu0 %v704
        %872 = vmatpush1.msra.mxu0 %v703
        %873 = vmatprep.subr.mxu0 %v672
        %874 = vmatpush1.msra.mxu0 %v671
        %875 = vmatprep.subr.mxu0 %v640
        %876 = vmatpush1.msra.mxu0 %v639
        %877 = vmatprep.subr.mxu0 %v608
        %878 = vmatpush1.msra.mxu0 %v607
        %879 = vmatprep.subr.mxu0 %v576
        %880 = vmatpush1.msra.mxu0 %v575
        %881 = vmatprep.subr.mxu0 %v544
        %882 = vmatpush1.msra.mxu0 %v543
        %883 = vmatprep.subr.mxu0 %v512
        %884 = vmatpush1.msra.mxu0 %v511
        %885 = vmatprep.subr.mxu0 %v480
        %886 = vmatpush1.msra.mxu0 %v479
        %887 = vmatprep.subr.mxu0 %v448
        %888 = vmatpush1.msra.mxu0 %v447
        %889 = vmatprep.subr.mxu0 %v416
        %890 = vmatpush1.msra.mxu0 %v415
        %891 = vmatprep.subr.mxu0 %v384
        %892 = vmatpush1.msra.mxu0 %v383
        %893 = vmatprep.subr.mxu0 %v352
        %894 = vmatpush1.msra.mxu0 %v351
        %895 = vmatprep.subr.mxu0 0.0
        %896 = vmatpush2.msra.mxu0 0.0
        %897 = vmatprep.subr.mxu0 0.0
        %898 = vmatpush2.msra.mxu0 0.0
        %899 = vmatprep.subr.mxu0 0.0
        %900 = vmatpush2.msra.mxu0 0.0
        %901 = vmatprep.subr.mxu0 0.0
        %902 = vmatpush2.msra.mxu0 0.0
        %903 = vmatprep.subr.mxu0 0.0
        %904 = vmatpush2.msra.mxu0 0.0
        %905 = vmatprep.subr.mxu0 0.0
        %906 = vmatpush2.msra.mxu0 0.0
        %907 = vmatprep.subr.mxu0 0.0
        %908 = vmatpush2.msra.mxu0 0.0
        %909 = vmatprep.subr.mxu0 0.0
        %910 = vmatpush2.msra.mxu0 0.0
        %911 = vmatprep.subr.mxu0 0.0
        %912 = vmatpush2.msra.mxu0 0.0
        %913 = vmatprep.subr.mxu0 0.0
        %914 = vmatpush2.msra.mxu0 0.0
        %915 = vmatprep.subr.mxu0 0.0
        %916 = vmatpush2.msra.mxu0 0.0
        %917 = vmatprep.subr.mxu0 0.0
        %918 = vmatpush2.msra.mxu0 0.0
        %919 = vmatprep.subr.mxu0 0.0
        %920 = vmatpush2.msra.mxu0 0.0
        %921 = vmatprep.subr.mxu0 0.0
        %922 = vmatpush2.msra.mxu0 0.0
        %923 = vmatprep.subr.mxu0 0.0
        %924 = vmatpush2.msra.mxu0 0.0
        %925 = vmatprep.subr.mxu0 0.0
        %926 = vmatpush2.msra.mxu0 0.0
        %927 = vmatprep.mubr.f32.mxu0 0.0
        %928 = vmatmul.mubr.f32.gmra.mxu0 %v350
        %v929 = vpop.f32.mrf.mxu0
        %v930 = vadd.f32 0.0, %v929
        %v931 = vpop.f32.mrf.mxu0
        %v932 = vadd.f32 0.0, %v931
        %933 = vdwg.mxu0
        %934 = vmatprep.subr.mxu0 %v834
        %935 = vmatpush1.msra.mxu0 %v833
        %936 = vmatprep.subr.mxu0 %v802
        %937 = vmatpush1.msra.mxu0 %v801
        %938 = vmatprep.subr.mxu0 %v770
        %939 = vmatpush1.msra.mxu0 %v769
        %940 = vmatprep.subr.mxu0 %v738
        %941 = vmatpush1.msra.mxu0 %v737
        %942 = vmatprep.subr.mxu0 %v706
        %943 = vmatpush1.msra.mxu0 %v705
        %944 = vmatprep.subr.mxu0 %v674
        %945 = vmatpush1.msra.mxu0 %v673
        %946 = vmatprep.subr.mxu0 %v642
        %947 = vmatpush1.msra.mxu0 %v641
        %948 = vmatprep.subr.mxu0 %v610
        %949 = vmatpush1.msra.mxu0 %v609
        %950 = vmatprep.subr.mxu0 %v578
        %951 = vmatpush1.msra.mxu0 %v577
        %952 = vmatprep.subr.mxu0 %v546
        %953 = vmatpush1.msra.mxu0 %v545
        %954 = vmatprep.subr.mxu0 %v514
        %955 = vmatpush1.msra.mxu0 %v513
        %956 = vmatprep.subr.mxu0 %v482
        %957 = vmatpush1.msra.mxu0 %v481
        %958 = vmatprep.subr.mxu0 %v450
        %959 = vmatpush1.msra.mxu0 %v449
        %960 = vmatprep.subr.mxu0 %v418
        %961 = vmatpush1.msra.mxu0 %v417
        %962 = vmatprep.subr.mxu0 %v386
        %963 = vmatpush1.msra.mxu0 %v385
        %964 = vmatprep.subr.mxu0 %v354
        %965 = vmatpush1.msra.mxu0 %v353
        %966 = vmatprep.subr.mxu0 0.0
        %967 = vmatpush2.msra.mxu0 0.0
        %968 = vmatprep.subr.mxu0 0.0
        %969 = vmatpush2.msra.mxu0 0.0
        %970 = vmatprep.subr.mxu0 0.0
        %971 = vmatpush2.msra.mxu0 0.0
        %972 = vmatprep.subr.mxu0 0.0
        %973 = vmatpush2.msra.mxu0 0.0
        %974 = vmatprep.subr.mxu0 0.0
        %975 = vmatpush2.msra.mxu0 0.0
        %976 = vmatprep.subr.mxu0 0.0
        %977 = vmatpush2.msra.mxu0 0.0
        %978 = vmatprep.subr.mxu0 0.0
        %979 = vmatpush2.msra.mxu0 0.0
        %980 = vmatprep.subr.mxu0 0.0
        %981 = vmatpush2.msra.mxu0 0.0
        %982 = vmatprep.subr.mxu0 0.0
        %983 = vmatpush2.msra.mxu0 0.0
        %984 = vmatprep.subr.mxu0 0.0
        %985 = vmatpush2.msra.mxu0 0.0
        %986 = vmatprep.subr.mxu0 0.0
        %987 = vmatpush2.msra.mxu0 0.0
        %988 = vmatprep.subr.mxu0 0.0
        %989 = vmatpush2.msra.mxu0 0.0
        %990 = vmatprep.subr.mxu0 0.0
        %991 = vmatpush2.msra.mxu0 0.0
        %992 = vmatprep.subr.mxu0 0.0
        %993 = vmatpush2.msra.mxu0 0.0
        %994 = vmatprep.subr.mxu0 0.0
        %995 = vmatpush2.msra.mxu0 0.0
        %996 = vmatprep.subr.mxu0 0.0
        %997 = vmatpush2.msra.mxu0 0.0
        %998 = vmatprep.mubr.f32.mxu0 0.0
        %999 = vmatmul.mubr.f32.gmra.mxu0 %v350
        %v1000 = vpop.f32.mrf.mxu0
        %v1001 = vadd.f32 0.0, %v1000
        %v1002 = vpop.f32.mrf.mxu0
        %v1003 = vadd.f32 0.0, %v1002
        %1004 = vdwg.mxu0
        %1005 = vmatprep.subr.mxu0 %v836
        %1006 = vmatpush1.msra.mxu0 %v835
        %1007 = vmatprep.subr.mxu0 %v804
        %1008 = vmatpush1.msra.mxu0 %v803
        %1009 = vmatprep.subr.mxu0 %v772
        %1010 = vmatpush1.msra.mxu0 %v771
        %1011 = vmatprep.subr.mxu0 %v740
        %1012 = vmatpush1.msra.mxu0 %v739
        %1013 = vmatprep.subr.mxu0 %v708
        %1014 = vmatpush1.msra.mxu0 %v707
        %1015 = vmatprep.subr.mxu0 %v676
        %1016 = vmatpush1.msra.mxu0 %v675
        %1017 = vmatprep.subr.mxu0 %v644
        %1018 = vmatpush1.msra.mxu0 %v643
        %1019 = vmatprep.subr.mxu0 %v612
        %1020 = vmatpush1.msra.mxu0 %v611
        %1021 = vmatprep.subr.mxu0 %v580
        %1022 = vmatpush1.msra.mxu0 %v579
        %1023 = vmatprep.subr.mxu0 %v548
        %1024 = vmatpush1.msra.mxu0 %v547
        %1025 = vmatprep.subr.mxu0 %v516
        %1026 = vmatpush1.msra.mxu0 %v515
        %1027 = vmatprep.subr.mxu0 %v484
        %1028 = vmatpush1.msra.mxu0 %v483
        %1029 = vmatprep.subr.mxu0 %v452
        %1030 = vmatpush1.msra.mxu0 %v451
        %1031 = vmatprep.subr.mxu0 %v420
        %1032 = vmatpush1.msra.mxu0 %v419
        %1033 = vmatprep.subr.mxu0 %v388
        %1034 = vmatpush1.msra.mxu0 %v387
        %1035 = vmatprep.subr.mxu0 %v356
        %1036 = vmatpush1.msra.mxu0 %v355
        %1037 = vmatprep.subr.mxu0 0.0
        %1038 = vmatpush2.msra.mxu0 0.0
        %1039 = vmatprep.subr.mxu0 0.0
        %1040 = vmatpush2.msra.mxu0 0.0
        %1041 = vmatprep.subr.mxu0 0.0
        %1042 = vmatpush2.msra.mxu0 0.0
        %1043 = vmatprep.subr.mxu0 0.0
        %1044 = vmatpush2.msra.mxu0 0.0
        %1045 = vmatprep.subr.mxu0 0.0
        %1046 = vmatpush2.msra.mxu0 0.0
        %1047 = vmatprep.subr.mxu0 0.0
        %1048 = vmatpush2.msra.mxu0 0.0
        %1049 = vmatprep.subr.mxu0 0.0
        %1050 = vmatpush2.msra.mxu0 0.0
        %1051 = vmatprep.subr.mxu0 0.0
        %1052 = vmatpush2.msra.mxu0 0.0
        %1053 = vmatprep.subr.mxu0 0.0
        %1054 = vmatpush2.msra.mxu0 0.0
        %1055 = vmatprep.subr.mxu0 0.0
        %1056 = vmatpush2.msra.mxu0 0.0
        %1057 = vmatprep.subr.mxu0 0.0
        %1058 = vmatpush2.msra.mxu0 0.0
        %1059 = vmatprep.subr.mxu0 0.0
        %1060 = vmatpush2.msra.mxu0 0.0
        %1061 = vmatprep.subr.mxu0 0.0
        %1062 = vmatpush2.msra.mxu0 0.0
        %1063 = vmatprep.subr.mxu0 0.0
        %1064 = vmatpush2.msra.mxu0 0.0
        %1065 = vmatprep.subr.mxu0 0.0
        %1066 = vmatpush2.msra.mxu0 0.0
        %1067 = vmatprep.subr.mxu0 0.0
        %1068 = vmatpush2.msra.mxu0 0.0
        %1069 = vmatprep.mubr.f32.mxu0 0.0
        %1070 = vmatmul.mubr.f32.gmra.mxu0 %v350
        %v1071 = vpop.f32.mrf.mxu0
        %v1072 = vadd.f32 0.0, %v1071
        %v1073 = vpop.f32.mrf.mxu0
        %v1074 = vadd.f32 0.0, %v1073
        %1075 = vdwg.mxu0
        %1076 = vmatprep.subr.mxu0 %v838
        %1077 = vmatpush1.msra.mxu0 %v837
        %1078 = vmatprep.subr.mxu0 %v806
        %1079 = vmatpush1.msra.mxu0 %v805
        %1080 = vmatprep.subr.mxu0 %v774
        %1081 = vmatpush1.msra.mxu0 %v773
        %1082 = vmatprep.subr.mxu0 %v742
        %1083 = vmatpush1.msra.mxu0 %v741
        %1084 = vmatprep.subr.mxu0 %v710
        %1085 = vmatpush1.msra.mxu0 %v709
        %1086 = vmatprep.subr.mxu0 %v678
        %1087 = vmatpush1.msra.mxu0 %v677
        %1088 = vmatprep.subr.mxu0 %v646
        %1089 = vmatpush1.msra.mxu0 %v645
        %1090 = vmatprep.subr.mxu0 %v614
        %1091 = vmatpush1.msra.mxu0 %v613
        %1092 = vmatprep.subr.mxu0 %v582
        %1093 = vmatpush1.msra.mxu0 %v581
        %1094 = vmatprep.subr.mxu0 %v550
        %1095 = vmatpush1.msra.mxu0 %v549
        %1096 = vmatprep.subr.mxu0 %v518
        %1097 = vmatpush1.msra.mxu0 %v517
        %1098 = vmatprep.subr.mxu0 %v486
        %1099 = vmatpush1.msra.mxu0 %v485
        %1100 = vmatprep.subr.mxu0 %v454
        %1101 = vmatpush1.msra.mxu0 %v453
        %1102 = vmatprep.subr.mxu0 %v422
        %1103 = vmatpush1.msra.mxu0 %v421
        %1104 = vmatprep.subr.mxu0 %v390
        %1105 = vmatpush1.msra.mxu0 %v389
        %1106 = vmatprep.subr.mxu0 %v358
        %1107 = vmatpush1.msra.mxu0 %v357
        %1108 = vmatprep.subr.mxu0 0.0
        %1109 = vmatpush2.msra.mxu0 0.0
        %1110 = vmatprep.subr.mxu0 0.0
        %1111 = vmatpush2.msra.mxu0 0.0
        %1112 = vmatprep.subr.mxu0 0.0
        %1113 = vmatpush2.msra.mxu0 0.0
        %1114 = vmatprep.subr.mxu0 0.0
        %1115 = vmatpush2.msra.mxu0 0.0
        %1116 = vmatprep.subr.mxu0 0.0
        %1117 = vmatpush2.msra.mxu0 0.0
        %1118 = vmatprep.subr.mxu0 0.0
        %1119 = vmatpush2.msra.mxu0 0.0
        %1120 = vmatprep.subr.mxu0 0.0
        %1121 = vmatpush2.msra.mxu0 0.0
        %1122 = vmatprep.subr.mxu0 0.0
        %1123 = vmatpush2.msra.mxu0 0.0
        %1124 = vmatprep.subr.mxu0 0.0
        %1125 = vmatpush2.msra.mxu0 0.0
        %1126 = vmatprep.subr.mxu0 0.0
        %1127 = vmatpush2.msra.mxu0 0.0
        %1128 = vmatprep.subr.mxu0 0.0
        %1129 = vmatpush2.msra.mxu0 0.0
        %1130 = vmatprep.subr.mxu0 0.0
        %1131 = vmatpush2.msra.mxu0 0.0
        %1132 = vmatprep.subr.mxu0 0.0
        %1133 = vmatpush2.msra.mxu0 0.0
        %1134 = vmatprep.subr.mxu0 0.0
        %1135 = vmatpush2.msra.mxu0 0.0
        %1136 = vmatprep.subr.mxu0 0.0
        %1137 = vmatpush2.msra.mxu0 0.0
        %1138 = vmatprep.subr.mxu0 0.0
        %1139 = vmatpush2.msra.mxu0 0.0
        %1140 = vmatprep.mubr.f32.mxu0 0.0
        %1141 = vmatmul.mubr.f32.gmra.mxu0 %v350
        %v1142 = vpop.f32.mrf.mxu0
        %v1143 = vadd.f32 0.0, %v1142
        %v1144 = vpop.f32.mrf.mxu0
        %v1145 = vadd.f32 0.0, %v1144
        %1146 = vdwg.mxu0
        %1147 = vmatprep.subr.mxu0 %v840
        %1148 = vmatpush1.msra.mxu0 %v839
        %1149 = vmatprep.subr.mxu0 %v808
        %1150 = vmatpush1.msra.mxu0 %v807
        %1151 = vmatprep.subr.mxu0 %v776
        %1152 = vmatpush1.msra.mxu0 %v775
        %1153 = vmatprep.subr.mxu0 %v744
        %1154 = vmatpush1.msra.mxu0 %v743
        %1155 = vmatprep.subr.mxu0 %v712
        %1156 = vmatpush1.msra.mxu0 %v711
        %1157 = vmatprep.subr.mxu0 %v680
        %1158 = vmatpush1.msra.mxu0 %v679
        %1159 = vmatprep.subr.mxu0 %v648
        %1160 = vmatpush1.msra.mxu0 %v647
        %1161 = vmatprep.subr.mxu0 %v616
        %1162 = vmatpush1.msra.mxu0 %v615
        %1163 = vmatprep.subr.mxu0 %v584
        %1164 = vmatpush1.msra.mxu0 %v583
        %1165 = vmatprep.subr.mxu0 %v552
        %1166 = vmatpush1.msra.mxu0 %v551
        %1167 = vmatprep.subr.mxu0 %v520
        %1168 = vmatpush1.msra.mxu0 %v519
        %1169 = vmatprep.subr.mxu0 %v488
        %1170 = vmatpush1.msra.mxu0 %v487
        %1171 = vmatprep.subr.mxu0 %v456
        %1172 = vmatpush1.msra.mxu0 %v455
        %1173 = vmatprep.subr.mxu0 %v424
        %1174 = vmatpush1.msra.mxu0 %v423
        %1175 = vmatprep.subr.mxu0 %v392
        %1176 = vmatpush1.msra.mxu0 %v391
        %1177 = vmatprep.subr.mxu0 %v360
        %1178 = vmatpush1.msra.mxu0 %v359
        %1179 = vmatprep.subr.mxu0 0.0
        %1180 = vmatpush2.msra.mxu0 0.0
        %1181 = vmatprep.subr.mxu0 0.0
        %1182 = vmatpush2.msra.mxu0 0.0
        %1183 = vmatprep.subr.mxu0 0.0
        %1184 = vmatpush2.msra.mxu0 0.0
        %1185 = vmatprep.subr.mxu0 0.0
        %1186 = vmatpush2.msra.mxu0 0.0
        %1187 = vmatprep.subr.mxu0 0.0
        %1188 = vmatpush2.msra.mxu0 0.0
        %1189 = vmatprep.subr.mxu0 0.0
        %1190 = vmatpush2.msra.mxu0 0.0
        %1191 = vmatprep.subr.mxu0 0.0
        %1192 = vmatpush2.msra.mxu0 0.0
        %1193 = vmatprep.subr.mxu0 0.0
        %1194 = vmatpush2.msra.mxu0 0.0
        %1195 = vmatprep.subr.mxu0 0.0
        %1196 = vmatpush2.msra.mxu0 0.0
        %1197 = vmatprep.subr.mxu0 0.0
        %1198 = vmatpush2.msra.mxu0 0.0
        %1199 = vmatprep.subr.mxu0 0.0
        %1200 = vmatpush2.msra.mxu0 0.0
        %1201 = vmatprep.subr.mxu0 0.0
        %1202 = vmatpush2.msra.mxu0 0.0
        %1203 = vmatprep.subr.mxu0 0.0
        %1204 = vmatpush2.msra.mxu0 0.0
        %1205 = vmatprep.subr.mxu0 0.0
        %1206 = vmatpush2.msra.mxu0 0.0
        %1207 = vmatprep.subr.mxu0 0.0
        %1208 = vmatpush2.msra.mxu0 0.0
        %1209 = vmatprep.subr.mxu0 0.0
        %1210 = vmatpush2.msra.mxu0 0.0
        %1211 = vmatprep.mubr.f32.mxu0 0.0
        %1212 = vmatmul.mubr.f32.gmra.mxu0 %v350
        %v1213 = vpop.f32.mrf.mxu0
        %v1214 = vadd.f32 0.0, %v1213
        %v1215 = vpop.f32.mrf.mxu0
        %v1216 = vadd.f32 0.0, %v1215
        %1217 = vdwg.mxu0
        %1218 = vmatprep.subr.mxu0 %v842
        %1219 = vmatpush1.msra.mxu0 %v841
        %1220 = vmatprep.subr.mxu0 %v810
        %1221 = vmatpush1.msra.mxu0 %v809
        %1222 = vmatprep.subr.mxu0 %v778
        %1223 = vmatpush1.msra.mxu0 %v777
        %1224 = vmatprep.subr.mxu0 %v746
        %1225 = vmatpush1.msra.mxu0 %v745
        %1226 = vmatprep.subr.mxu0 %v714
        %1227 = vmatpush1.msra.mxu0 %v713
        %1228 = vmatprep.subr.mxu0 %v682
        %1229 = vmatpush1.msra.mxu0 %v681
        %1230 = vmatprep.subr.mxu0 %v650
        %1231 = vmatpush1.msra.mxu0 %v649
        %1232 = vmatprep.subr.mxu0 %v618
        %1233 = vmatpush1.msra.mxu0 %v617
        %1234 = vmatprep.subr.mxu0 %v586
        %1235 = vmatpush1.msra.mxu0 %v585
        %1236 = vmatprep.subr.mxu0 %v554
        %1237 = vmatpush1.msra.mxu0 %v553
        %1238 = vmatprep.subr.mxu0 %v522
        %1239 = vmatpush1.msra.mxu0 %v521
        %1240 = vmatprep.subr.mxu0 %v490
        %1241 = vmatpush1.msra.mxu0 %v489
        %1242 = vmatprep.subr.mxu0 %v458
        %1243 = vmatpush1.msra.mxu0 %v457
        %1244 = vmatprep.subr.mxu0 %v426
        %1245 = vmatpush1.msra.mxu0 %v425
        %1246 = vmatprep.subr.mxu0 %v394
        %1247 = vmatpush1.msra.mxu0 %v393
        %1248 = vmatprep.subr.mxu0 %v362
        %1249 = vmatpush1.msra.mxu0 %v361
        %1250 = vmatprep.subr.mxu0 0.0
        %1251 = vmatpush2.msra.mxu0 0.0
        %1252 = vmatprep.subr.mxu0 0.0
        %1253 = vmatpush2.msra.mxu0 0.0
        %1254 = vmatprep.subr.mxu0 0.0
        %1255 = vmatpush2.msra.mxu0 0.0
        %1256 = vmatprep.subr.mxu0 0.0
        %1257 = vmatpush2.msra.mxu0 0.0
        %1258 = vmatprep.subr.mxu0 0.0
        %1259 = vmatpush2.msra.mxu0 0.0
        %1260 = vmatprep.subr.mxu0 0.0
        %1261 = vmatpush2.msra.mxu0 0.0
        %1262 = vmatprep.subr.mxu0 0.0
        %1263 = vmatpush2.msra.mxu0 0.0
        %1264 = vmatprep.subr.mxu0 0.0
        %1265 = vmatpush2.msra.mxu0 0.0
        %1266 = vmatprep.subr.mxu0 0.0
        %1267 = vmatpush2.msra.mxu0 0.0
        %1268 = vmatprep.subr.mxu0 0.0
        %1269 = vmatpush2.msra.mxu0 0.0
        %1270 = vmatprep.subr.mxu0 0.0
        %1271 = vmatpush2.msra.mxu0 0.0
        %1272 = vmatprep.subr.mxu0 0.0
        %1273 = vmatpush2.msra.mxu0 0.0
        %1274 = vmatprep.subr.mxu0 0.0
        %1275 = vmatpush2.msra.mxu0 0.0
        %1276 = vmatprep.subr.mxu0 0.0
        %1277 = vmatpush2.msra.mxu0 0.0
        %1278 = vmatprep.subr.mxu0 0.0
        %1279 = vmatpush2.msra.mxu0 0.0
        %1280 = vmatprep.subr.mxu0 0.0
        %1281 = vmatpush2.msra.mxu0 0.0
        %1282 = vmatprep.mubr.f32.mxu0 0.0
        %1283 = vmatmul.mubr.f32.gmra.mxu0 %v350
        %v1284 = vpop.f32.mrf.mxu0
        %v1285 = vadd.f32 0.0, %v1284
        %v1286 = vpop.f32.mrf.mxu0
        %v1287 = vadd.f32 0.0, %v1286
        %1288 = vdwg.mxu0
        %1289 = vmatprep.subr.mxu0 %v844
        %1290 = vmatpush1.msra.mxu0 %v843
        %1291 = vmatprep.subr.mxu0 %v812
        %1292 = vmatpush1.msra.mxu0 %v811
        %1293 = vmatprep.subr.mxu0 %v780
        %1294 = vmatpush1.msra.mxu0 %v779
        %1295 = vmatprep.subr.mxu0 %v748
        %1296 = vmatpush1.msra.mxu0 %v747
        %1297 = vmatprep.subr.mxu0 %v716
        %1298 = vmatpush1.msra.mxu0 %v715
        %1299 = vmatprep.subr.mxu0 %v684
        %1300 = vmatpush1.msra.mxu0 %v683
        %1301 = vmatprep.subr.mxu0 %v652
        %1302 = vmatpush1.msra.mxu0 %v651
        %1303 = vmatprep.subr.mxu0 %v620
        %1304 = vmatpush1.msra.mxu0 %v619
        %1305 = vmatprep.subr.mxu0 %v588
        %1306 = vmatpush1.msra.mxu0 %v587
        %1307 = vmatprep.subr.mxu0 %v556
        %1308 = vmatpush1.msra.mxu0 %v555
        %1309 = vmatprep.subr.mxu0 %v524
        %1310 = vmatpush1.msra.mxu0 %v523
        %1311 = vmatprep.subr.mxu0 %v492
        %1312 = vmatpush1.msra.mxu0 %v491
        %1313 = vmatprep.subr.mxu0 %v460
        %1314 = vmatpush1.msra.mxu0 %v459
        %1315 = vmatprep.subr.mxu0 %v428
        %1316 = vmatpush1.msra.mxu0 %v427
        %1317 = vmatprep.subr.mxu0 %v396
        %1318 = vmatpush1.msra.mxu0 %v395
        %1319 = vmatprep.subr.mxu0 %v364
        %1320 = vmatpush1.msra.mxu0 %v363
        %1321 = vmatprep.subr.mxu0 0.0
        %1322 = vmatpush2.msra.mxu0 0.0
        %1323 = vmatprep.subr.mxu0 0.0
        %1324 = vmatpush2.msra.mxu0 0.0
        %1325 = vmatprep.subr.mxu0 0.0
        %1326 = vmatpush2.msra.mxu0 0.0
        %1327 = vmatprep.subr.mxu0 0.0
        %1328 = vmatpush2.msra.mxu0 0.0
        %1329 = vmatprep.subr.mxu0 0.0
        %1330 = vmatpush2.msra.mxu0 0.0
        %1331 = vmatprep.subr.mxu0 0.0
        %1332 = vmatpush2.msra.mxu0 0.0
        %1333 = vmatprep.subr.mxu0 0.0
        %1334 = vmatpush2.msra.mxu0 0.0
        %1335 = vmatprep.subr.mxu0 0.0
        %1336 = vmatpush2.msra.mxu0 0.0
        %1337 = vmatprep.subr.mxu0 0.0
        %1338 = vmatpush2.msra.mxu0 0.0
        %1339 = vmatprep.subr.mxu0 0.0
        %1340 = vmatpush2.msra.mxu0 0.0
        %1341 = vmatprep.subr.mxu0 0.0
        %1342 = vmatpush2.msra.mxu0 0.0
        %1343 = vmatprep.subr.mxu0 0.0
        %1344 = vmatpush2.msra.mxu0 0.0
        %1345 = vmatprep.subr.mxu0 0.0
        %1346 = vmatpush2.msra.mxu0 0.0
        %1347 = vmatprep.subr.mxu0 0.0
        %1348 = vmatpush2.msra.mxu0 0.0
        %1349 = vmatprep.subr.mxu0 0.0
        %1350 = vmatpush2.msra.mxu0 0.0
        %1351 = vmatprep.subr.mxu0 0.0
        %1352 = vmatpush2.msra.mxu0 0.0
        %1353 = vmatprep.mubr.f32.mxu0 0.0
        %1354 = vmatmul.mubr.f32.gmra.mxu0 %v350
        %v1355 = vpop.f32.mrf.mxu0
        %v1356 = vadd.f32 0.0, %v1355
        %v1357 = vpop.f32.mrf.mxu0
        %v1358 = vadd.f32 0.0, %v1357
        %1359 = vdwg.mxu0
        %1360 = vmatprep.subr.mxu0 %v846
        %1361 = vmatpush1.msra.mxu0 %v845
        %1362 = vmatprep.subr.mxu0 %v814
        %1363 = vmatpush1.msra.mxu0 %v813
        %1364 = vmatprep.subr.mxu0 %v782
        %1365 = vmatpush1.msra.mxu0 %v781
        %1366 = vmatprep.subr.mxu0 %v750
        %1367 = vmatpush1.msra.mxu0 %v749
        %1368 = vmatprep.subr.mxu0 %v718
        %1369 = vmatpush1.msra.mxu0 %v717
        %1370 = vmatprep.subr.mxu0 %v686
        %1371 = vmatpush1.msra.mxu0 %v685
        %1372 = vmatprep.subr.mxu0 %v654
        %1373 = vmatpush1.msra.mxu0 %v653
        %1374 = vmatprep.subr.mxu0 %v622
        %1375 = vmatpush1.msra.mxu0 %v621
        %1376 = vmatprep.subr.mxu0 %v590
        %1377 = vmatpush1.msra.mxu0 %v589
        %1378 = vmatprep.subr.mxu0 %v558
        %1379 = vmatpush1.msra.mxu0 %v557
        %1380 = vmatprep.subr.mxu0 %v526
        %1381 = vmatpush1.msra.mxu0 %v525
        %1382 = vmatprep.subr.mxu0 %v494
        %1383 = vmatpush1.msra.mxu0 %v493
        %1384 = vmatprep.subr.mxu0 %v462
        %1385 = vmatpush1.msra.mxu0 %v461
        %1386 = vmatprep.subr.mxu0 %v430
        %1387 = vmatpush1.msra.mxu0 %v429
        %1388 = vmatprep.subr.mxu0 %v398
        %1389 = vmatpush1.msra.mxu0 %v397
        %1390 = vmatprep.subr.mxu0 %v366
        %1391 = vmatpush1.msra.mxu0 %v365
        %1392 = vmatprep.subr.mxu0 0.0
        %1393 = vmatpush2.msra.mxu0 0.0
        %1394 = vmatprep.subr.mxu0 0.0
        %1395 = vmatpush2.msra.mxu0 0.0
        %1396 = vmatprep.subr.mxu0 0.0
        %1397 = vmatpush2.msra.mxu0 0.0
        %1398 = vmatprep.subr.mxu0 0.0
        %1399 = vmatpush2.msra.mxu0 0.0
        %1400 = vmatprep.subr.mxu0 0.0
        %1401 = vmatpush2.msra.mxu0 0.0
        %1402 = vmatprep.subr.mxu0 0.0
        %1403 = vmatpush2.msra.mxu0 0.0
        %1404 = vmatprep.subr.mxu0 0.0
        %1405 = vmatpush2.msra.mxu0 0.0
        %1406 = vmatprep.subr.mxu0 0.0
        %1407 = vmatpush2.msra.mxu0 0.0
        %1408 = vmatprep.subr.mxu0 0.0
        %1409 = vmatpush2.msra.mxu0 0.0
        %1410 = vmatprep.subr.mxu0 0.0
        %1411 = vmatpush2.msra.mxu0 0.0
        %1412 = vmatprep.subr.mxu0 0.0
        %1413 = vmatpush2.msra.mxu0 0.0
        %1414 = vmatprep.subr.mxu0 0.0
        %1415 = vmatpush2.msra.mxu0 0.0
        %1416 = vmatprep.subr.mxu0 0.0
        %1417 = vmatpush2.msra.mxu0 0.0
        %1418 = vmatprep.subr.mxu0 0.0
        %1419 = vmatpush2.msra.mxu0 0.0
        %1420 = vmatprep.subr.mxu0 0.0
        %1421 = vmatpush2.msra.mxu0 0.0
        %1422 = vmatprep.subr.mxu0 0.0
        %1423 = vmatpush2.msra.mxu0 0.0
        %1424 = vmatprep.mubr.f32.mxu0 0.0
        %1425 = vmatmul.mubr.f32.gmra.mxu0 %v350
        %v1426 = vpop.f32.mrf.mxu0
        %v1427 = vadd.f32 0.0, %v1426
        %v1428 = vpop.f32.mrf.mxu0
        %v1429 = vadd.f32 0.0, %v1428
        %1430 = vdwg.mxu0
        %1431 = vmatprep.subr.mxu0 %v848
        %1432 = vmatpush1.msra.mxu0 %v847
        %1433 = vmatprep.subr.mxu0 %v816
        %1434 = vmatpush1.msra.mxu0 %v815
        %1435 = vmatprep.subr.mxu0 %v784
        %1436 = vmatpush1.msra.mxu0 %v783
        %1437 = vmatprep.subr.mxu0 %v752
        %1438 = vmatpush1.msra.mxu0 %v751
        %1439 = vmatprep.subr.mxu0 %v720
        %1440 = vmatpush1.msra.mxu0 %v719
        %1441 = vmatprep.subr.mxu0 %v688
        %1442 = vmatpush1.msra.mxu0 %v687
        %1443 = vmatprep.subr.mxu0 %v656
        %1444 = vmatpush1.msra.mxu0 %v655
        %1445 = vmatprep.subr.mxu0 %v624
        %1446 = vmatpush1.msra.mxu0 %v623
        %1447 = vmatprep.subr.mxu0 %v592
        %1448 = vmatpush1.msra.mxu0 %v591
        %1449 = vmatprep.subr.mxu0 %v560
        %1450 = vmatpush1.msra.mxu0 %v559
        %1451 = vmatprep.subr.mxu0 %v528
        %1452 = vmatpush1.msra.mxu0 %v527
        %1453 = vmatprep.subr.mxu0 %v496
        %1454 = vmatpush1.msra.mxu0 %v495
        %1455 = vmatprep.subr.mxu0 %v464
        %1456 = vmatpush1.msra.mxu0 %v463
        %1457 = vmatprep.subr.mxu0 %v432
        %1458 = vmatpush1.msra.mxu0 %v431
        %1459 = vmatprep.subr.mxu0 %v400
        %1460 = vmatpush1.msra.mxu0 %v399
        %1461 = vmatprep.subr.mxu0 %v368
        %1462 = vmatpush1.msra.mxu0 %v367
        %1463 = vmatprep.subr.mxu0 0.0
        %1464 = vmatpush2.msra.mxu0 0.0
        %1465 = vmatprep.subr.mxu0 0.0
        %1466 = vmatpush2.msra.mxu0 0.0
        %1467 = vmatprep.subr.mxu0 0.0
        %1468 = vmatpush2.msra.mxu0 0.0
        %1469 = vmatprep.subr.mxu0 0.0
        %1470 = vmatpush2.msra.mxu0 0.0
        %1471 = vmatprep.subr.mxu0 0.0
        %1472 = vmatpush2.msra.mxu0 0.0
        %1473 = vmatprep.subr.mxu0 0.0
        %1474 = vmatpush2.msra.mxu0 0.0
        %1475 = vmatprep.subr.mxu0 0.0
        %1476 = vmatpush2.msra.mxu0 0.0
        %1477 = vmatprep.subr.mxu0 0.0
        %1478 = vmatpush2.msra.mxu0 0.0
        %1479 = vmatprep.subr.mxu0 0.0
        %1480 = vmatpush2.msra.mxu0 0.0
        %1481 = vmatprep.subr.mxu0 0.0
        %1482 = vmatpush2.msra.mxu0 0.0
        %1483 = vmatprep.subr.mxu0 0.0
        %1484 = vmatpush2.msra.mxu0 0.0
        %1485 = vmatprep.subr.mxu0 0.0
        %1486 = vmatpush2.msra.mxu0 0.0
        %1487 = vmatprep.subr.mxu0 0.0
        %1488 = vmatpush2.msra.mxu0 0.0
        %1489 = vmatprep.subr.mxu0 0.0
        %1490 = vmatpush2.msra.mxu0 0.0
        %1491 = vmatprep.subr.mxu0 0.0
        %1492 = vmatpush2.msra.mxu0 0.0
        %1493 = vmatprep.subr.mxu0 0.0
        %1494 = vmatpush2.msra.mxu0 0.0
        %1495 = vmatprep.mubr.f32.mxu0 0.0
        %1496 = vmatmul.mubr.f32.gmra.mxu0 %v350
        %v1497 = vpop.f32.mrf.mxu0
        %v1498 = vadd.f32 0.0, %v1497
        %v1499 = vpop.f32.mrf.mxu0
        %v1500 = vadd.f32 0.0, %v1499
        %1501 = vdwg.mxu0
        %1502 = vmatprep.subr.mxu0 %v850
        %1503 = vmatpush1.msra.mxu0 %v849
        %1504 = vmatprep.subr.mxu0 %v818
        %1505 = vmatpush1.msra.mxu0 %v817
        %1506 = vmatprep.subr.mxu0 %v786
        %1507 = vmatpush1.msra.mxu0 %v785
        %1508 = vmatprep.subr.mxu0 %v754
        %1509 = vmatpush1.msra.mxu0 %v753
        %1510 = vmatprep.subr.mxu0 %v722
        %1511 = vmatpush1.msra.mxu0 %v721
        %1512 = vmatprep.subr.mxu0 %v690
        %1513 = vmatpush1.msra.mxu0 %v689
        %1514 = vmatprep.subr.mxu0 %v658
        %1515 = vmatpush1.msra.mxu0 %v657
        %1516 = vmatprep.subr.mxu0 %v626
        %1517 = vmatpush1.msra.mxu0 %v625
        %1518 = vmatprep.subr.mxu0 %v594
        %1519 = vmatpush1.msra.mxu0 %v593
        %1520 = vmatprep.subr.mxu0 %v562
        %1521 = vmatpush1.msra.mxu0 %v561
        %1522 = vmatprep.subr.mxu0 %v530
        %1523 = vmatpush1.msra.mxu0 %v529
        %1524 = vmatprep.subr.mxu0 %v498
        %1525 = vmatpush1.msra.mxu0 %v497
        %1526 = vmatprep.subr.mxu0 %v466
        %1527 = vmatpush1.msra.mxu0 %v465
        %1528 = vmatprep.subr.mxu0 %v434
        %1529 = vmatpush1.msra.mxu0 %v433
        %1530 = vmatprep.subr.mxu0 %v402
        %1531 = vmatpush1.msra.mxu0 %v401
        %1532 = vmatprep.subr.mxu0 %v370
        %1533 = vmatpush1.msra.mxu0 %v369
        %1534 = vmatprep.subr.mxu0 0.0
        %1535 = vmatpush2.msra.mxu0 0.0
        %1536 = vmatprep.subr.mxu0 0.0
        %1537 = vmatpush2.msra.mxu0 0.0
        %1538 = vmatprep.subr.mxu0 0.0
        %1539 = vmatpush2.msra.mxu0 0.0
        %1540 = vmatprep.subr.mxu0 0.0
        %1541 = vmatpush2.msra.mxu0 0.0
        %1542 = vmatprep.subr.mxu0 0.0
        %1543 = vmatpush2.msra.mxu0 0.0
        %1544 = vmatprep.subr.mxu0 0.0
        %1545 = vmatpush2.msra.mxu0 0.0
        %1546 = vmatprep.subr.mxu0 0.0
        %1547 = vmatpush2.msra.mxu0 0.0
        %1548 = vmatprep.subr.mxu0 0.0
        %1549 = vmatpush2.msra.mxu0 0.0
        %1550 = vmatprep.subr.mxu0 0.0
        %1551 = vmatpush2.msra.mxu0 0.0
        %1552 = vmatprep.subr.mxu0 0.0
        %1553 = vmatpush2.msra.mxu0 0.0
        %1554 = vmatprep.subr.mxu0 0.0
        %1555 = vmatpush2.msra.mxu0 0.0
        %1556 = vmatprep.subr.mxu0 0.0
        %1557 = vmatpush2.msra.mxu0 0.0
        %1558 = vmatprep.subr.mxu0 0.0
        %1559 = vmatpush2.msra.mxu0 0.0
        %1560 = vmatprep.subr.mxu0 0.0
        %1561 = vmatpush2.msra.mxu0 0.0
        %1562 = vmatprep.subr.mxu0 0.0
        %1563 = vmatpush2.msra.mxu0 0.0
        %1564 = vmatprep.subr.mxu0 0.0
        %1565 = vmatpush2.msra.mxu0 0.0
        %1566 = vmatprep.mubr.f32.mxu0 0.0
        %1567 = vmatmul.mubr.f32.gmra.mxu0 %v350
        %v1568 = vpop.f32.mrf.mxu0
        %v1569 = vadd.f32 0.0, %v1568
        %v1570 = vpop.f32.mrf.mxu0
        %v1571 = vadd.f32 0.0, %v1570
        %1572 = vdwg.mxu0
        %1573 = vmatprep.subr.mxu0 %v852
        %1574 = vmatpush1.msra.mxu0 %v851
        %1575 = vmatprep.subr.mxu0 %v820
        %1576 = vmatpush1.msra.mxu0 %v819
        %1577 = vmatprep.subr.mxu0 %v788
        %1578 = vmatpush1.msra.mxu0 %v787
        %1579 = vmatprep.subr.mxu0 %v756
        %1580 = vmatpush1.msra.mxu0 %v755
        %1581 = vmatprep.subr.mxu0 %v724
        %1582 = vmatpush1.msra.mxu0 %v723
        %1583 = vmatprep.subr.mxu0 %v692
        %1584 = vmatpush1.msra.mxu0 %v691
        %1585 = vmatprep.subr.mxu0 %v660
        %1586 = vmatpush1.msra.mxu0 %v659
        %1587 = vmatprep.subr.mxu0 %v628
        %1588 = vmatpush1.msra.mxu0 %v627
        %1589 = vmatprep.subr.mxu0 %v596
        %1590 = vmatpush1.msra.mxu0 %v595
        %1591 = vmatprep.subr.mxu0 %v564
        %1592 = vmatpush1.msra.mxu0 %v563
        %1593 = vmatprep.subr.mxu0 %v532
        %1594 = vmatpush1.msra.mxu0 %v531
        %1595 = vmatprep.subr.mxu0 %v500
        %1596 = vmatpush1.msra.mxu0 %v499
        %1597 = vmatprep.subr.mxu0 %v468
        %1598 = vmatpush1.msra.mxu0 %v467
        %1599 = vmatprep.subr.mxu0 %v436
        %1600 = vmatpush1.msra.mxu0 %v435
        %1601 = vmatprep.subr.mxu0 %v404
        %1602 = vmatpush1.msra.mxu0 %v403
        %1603 = vmatprep.subr.mxu0 %v372
        %1604 = vmatpush1.msra.mxu0 %v371
        %1605 = vmatprep.subr.mxu0 0.0
        %1606 = vmatpush2.msra.mxu0 0.0
        %1607 = vmatprep.subr.mxu0 0.0
        %1608 = vmatpush2.msra.mxu0 0.0
        %1609 = vmatprep.subr.mxu0 0.0
        %1610 = vmatpush2.msra.mxu0 0.0
        %1611 = vmatprep.subr.mxu0 0.0
        %1612 = vmatpush2.msra.mxu0 0.0
        %1613 = vmatprep.subr.mxu0 0.0
        %1614 = vmatpush2.msra.mxu0 0.0
        %1615 = vmatprep.subr.mxu0 0.0
        %1616 = vmatpush2.msra.mxu0 0.0
        %1617 = vmatprep.subr.mxu0 0.0
        %1618 = vmatpush2.msra.mxu0 0.0
        %1619 = vmatprep.subr.mxu0 0.0
        %1620 = vmatpush2.msra.mxu0 0.0
        %1621 = vmatprep.subr.mxu0 0.0
        %1622 = vmatpush2.msra.mxu0 0.0
        %1623 = vmatprep.subr.mxu0 0.0
        %1624 = vmatpush2.msra.mxu0 0.0
        %1625 = vmatprep.subr.mxu0 0.0
        %1626 = vmatpush2.msra.mxu0 0.0
        %1627 = vmatprep.subr.mxu0 0.0
        %1628 = vmatpush2.msra.mxu0 0.0
        %1629 = vmatprep.subr.mxu0 0.0
        %1630 = vmatpush2.msra.mxu0 0.0
        %1631 = vmatprep.subr.mxu0 0.0
        %1632 = vmatpush2.msra.mxu0 0.0
        %1633 = vmatprep.subr.mxu0 0.0
        %1634 = vmatpush2.msra.mxu0 0.0
        %1635 = vmatprep.subr.mxu0 0.0
        %1636 = vmatpush2.msra.mxu0 0.0
        %1637 = vmatprep.mubr.f32.mxu0 0.0
        %1638 = vmatmul.mubr.f32.gmra.mxu0 %v350
        %v1639 = vpop.f32.mrf.mxu0
        %v1640 = vadd.f32 0.0, %v1639
        %v1641 = vpop.f32.mrf.mxu0
        %v1642 = vadd.f32 0.0, %v1641
        %1643 = vdwg.mxu0
        %1644 = vmatprep.subr.mxu0 %v854
        %1645 = vmatpush1.msra.mxu0 %v853
        %1646 = vmatprep.subr.mxu0 %v822
        %1647 = vmatpush1.msra.mxu0 %v821
        %1648 = vmatprep.subr.mxu0 %v790
        %1649 = vmatpush1.msra.mxu0 %v789
        %1650 = vmatprep.subr.mxu0 %v758
        %1651 = vmatpush1.msra.mxu0 %v757
        %1652 = vmatprep.subr.mxu0 %v726
        %1653 = vmatpush1.msra.mxu0 %v725
        %1654 = vmatprep.subr.mxu0 %v694
        %1655 = vmatpush1.msra.mxu0 %v693
        %1656 = vmatprep.subr.mxu0 %v662
        %1657 = vmatpush1.msra.mxu0 %v661
        %1658 = vmatprep.subr.mxu0 %v630
        %1659 = vmatpush1.msra.mxu0 %v629
        %1660 = vmatprep.subr.mxu0 %v598
        %1661 = vmatpush1.msra.mxu0 %v597
        %1662 = vmatprep.subr.mxu0 %v566
        %1663 = vmatpush1.msra.mxu0 %v565
        %1664 = vmatprep.subr.mxu0 %v534
        %1665 = vmatpush1.msra.mxu0 %v533
        %1666 = vmatprep.subr.mxu0 %v502
        %1667 = vmatpush1.msra.mxu0 %v501
        %1668 = vmatprep.subr.mxu0 %v470
        %1669 = vmatpush1.msra.mxu0 %v469
        %1670 = vmatprep.subr.mxu0 %v438
        %1671 = vmatpush1.msra.mxu0 %v437
        %1672 = vmatprep.subr.mxu0 %v406
        %1673 = vmatpush1.msra.mxu0 %v405
        %1674 = vmatprep.subr.mxu0 %v374
        %1675 = vmatpush1.msra.mxu0 %v373
        %1676 = vmatprep.subr.mxu0 0.0
        %1677 = vmatpush2.msra.mxu0 0.0
        %1678 = vmatprep.subr.mxu0 0.0
        %1679 = vmatpush2.msra.mxu0 0.0
        %1680 = vmatprep.subr.mxu0 0.0
        %1681 = vmatpush2.msra.mxu0 0.0
        %1682 = vmatprep.subr.mxu0 0.0
        %1683 = vmatpush2.msra.mxu0 0.0
        %1684 = vmatprep.subr.mxu0 0.0
        %1685 = vmatpush2.msra.mxu0 0.0
        %1686 = vmatprep.subr.mxu0 0.0
        %1687 = vmatpush2.msra.mxu0 0.0
        %1688 = vmatprep.subr.mxu0 0.0
        %1689 = vmatpush2.msra.mxu0 0.0
        %1690 = vmatprep.subr.mxu0 0.0
        %1691 = vmatpush2.msra.mxu0 0.0
        %1692 = vmatprep.subr.mxu0 0.0
        %1693 = vmatpush2.msra.mxu0 0.0
        %1694 = vmatprep.subr.mxu0 0.0
        %1695 = vmatpush2.msra.mxu0 0.0
        %1696 = vmatprep.subr.mxu0 0.0
        %1697 = vmatpush2.msra.mxu0 0.0
        %1698 = vmatprep.subr.mxu0 0.0
        %1699 = vmatpush2.msra.mxu0 0.0
        %1700 = vmatprep.subr.mxu0 0.0
        %1701 = vmatpush2.msra.mxu0 0.0
        %1702 = vmatprep.subr.mxu0 0.0
        %1703 = vmatpush2.msra.mxu0 0.0
        %1704 = vmatprep.subr.mxu0 0.0
        %1705 = vmatpush2.msra.mxu0 0.0
        %1706 = vmatprep.subr.mxu0 0.0
        %1707 = vmatpush2.msra.mxu0 0.0
        %1708 = vmatprep.mubr.f32.mxu0 0.0
        %1709 = vmatmul.mubr.f32.gmra.mxu0 %v350
        %v1710 = vpop.f32.mrf.mxu0
        %v1711 = vadd.f32 0.0, %v1710
        %v1712 = vpop.f32.mrf.mxu0
        %v1713 = vadd.f32 0.0, %v1712
        %1714 = vdwg.mxu0
        %1715 = vmatprep.subr.mxu0 %v856
        %1716 = vmatpush1.msra.mxu0 %v855
        %1717 = vmatprep.subr.mxu0 %v824
        %1718 = vmatpush1.msra.mxu0 %v823
        %1719 = vmatprep.subr.mxu0 %v792
        %1720 = vmatpush1.msra.mxu0 %v791
        %1721 = vmatprep.subr.mxu0 %v760
        %1722 = vmatpush1.msra.mxu0 %v759
        %1723 = vmatprep.subr.mxu0 %v728
        %1724 = vmatpush1.msra.mxu0 %v727
        %1725 = vmatprep.subr.mxu0 %v696
        %1726 = vmatpush1.msra.mxu0 %v695
        %1727 = vmatprep.subr.mxu0 %v664
        %1728 = vmatpush1.msra.mxu0 %v663
        %1729 = vmatprep.subr.mxu0 %v632
        %1730 = vmatpush1.msra.mxu0 %v631
        %1731 = vmatprep.subr.mxu0 %v600
        %1732 = vmatpush1.msra.mxu0 %v599
        %1733 = vmatprep.subr.mxu0 %v568
        %1734 = vmatpush1.msra.mxu0 %v567
        %1735 = vmatprep.subr.mxu0 %v536
        %1736 = vmatpush1.msra.mxu0 %v535
        %1737 = vmatprep.subr.mxu0 %v504
        %1738 = vmatpush1.msra.mxu0 %v503
        %1739 = vmatprep.subr.mxu0 %v472
        %1740 = vmatpush1.msra.mxu0 %v471
        %1741 = vmatprep.subr.mxu0 %v440
        %1742 = vmatpush1.msra.mxu0 %v439
        %1743 = vmatprep.subr.mxu0 %v408
        %1744 = vmatpush1.msra.mxu0 %v407
        %1745 = vmatprep.subr.mxu0 %v376
        %1746 = vmatpush1.msra.mxu0 %v375
        %1747 = vmatprep.subr.mxu0 0.0
        %1748 = vmatpush2.msra.mxu0 0.0
        %1749 = vmatprep.subr.mxu0 0.0
        %1750 = vmatpush2.msra.mxu0 0.0
        %1751 = vmatprep.subr.mxu0 0.0
        %1752 = vmatpush2.msra.mxu0 0.0
        %1753 = vmatprep.subr.mxu0 0.0
        %1754 = vmatpush2.msra.mxu0 0.0
        %1755 = vmatprep.subr.mxu0 0.0
        %1756 = vmatpush2.msra.mxu0 0.0
        %1757 = vmatprep.subr.mxu0 0.0
        %1758 = vmatpush2.msra.mxu0 0.0
        %1759 = vmatprep.subr.mxu0 0.0
        %1760 = vmatpush2.msra.mxu0 0.0
        %1761 = vmatprep.subr.mxu0 0.0
        %1762 = vmatpush2.msra.mxu0 0.0
        %1763 = vmatprep.subr.mxu0 0.0
        %1764 = vmatpush2.msra.mxu0 0.0
        %1765 = vmatprep.subr.mxu0 0.0
        %1766 = vmatpush2.msra.mxu0 0.0
        %1767 = vmatprep.subr.mxu0 0.0
        %1768 = vmatpush2.msra.mxu0 0.0
        %1769 = vmatprep.subr.mxu0 0.0
        %1770 = vmatpush2.msra.mxu0 0.0
        %1771 = vmatprep.subr.mxu0 0.0
        %1772 = vmatpush2.msra.mxu0 0.0
        %1773 = vmatprep.subr.mxu0 0.0
        %1774 = vmatpush2.msra.mxu0 0.0
        %1775 = vmatprep.subr.mxu0 0.0
        %1776 = vmatpush2.msra.mxu0 0.0
        %1777 = vmatprep.subr.mxu0 0.0
        %1778 = vmatpush2.msra.mxu0 0.0
        %1779 = vmatprep.mubr.f32.mxu0 0.0
        %1780 = vmatmul.mubr.f32.gmra.mxu0 %v350
        %v1781 = vpop.f32.mrf.mxu0
        %v1782 = vadd.f32 0.0, %v1781
        %v1783 = vpop.f32.mrf.mxu0
        %v1784 = vadd.f32 0.0, %v1783
        %1785 = vdwg.mxu0
        %1786 = vmatprep.subr.mxu0 %v858
        %1787 = vmatpush1.msra.mxu0 %v857
        %1788 = vmatprep.subr.mxu0 %v826
        %1789 = vmatpush1.msra.mxu0 %v825
        %1790 = vmatprep.subr.mxu0 %v794
        %1791 = vmatpush1.msra.mxu0 %v793
        %1792 = vmatprep.subr.mxu0 %v762
        %1793 = vmatpush1.msra.mxu0 %v761
        %1794 = vmatprep.subr.mxu0 %v730
        %1795 = vmatpush1.msra.mxu0 %v729
        %1796 = vmatprep.subr.mxu0 %v698
        %1797 = vmatpush1.msra.mxu0 %v697
        %1798 = vmatprep.subr.mxu0 %v666
        %1799 = vmatpush1.msra.mxu0 %v665
        %1800 = vmatprep.subr.mxu0 %v634
        %1801 = vmatpush1.msra.mxu0 %v633
        %1802 = vmatprep.subr.mxu0 %v602
        %1803 = vmatpush1.msra.mxu0 %v601
        %1804 = vmatprep.subr.mxu0 %v570
        %1805 = vmatpush1.msra.mxu0 %v569
        %1806 = vmatprep.subr.mxu0 %v538
        %1807 = vmatpush1.msra.mxu0 %v537
        %1808 = vmatprep.subr.mxu0 %v506
        %1809 = vmatpush1.msra.mxu0 %v505
        %1810 = vmatprep.subr.mxu0 %v474
        %1811 = vmatpush1.msra.mxu0 %v473
        %1812 = vmatprep.subr.mxu0 %v442
        %1813 = vmatpush1.msra.mxu0 %v441
        %1814 = vmatprep.subr.mxu0 %v410
        %1815 = vmatpush1.msra.mxu0 %v409
        %1816 = vmatprep.subr.mxu0 %v378
        %1817 = vmatpush1.msra.mxu0 %v377
        %1818 = vmatprep.subr.mxu0 0.0
        %1819 = vmatpush2.msra.mxu0 0.0
        %1820 = vmatprep.subr.mxu0 0.0
        %1821 = vmatpush2.msra.mxu0 0.0
        %1822 = vmatprep.subr.mxu0 0.0
        %1823 = vmatpush2.msra.mxu0 0.0
        %1824 = vmatprep.subr.mxu0 0.0
        %1825 = vmatpush2.msra.mxu0 0.0
        %1826 = vmatprep.subr.mxu0 0.0
        %1827 = vmatpush2.msra.mxu0 0.0
        %1828 = vmatprep.subr.mxu0 0.0
        %1829 = vmatpush2.msra.mxu0 0.0
        %1830 = vmatprep.subr.mxu0 0.0
        %1831 = vmatpush2.msra.mxu0 0.0
        %1832 = vmatprep.subr.mxu0 0.0
        %1833 = vmatpush2.msra.mxu0 0.0
        %1834 = vmatprep.subr.mxu0 0.0
        %1835 = vmatpush2.msra.mxu0 0.0
        %1836 = vmatprep.subr.mxu0 0.0
        %1837 = vmatpush2.msra.mxu0 0.0
        %1838 = vmatprep.subr.mxu0 0.0
        %1839 = vmatpush2.msra.mxu0 0.0
        %1840 = vmatprep.subr.mxu0 0.0
        %1841 = vmatpush2.msra.mxu0 0.0
        %1842 = vmatprep.subr.mxu0 0.0
        %1843 = vmatpush2.msra.mxu0 0.0
        %1844 = vmatprep.subr.mxu0 0.0
        %1845 = vmatpush2.msra.mxu0 0.0
        %1846 = vmatprep.subr.mxu0 0.0
        %1847 = vmatpush2.msra.mxu0 0.0
        %1848 = vmatprep.subr.mxu0 0.0
        %1849 = vmatpush2.msra.mxu0 0.0
        %1850 = vmatprep.mubr.f32.mxu0 0.0
        %1851 = vmatmul.mubr.f32.gmra.mxu0 %v350
        %v1852 = vpop.f32.mrf.mxu0
        %v1853 = vadd.f32 0.0, %v1852
        %v1854 = vpop.f32.mrf.mxu0
        %v1855 = vadd.f32 0.0, %v1854
        %1856 = vdwg.mxu0
        %1857 = vmatprep.subr.mxu0 %v860
        %1858 = vmatpush1.msra.mxu0 %v859
        %1859 = vmatprep.subr.mxu0 %v828
        %1860 = vmatpush1.msra.mxu0 %v827
        %1861 = vmatprep.subr.mxu0 %v796
        %1862 = vmatpush1.msra.mxu0 %v795
        %1863 = vmatprep.subr.mxu0 %v764
        %1864 = vmatpush1.msra.mxu0 %v763
        %1865 = vmatprep.subr.mxu0 %v732
        %1866 = vmatpush1.msra.mxu0 %v731
        %1867 = vmatprep.subr.mxu0 %v700
        %1868 = vmatpush1.msra.mxu0 %v699
        %1869 = vmatprep.subr.mxu0 %v668
        %1870 = vmatpush1.msra.mxu0 %v667
        %1871 = vmatprep.subr.mxu0 %v636
        %1872 = vmatpush1.msra.mxu0 %v635
        %1873 = vmatprep.subr.mxu0 %v604
        %1874 = vmatpush1.msra.mxu0 %v603
        %1875 = vmatprep.subr.mxu0 %v572
        %1876 = vmatpush1.msra.mxu0 %v571
        %1877 = vmatprep.subr.mxu0 %v540
        %1878 = vmatpush1.msra.mxu0 %v539
        %1879 = vmatprep.subr.mxu0 %v508
        %1880 = vmatpush1.msra.mxu0 %v507
        %1881 = vmatprep.subr.mxu0 %v476
        %1882 = vmatpush1.msra.mxu0 %v475
        %1883 = vmatprep.subr.mxu0 %v444
        %1884 = vmatpush1.msra.mxu0 %v443
        %1885 = vmatprep.subr.mxu0 %v412
        %1886 = vmatpush1.msra.mxu0 %v411
        %1887 = vmatprep.subr.mxu0 %v380
        %1888 = vmatpush1.msra.mxu0 %v379
        %1889 = vmatprep.subr.mxu0 0.0
        %1890 = vmatpush2.msra.mxu0 0.0
        %1891 = vmatprep.subr.mxu0 0.0
        %1892 = vmatpush2.msra.mxu0 0.0
        %1893 = vmatprep.subr.mxu0 0.0
        %1894 = vmatpush2.msra.mxu0 0.0
        %1895 = vmatprep.subr.mxu0 0.0
        %1896 = vmatpush2.msra.mxu0 0.0
        %1897 = vmatprep.subr.mxu0 0.0
        %1898 = vmatpush2.msra.mxu0 0.0
        %1899 = vmatprep.subr.mxu0 0.0
        %1900 = vmatpush2.msra.mxu0 0.0
        %1901 = vmatprep.subr.mxu0 0.0
        %1902 = vmatpush2.msra.mxu0 0.0
        %1903 = vmatprep.subr.mxu0 0.0
        %1904 = vmatpush2.msra.mxu0 0.0
        %1905 = vmatprep.subr.mxu0 0.0
        %1906 = vmatpush2.msra.mxu0 0.0
        %1907 = vmatprep.subr.mxu0 0.0
        %1908 = vmatpush2.msra.mxu0 0.0
        %1909 = vmatprep.subr.mxu0 0.0
        %1910 = vmatpush2.msra.mxu0 0.0
        %1911 = vmatprep.subr.mxu0 0.0
        %1912 = vmatpush2.msra.mxu0 0.0
        %1913 = vmatprep.subr.mxu0 0.0
        %1914 = vmatpush2.msra.mxu0 0.0
        %1915 = vmatprep.subr.mxu0 0.0
        %1916 = vmatpush2.msra.mxu0 0.0
        %1917 = vmatprep.subr.mxu0 0.0
        %1918 = vmatpush2.msra.mxu0 0.0
        %1919 = vmatprep.subr.mxu0 0.0
        %1920 = vmatpush2.msra.mxu0 0.0
        %1921 = vmatprep.mubr.f32.mxu0 0.0
        %1922 = vmatmul.mubr.f32.gmra.mxu0 %v350
        %v1923 = vpop.f32.mrf.mxu0
        %v1924 = vadd.f32 0.0, %v1923
        %v1925 = vpop.f32.mrf.mxu0
        %v1926 = vadd.f32 0.0, %v1925
        %1927 = vdwg.mxu0
        %1928 = vmatprep.subr.mxu0 %v862
        %1929 = vmatpush1.msra.mxu0 %v861
        %1930 = vmatprep.subr.mxu0 %v830
        %1931 = vmatpush1.msra.mxu0 %v829
        %1932 = vmatprep.subr.mxu0 %v798
        %1933 = vmatpush1.msra.mxu0 %v797
        %1934 = vmatprep.subr.mxu0 %v766
        %1935 = vmatpush1.msra.mxu0 %v765
        %1936 = vmatprep.subr.mxu0 %v734
        %1937 = vmatpush1.msra.mxu0 %v733
        %1938 = vmatprep.subr.mxu0 %v702
        %1939 = vmatpush1.msra.mxu0 %v701
        %1940 = vmatprep.subr.mxu0 %v670
        %1941 = vmatpush1.msra.mxu0 %v669
        %1942 = vmatprep.subr.mxu0 %v638
        %1943 = vmatpush1.msra.mxu0 %v637
        %1944 = vmatprep.subr.mxu0 %v606
        %1945 = vmatpush1.msra.mxu0 %v605
        %1946 = vmatprep.subr.mxu0 %v574
        %1947 = vmatpush1.msra.mxu0 %v573
        %1948 = vmatprep.subr.mxu0 %v542
        %1949 = vmatpush1.msra.mxu0 %v541
        %1950 = vmatprep.subr.mxu0 %v510
        %1951 = vmatpush1.msra.mxu0 %v509
        %1952 = vmatprep.subr.mxu0 %v478
        %1953 = vmatpush1.msra.mxu0 %v477
        %1954 = vmatprep.subr.mxu0 %v446
        %1955 = vmatpush1.msra.mxu0 %v445
        %1956 = vmatprep.subr.mxu0 %v414
        %1957 = vmatpush1.msra.mxu0 %v413
        %1958 = vmatprep.subr.mxu0 %v382
        %1959 = vmatpush1.msra.mxu0 %v381
        %1960 = vmatprep.subr.mxu0 0.0
        %1961 = vmatpush2.msra.mxu0 0.0
        %1962 = vmatprep.subr.mxu0 0.0
        %1963 = vmatpush2.msra.mxu0 0.0
        %1964 = vmatprep.subr.mxu0 0.0
        %1965 = vmatpush2.msra.mxu0 0.0
        %1966 = vmatprep.subr.mxu0 0.0
        %1967 = vmatpush2.msra.mxu0 0.0
        %1968 = vmatprep.subr.mxu0 0.0
        %1969 = vmatpush2.msra.mxu0 0.0
        %1970 = vmatprep.subr.mxu0 0.0
        %1971 = vmatpush2.msra.mxu0 0.0
        %1972 = vmatprep.subr.mxu0 0.0
        %1973 = vmatpush2.msra.mxu0 0.0
        %1974 = vmatprep.subr.mxu0 0.0
        %1975 = vmatpush2.msra.mxu0 0.0
        %1976 = vmatprep.subr.mxu0 0.0
        %1977 = vmatpush2.msra.mxu0 0.0
        %1978 = vmatprep.subr.mxu0 0.0
        %1979 = vmatpush2.msra.mxu0 0.0
        %1980 = vmatprep.subr.mxu0 0.0
        %1981 = vmatpush2.msra.mxu0 0.0
        %1982 = vmatprep.subr.mxu0 0.0
        %1983 = vmatpush2.msra.mxu0 0.0
        %1984 = vmatprep.subr.mxu0 0.0
        %1985 = vmatpush2.msra.mxu0 0.0
        %1986 = vmatprep.subr.mxu0 0.0
        %1987 = vmatpush2.msra.mxu0 0.0
        %1988 = vmatprep.subr.mxu0 0.0
        %1989 = vmatpush2.msra.mxu0 0.0
        %1990 = vmatprep.subr.mxu0 0.0
        %1991 = vmatpush2.msra.mxu0 0.0
        %1992 = vmatprep.mubr.f32.mxu0 0.0
        %1993 = vmatmul.mubr.f32.gmra.mxu0 %v350
        %v1994 = vpop.f32.mrf.mxu0
        %v1995 = vadd.f32 0.0, %v1994
        %v1996 = vpop.f32.mrf.mxu0
        %v1997 = vadd.f32 0.0, %v1996
        %1998 = vdwg.mxu0
        %vm1999 = vcmask 261120
        %v2001 = vsel %vm1999, %v221, 0
        %2003 = vmatprep.subr.mxu0 0.0
        %2004 = vmatpush1.msra.mxu0 0.0
        %2005 = vmatprep.subr.mxu0 0.0
        %2006 = vmatpush1.msra.mxu0 0.0
        %2007 = vmatprep.subr.mxu0 0.0
        %2008 = vmatpush1.msra.mxu0 0.0
        %2009 = vmatprep.subr.mxu0 0.0
        %2010 = vmatpush1.msra.mxu0 0.0
        %2011 = vmatprep.subr.mxu0 0.0
        %2012 = vmatpush1.msra.mxu0 0.0
        %2013 = vmatprep.subr.mxu0 0.0
        %2014 = vmatpush1.msra.mxu0 0.0
        %2015 = vmatprep.subr.mxu0 0.0
        %2016 = vmatpush1.msra.mxu0 0.0
        %2017 = vmatprep.subr.mxu0 0.0
        %2018 = vmatpush1.msra.mxu0 0.0
        %2019 = vmatprep.subr.mxu0 0.0
        %2020 = vmatpush1.msra.mxu0 0.0
        %2021 = vmatprep.subr.mxu0 0.0
        %2022 = vmatpush1.msra.mxu0 0.0
        %2023 = vmatprep.subr.mxu0 0.0
        %2024 = vmatpush1.msra.mxu0 0.0
        %2025 = vmatprep.subr.mxu0 0.0
        %2026 = vmatpush1.msra.mxu0 0.0
        %2027 = vmatprep.subr.mxu0 %v319
        %2028 = vmatpush1.msra.mxu0 %v318
        %2029 = vmatprep.subr.mxu0 %v287
        %2030 = vmatpush1.msra.mxu0 %v286
        %2031 = vmatprep.subr.mxu0 %v255
        %2032 = vmatpush1.msra.mxu0 %v254
        %2033 = vmatprep.subr.mxu0 %v223
        %2034 = vmatpush1.msra.mxu0 %v222
        %2035 = vmatprep.subr.mxu0 0.0
        %2036 = vmatpush2.msra.mxu0 0.0
        %2037 = vmatprep.subr.mxu0 0.0
        %2038 = vmatpush2.msra.mxu0 0.0
        %2039 = vmatprep.subr.mxu0 0.0
        %2040 = vmatpush2.msra.mxu0 0.0
        %2041 = vmatprep.subr.mxu0 0.0
        %2042 = vmatpush2.msra.mxu0 0.0
        %2043 = vmatprep.subr.mxu0 0.0
        %2044 = vmatpush2.msra.mxu0 0.0
        %2045 = vmatprep.subr.mxu0 0.0
        %2046 = vmatpush2.msra.mxu0 0.0
        %2047 = vmatprep.subr.mxu0 0.0
        %2048 = vmatpush2.msra.mxu0 0.0
        %2049 = vmatprep.subr.mxu0 0.0
        %2050 = vmatpush2.msra.mxu0 0.0
        %2051 = vmatprep.subr.mxu0 0.0
        %2052 = vmatpush2.msra.mxu0 0.0
        %2053 = vmatprep.subr.mxu0 0.0
        %2054 = vmatpush2.msra.mxu0 0.0
        %2055 = vmatprep.subr.mxu0 0.0
        %2056 = vmatpush2.msra.mxu0 0.0
        %2057 = vmatprep.subr.mxu0 0.0
        %2058 = vmatpush2.msra.mxu0 0.0
        %2059 = vmatprep.subr.mxu0 0.0
        %2060 = vmatpush2.msra.mxu0 0.0
        %2061 = vmatprep.subr.mxu0 0.0
        %2062 = vmatpush2.msra.mxu0 0.0
        %2063 = vmatprep.subr.mxu0 0.0
        %2064 = vmatpush2.msra.mxu0 0.0
        %2065 = vmatprep.subr.mxu0 0.0
        %2066 = vmatpush2.msra.mxu0 0.0
        %2067 = vmatprep.mubr.f32.mxu0 0.0
        %2068 = vmatmul.mubr.f32.gmra.mxu0 %v2001
        %v2069 = vpop.f32.mrf.mxu0
        %v2070 = vadd.f32 %v930, %v2069
        %v2071 = vpop.f32.mrf.mxu0
        %v2072 = vadd.f32 %v932, %v2071
        %2073 = vdwg.mxu0
        %2074 = vmatprep.subr.mxu0 0.0
        %2075 = vmatpush1.msra.mxu0 0.0
        %2076 = vmatprep.subr.mxu0 0.0
        %2077 = vmatpush1.msra.mxu0 0.0
        %2078 = vmatprep.subr.mxu0 0.0
        %2079 = vmatpush1.msra.mxu0 0.0
        %2080 = vmatprep.subr.mxu0 0.0
        %2081 = vmatpush1.msra.mxu0 0.0
        %2082 = vmatprep.subr.mxu0 0.0
        %2083 = vmatpush1.msra.mxu0 0.0
        %2084 = vmatprep.subr.mxu0 0.0
        %2085 = vmatpush1.msra.mxu0 0.0
        %2086 = vmatprep.subr.mxu0 0.0
        %2087 = vmatpush1.msra.mxu0 0.0
        %2088 = vmatprep.subr.mxu0 0.0
        %2089 = vmatpush1.msra.mxu0 0.0
        %2090 = vmatprep.subr.mxu0 0.0
        %2091 = vmatpush1.msra.mxu0 0.0
        %2092 = vmatprep.subr.mxu0 0.0
        %2093 = vmatpush1.msra.mxu0 0.0
        %2094 = vmatprep.subr.mxu0 0.0
        %2095 = vmatpush1.msra.mxu0 0.0
        %2096 = vmatprep.subr.mxu0 0.0
        %2097 = vmatpush1.msra.mxu0 0.0
        %2098 = vmatprep.subr.mxu0 %v321
        %2099 = vmatpush1.msra.mxu0 %v320
        %2100 = vmatprep.subr.mxu0 %v289
        %2101 = vmatpush1.msra.mxu0 %v288
        %2102 = vmatprep.subr.mxu0 %v257
        %2103 = vmatpush1.msra.mxu0 %v256
        %2104 = vmatprep.subr.mxu0 %v225
        %2105 = vmatpush1.msra.mxu0 %v224
        %2106 = vmatprep.subr.mxu0 0.0
        %2107 = vmatpush2.msra.mxu0 0.0
        %2108 = vmatprep.subr.mxu0 0.0
        %2109 = vmatpush2.msra.mxu0 0.0
        %2110 = vmatprep.subr.mxu0 0.0
        %2111 = vmatpush2.msra.mxu0 0.0
        %2112 = vmatprep.subr.mxu0 0.0
        %2113 = vmatpush2.msra.mxu0 0.0
        %2114 = vmatprep.subr.mxu0 0.0
        %2115 = vmatpush2.msra.mxu0 0.0
        %2116 = vmatprep.subr.mxu0 0.0
        %2117 = vmatpush2.msra.mxu0 0.0
        %2118 = vmatprep.subr.mxu0 0.0
        %2119 = vmatpush2.msra.mxu0 0.0
        %2120 = vmatprep.subr.mxu0 0.0
        %2121 = vmatpush2.msra.mxu0 0.0
        %2122 = vmatprep.subr.mxu0 0.0
        %2123 = vmatpush2.msra.mxu0 0.0
        %2124 = vmatprep.subr.mxu0 0.0
        %2125 = vmatpush2.msra.mxu0 0.0
        %2126 = vmatprep.subr.mxu0 0.0
        %2127 = vmatpush2.msra.mxu0 0.0
        %2128 = vmatprep.subr.mxu0 0.0
        %2129 = vmatpush2.msra.mxu0 0.0
        %2130 = vmatprep.subr.mxu0 0.0
        %2131 = vmatpush2.msra.mxu0 0.0
        %2132 = vmatprep.subr.mxu0 0.0
        %2133 = vmatpush2.msra.mxu0 0.0
        %2134 = vmatprep.subr.mxu0 0.0
        %2135 = vmatpush2.msra.mxu0 0.0
        %2136 = vmatprep.subr.mxu0 0.0
        %2137 = vmatpush2.msra.mxu0 0.0
        %2138 = vmatprep.mubr.f32.mxu0 0.0
        %2139 = vmatmul.mubr.f32.gmra.mxu0 %v2001
        %v2140 = vpop.f32.mrf.mxu0
        %v2141 = vadd.f32 %v1001, %v2140
        %v2142 = vpop.f32.mrf.mxu0
        %v2143 = vadd.f32 %v1003, %v2142
        %2144 = vdwg.mxu0
        %2145 = vmatprep.subr.mxu0 0.0
        %2146 = vmatpush1.msra.mxu0 0.0
        %2147 = vmatprep.subr.mxu0 0.0
        %2148 = vmatpush1.msra.mxu0 0.0
        %2149 = vmatprep.subr.mxu0 0.0
        %2150 = vmatpush1.msra.mxu0 0.0
        %2151 = vmatprep.subr.mxu0 0.0
        %2152 = vmatpush1.msra.mxu0 0.0
        %2153 = vmatprep.subr.mxu0 0.0
        %2154 = vmatpush1.msra.mxu0 0.0
        %2155 = vmatprep.subr.mxu0 0.0
        %2156 = vmatpush1.msra.mxu0 0.0
        %2157 = vmatprep.subr.mxu0 0.0
        %2158 = vmatpush1.msra.mxu0 0.0
        %2159 = vmatprep.subr.mxu0 0.0
        %2160 = vmatpush1.msra.mxu0 0.0
        %2161 = vmatprep.subr.mxu0 0.0
        %2162 = vmatpush1.msra.mxu0 0.0
        %2163 = vmatprep.subr.mxu0 0.0
        %2164 = vmatpush1.msra.mxu0 0.0
        %2165 = vmatprep.subr.mxu0 0.0
        %2166 = vmatpush1.msra.mxu0 0.0
        %2167 = vmatprep.subr.mxu0 0.0
        %2168 = vmatpush1.msra.mxu0 0.0
        %2169 = vmatprep.subr.mxu0 %v323
        %2170 = vmatpush1.msra.mxu0 %v322
        %2171 = vmatprep.subr.mxu0 %v291
        %2172 = vmatpush1.msra.mxu0 %v290
        %2173 = vmatprep.subr.mxu0 %v259
        %2174 = vmatpush1.msra.mxu0 %v258
        %2175 = vmatprep.subr.mxu0 %v227
        %2176 = vmatpush1.msra.mxu0 %v226
        %2177 = vmatprep.subr.mxu0 0.0
        %2178 = vmatpush2.msra.mxu0 0.0
        %2179 = vmatprep.subr.mxu0 0.0
        %2180 = vmatpush2.msra.mxu0 0.0
        %2181 = vmatprep.subr.mxu0 0.0
        %2182 = vmatpush2.msra.mxu0 0.0
        %2183 = vmatprep.subr.mxu0 0.0
        %2184 = vmatpush2.msra.mxu0 0.0
        %2185 = vmatprep.subr.mxu0 0.0
        %2186 = vmatpush2.msra.mxu0 0.0
        %2187 = vmatprep.subr.mxu0 0.0
        %2188 = vmatpush2.msra.mxu0 0.0
        %2189 = vmatprep.subr.mxu0 0.0
        %2190 = vmatpush2.msra.mxu0 0.0
        %2191 = vmatprep.subr.mxu0 0.0
        %2192 = vmatpush2.msra.mxu0 0.0
        %2193 = vmatprep.subr.mxu0 0.0
        %2194 = vmatpush2.msra.mxu0 0.0
        %2195 = vmatprep.subr.mxu0 0.0
        %2196 = vmatpush2.msra.mxu0 0.0
        %2197 = vmatprep.subr.mxu0 0.0
        %2198 = vmatpush2.msra.mxu0 0.0
        %2199 = vmatprep.subr.mxu0 0.0
        %2200 = vmatpush2.msra.mxu0 0.0
        %2201 = vmatprep.subr.mxu0 0.0
        %2202 = vmatpush2.msra.mxu0 0.0
        %2203 = vmatprep.subr.mxu0 0.0
        %2204 = vmatpush2.msra.mxu0 0.0
        %2205 = vmatprep.subr.mxu0 0.0
        %2206 = vmatpush2.msra.mxu0 0.0
        %2207 = vmatprep.subr.mxu0 0.0
        %2208 = vmatpush2.msra.mxu0 0.0
        %2209 = vmatprep.mubr.f32.mxu0 0.0
        %2210 = vmatmul.mubr.f32.gmra.mxu0 %v2001
        %v2211 = vpop.f32.mrf.mxu0
        %v2212 = vadd.f32 %v1072, %v2211
        %v2213 = vpop.f32.mrf.mxu0
        %v2214 = vadd.f32 %v1074, %v2213
        %2215 = vdwg.mxu0
        %2216 = vmatprep.subr.mxu0 0.0
        %2217 = vmatpush1.msra.mxu0 0.0
        %2218 = vmatprep.subr.mxu0 0.0
        %2219 = vmatpush1.msra.mxu0 0.0
        %2220 = vmatprep.subr.mxu0 0.0
        %2221 = vmatpush1.msra.mxu0 0.0
        %2222 = vmatprep.subr.mxu0 0.0
        %2223 = vmatpush1.msra.mxu0 0.0
        %2224 = vmatprep.subr.mxu0 0.0
        %2225 = vmatpush1.msra.mxu0 0.0
        %2226 = vmatprep.subr.mxu0 0.0
        %2227 = vmatpush1.msra.mxu0 0.0
        %2228 = vmatprep.subr.mxu0 0.0
        %2229 = vmatpush1.msra.mxu0 0.0
        %2230 = vmatprep.subr.mxu0 0.0
        %2231 = vmatpush1.msra.mxu0 0.0
        %2232 = vmatprep.subr.mxu0 0.0
        %2233 = vmatpush1.msra.mxu0 0.0
        %2234 = vmatprep.subr.mxu0 0.0
        %2235 = vmatpush1.msra.mxu0 0.0
        %2236 = vmatprep.subr.mxu0 0.0
        %2237 = vmatpush1.msra.mxu0 0.0
        %2238 = vmatprep.subr.mxu0 0.0
        %2239 = vmatpush1.msra.mxu0 0.0
        %2240 = vmatprep.subr.mxu0 %v325
        %2241 = vmatpush1.msra.mxu0 %v324
        %2242 = vmatprep.subr.mxu0 %v293
        %2243 = vmatpush1.msra.mxu0 %v292
        %2244 = vmatprep.subr.mxu0 %v261
        %2245 = vmatpush1.msra.mxu0 %v260
        %2246 = vmatprep.subr.mxu0 %v229
        %2247 = vmatpush1.msra.mxu0 %v228
        %2248 = vmatprep.subr.mxu0 0.0
        %2249 = vmatpush2.msra.mxu0 0.0
        %2250 = vmatprep.subr.mxu0 0.0
        %2251 = vmatpush2.msra.mxu0 0.0
        %2252 = vmatprep.subr.mxu0 0.0
        %2253 = vmatpush2.msra.mxu0 0.0
        %2254 = vmatprep.subr.mxu0 0.0
        %2255 = vmatpush2.msra.mxu0 0.0
        %2256 = vmatprep.subr.mxu0 0.0
        %2257 = vmatpush2.msra.mxu0 0.0
        %2258 = vmatprep.subr.mxu0 0.0
        %2259 = vmatpush2.msra.mxu0 0.0
        %2260 = vmatprep.subr.mxu0 0.0
        %2261 = vmatpush2.msra.mxu0 0.0
        %2262 = vmatprep.subr.mxu0 0.0
        %2263 = vmatpush2.msra.mxu0 0.0
        %2264 = vmatprep.subr.mxu0 0.0
        %2265 = vmatpush2.msra.mxu0 0.0
        %2266 = vmatprep.subr.mxu0 0.0
        %2267 = vmatpush2.msra.mxu0 0.0
        %2268 = vmatprep.subr.mxu0 0.0
        %2269 = vmatpush2.msra.mxu0 0.0
        %2270 = vmatprep.subr.mxu0 0.0
        %2271 = vmatpush2.msra.mxu0 0.0
        %2272 = vmatprep.subr.mxu0 0.0
        %2273 = vmatpush2.msra.mxu0 0.0
        %2274 = vmatprep.subr.mxu0 0.0
        %2275 = vmatpush2.msra.mxu0 0.0
        %2276 = vmatprep.subr.mxu0 0.0
        %2277 = vmatpush2.msra.mxu0 0.0
        %2278 = vmatprep.subr.mxu0 0.0
        %2279 = vmatpush2.msra.mxu0 0.0
        %2280 = vmatprep.mubr.f32.mxu0 0.0
        %2281 = vmatmul.mubr.f32.gmra.mxu0 %v2001
        %v2282 = vpop.f32.mrf.mxu0
        %v2283 = vadd.f32 %v1143, %v2282
        %v2284 = vpop.f32.mrf.mxu0
        %v2285 = vadd.f32 %v1145, %v2284
        %2286 = vdwg.mxu0
        %2287 = vmatprep.subr.mxu0 0.0
        %2288 = vmatpush1.msra.mxu0 0.0
        %2289 = vmatprep.subr.mxu0 0.0
        %2290 = vmatpush1.msra.mxu0 0.0
        %2291 = vmatprep.subr.mxu0 0.0
        %2292 = vmatpush1.msra.mxu0 0.0
        %2293 = vmatprep.subr.mxu0 0.0
        %2294 = vmatpush1.msra.mxu0 0.0
        %2295 = vmatprep.subr.mxu0 0.0
        %2296 = vmatpush1.msra.mxu0 0.0
        %2297 = vmatprep.subr.mxu0 0.0
        %2298 = vmatpush1.msra.mxu0 0.0
        %2299 = vmatprep.subr.mxu0 0.0
        %2300 = vmatpush1.msra.mxu0 0.0
        %2301 = vmatprep.subr.mxu0 0.0
        %2302 = vmatpush1.msra.mxu0 0.0
        %2303 = vmatprep.subr.mxu0 0.0
        %2304 = vmatpush1.msra.mxu0 0.0
        %2305 = vmatprep.subr.mxu0 0.0
        %2306 = vmatpush1.msra.mxu0 0.0
        %2307 = vmatprep.subr.mxu0 0.0
        %2308 = vmatpush1.msra.mxu0 0.0
        %2309 = vmatprep.subr.mxu0 0.0
        %2310 = vmatpush1.msra.mxu0 0.0
        %2311 = vmatprep.subr.mxu0 %v327
        %2312 = vmatpush1.msra.mxu0 %v326
        %2313 = vmatprep.subr.mxu0 %v295
        %2314 = vmatpush1.msra.mxu0 %v294
        %2315 = vmatprep.subr.mxu0 %v263
        %2316 = vmatpush1.msra.mxu0 %v262
        %2317 = vmatprep.subr.mxu0 %v231
        %2318 = vmatpush1.msra.mxu0 %v230
        %2319 = vmatprep.subr.mxu0 0.0
        %2320 = vmatpush2.msra.mxu0 0.0
        %2321 = vmatprep.subr.mxu0 0.0
        %2322 = vmatpush2.msra.mxu0 0.0
        %2323 = vmatprep.subr.mxu0 0.0
        %2324 = vmatpush2.msra.mxu0 0.0
        %2325 = vmatprep.subr.mxu0 0.0
        %2326 = vmatpush2.msra.mxu0 0.0
        %2327 = vmatprep.subr.mxu0 0.0
        %2328 = vmatpush2.msra.mxu0 0.0
        %2329 = vmatprep.subr.mxu0 0.0
        %2330 = vmatpush2.msra.mxu0 0.0
        %2331 = vmatprep.subr.mxu0 0.0
        %2332 = vmatpush2.msra.mxu0 0.0
        %2333 = vmatprep.subr.mxu0 0.0
        %2334 = vmatpush2.msra.mxu0 0.0
        %2335 = vmatprep.subr.mxu0 0.0
        %2336 = vmatpush2.msra.mxu0 0.0
        %2337 = vmatprep.subr.mxu0 0.0
        %2338 = vmatpush2.msra.mxu0 0.0
        %2339 = vmatprep.subr.mxu0 0.0
        %2340 = vmatpush2.msra.mxu0 0.0
        %2341 = vmatprep.subr.mxu0 0.0
        %2342 = vmatpush2.msra.mxu0 0.0
        %2343 = vmatprep.subr.mxu0 0.0
        %2344 = vmatpush2.msra.mxu0 0.0
        %2345 = vmatprep.subr.mxu0 0.0
        %2346 = vmatpush2.msra.mxu0 0.0
        %2347 = vmatprep.subr.mxu0 0.0
        %2348 = vmatpush2.msra.mxu0 0.0
        %2349 = vmatprep.subr.mxu0 0.0
        %2350 = vmatpush2.msra.mxu0 0.0
        %2351 = vmatprep.mubr.f32.mxu0 0.0
        %2352 = vmatmul.mubr.f32.gmra.mxu0 %v2001
        %v2353 = vpop.f32.mrf.mxu0
        %v2354 = vadd.f32 %v1214, %v2353
        %v2355 = vpop.f32.mrf.mxu0
        %v2356 = vadd.f32 %v1216, %v2355
        %2357 = vdwg.mxu0
        %2358 = vmatprep.subr.mxu0 0.0
        %2359 = vmatpush1.msra.mxu0 0.0
        %2360 = vmatprep.subr.mxu0 0.0
        %2361 = vmatpush1.msra.mxu0 0.0
        %2362 = vmatprep.subr.mxu0 0.0
        %2363 = vmatpush1.msra.mxu0 0.0
        %2364 = vmatprep.subr.mxu0 0.0
        %2365 = vmatpush1.msra.mxu0 0.0
        %2366 = vmatprep.subr.mxu0 0.0
        %2367 = vmatpush1.msra.mxu0 0.0
        %2368 = vmatprep.subr.mxu0 0.0
        %2369 = vmatpush1.msra.mxu0 0.0
        %2370 = vmatprep.subr.mxu0 0.0
        %2371 = vmatpush1.msra.mxu0 0.0
        %2372 = vmatprep.subr.mxu0 0.0
        %2373 = vmatpush1.msra.mxu0 0.0
        %2374 = vmatprep.subr.mxu0 0.0
        %2375 = vmatpush1.msra.mxu0 0.0
        %2376 = vmatprep.subr.mxu0 0.0
        %2377 = vmatpush1.msra.mxu0 0.0
        %2378 = vmatprep.subr.mxu0 0.0
        %2379 = vmatpush1.msra.mxu0 0.0
        %2380 = vmatprep.subr.mxu0 0.0
        %2381 = vmatpush1.msra.mxu0 0.0
        %2382 = vmatprep.subr.mxu0 %v329
        %2383 = vmatpush1.msra.mxu0 %v328
        %2384 = vmatprep.subr.mxu0 %v297
        %2385 = vmatpush1.msra.mxu0 %v296
        %2386 = vmatprep.subr.mxu0 %v265
        %2387 = vmatpush1.msra.mxu0 %v264
        %2388 = vmatprep.subr.mxu0 %v233
        %2389 = vmatpush1.msra.mxu0 %v232
        %2390 = vmatprep.subr.mxu0 0.0
        %2391 = vmatpush2.msra.mxu0 0.0
        %2392 = vmatprep.subr.mxu0 0.0
        %2393 = vmatpush2.msra.mxu0 0.0
        %2394 = vmatprep.subr.mxu0 0.0
        %2395 = vmatpush2.msra.mxu0 0.0
        %2396 = vmatprep.subr.mxu0 0.0
        %2397 = vmatpush2.msra.mxu0 0.0
        %2398 = vmatprep.subr.mxu0 0.0
        %2399 = vmatpush2.msra.mxu0 0.0
        %2400 = vmatprep.subr.mxu0 0.0
        %2401 = vmatpush2.msra.mxu0 0.0
        %2402 = vmatprep.subr.mxu0 0.0
        %2403 = vmatpush2.msra.mxu0 0.0
        %2404 = vmatprep.subr.mxu0 0.0
        %2405 = vmatpush2.msra.mxu0 0.0
        %2406 = vmatprep.subr.mxu0 0.0
        %2407 = vmatpush2.msra.mxu0 0.0
        %2408 = vmatprep.subr.mxu0 0.0
        %2409 = vmatpush2.msra.mxu0 0.0
        %2410 = vmatprep.subr.mxu0 0.0
        %2411 = vmatpush2.msra.mxu0 0.0
        %2412 = vmatprep.subr.mxu0 0.0
        %2413 = vmatpush2.msra.mxu0 0.0
        %2414 = vmatprep.subr.mxu0 0.0
        %2415 = vmatpush2.msra.mxu0 0.0
        %2416 = vmatprep.subr.mxu0 0.0
        %2417 = vmatpush2.msra.mxu0 0.0
        %2418 = vmatprep.subr.mxu0 0.0
        %2419 = vmatpush2.msra.mxu0 0.0
        %2420 = vmatprep.subr.mxu0 0.0
        %2421 = vmatpush2.msra.mxu0 0.0
        %2422 = vmatprep.mubr.f32.mxu0 0.0
        %2423 = vmatmul.mubr.f32.gmra.mxu0 %v2001
        %v2424 = vpop.f32.mrf.mxu0
        %v2425 = vadd.f32 %v1285, %v2424
        %v2426 = vpop.f32.mrf.mxu0
        %v2427 = vadd.f32 %v1287, %v2426
        %2428 = vdwg.mxu0
        %2429 = vmatprep.subr.mxu0 0.0
        %2430 = vmatpush1.msra.mxu0 0.0
        %2431 = vmatprep.subr.mxu0 0.0
        %2432 = vmatpush1.msra.mxu0 0.0
        %2433 = vmatprep.subr.mxu0 0.0
        %2434 = vmatpush1.msra.mxu0 0.0
        %2435 = vmatprep.subr.mxu0 0.0
        %2436 = vmatpush1.msra.mxu0 0.0
        %2437 = vmatprep.subr.mxu0 0.0
        %2438 = vmatpush1.msra.mxu0 0.0
        %2439 = vmatprep.subr.mxu0 0.0
        %2440 = vmatpush1.msra.mxu0 0.0
        %2441 = vmatprep.subr.mxu0 0.0
        %2442 = vmatpush1.msra.mxu0 0.0
        %2443 = vmatprep.subr.mxu0 0.0
        %2444 = vmatpush1.msra.mxu0 0.0
        %2445 = vmatprep.subr.mxu0 0.0
        %2446 = vmatpush1.msra.mxu0 0.0
        %2447 = vmatprep.subr.mxu0 0.0
        %2448 = vmatpush1.msra.mxu0 0.0
        %2449 = vmatprep.subr.mxu0 0.0
        %2450 = vmatpush1.msra.mxu0 0.0
        %2451 = vmatprep.subr.mxu0 0.0
        %2452 = vmatpush1.msra.mxu0 0.0
        %2453 = vmatprep.subr.mxu0 %v331
        %2454 = vmatpush1.msra.mxu0 %v330
        %2455 = vmatprep.subr.mxu0 %v299
        %2456 = vmatpush1.msra.mxu0 %v298
        %2457 = vmatprep.subr.mxu0 %v267
        %2458 = vmatpush1.msra.mxu0 %v266
        %2459 = vmatprep.subr.mxu0 %v235
        %2460 = vmatpush1.msra.mxu0 %v234
        %2461 = vmatprep.subr.mxu0 0.0
        %2462 = vmatpush2.msra.mxu0 0.0
        %2463 = vmatprep.subr.mxu0 0.0
        %2464 = vmatpush2.msra.mxu0 0.0
        %2465 = vmatprep.subr.mxu0 0.0
        %2466 = vmatpush2.msra.mxu0 0.0
        %2467 = vmatprep.subr.mxu0 0.0
        %2468 = vmatpush2.msra.mxu0 0.0
        %2469 = vmatprep.subr.mxu0 0.0
        %2470 = vmatpush2.msra.mxu0 0.0
        %2471 = vmatprep.subr.mxu0 0.0
        %2472 = vmatpush2.msra.mxu0 0.0
        %2473 = vmatprep.subr.mxu0 0.0
        %2474 = vmatpush2.msra.mxu0 0.0
        %2475 = vmatprep.subr.mxu0 0.0
        %2476 = vmatpush2.msra.mxu0 0.0
        %2477 = vmatprep.subr.mxu0 0.0
        %2478 = vmatpush2.msra.mxu0 0.0
        %2479 = vmatprep.subr.mxu0 0.0
        %2480 = vmatpush2.msra.mxu0 0.0
        %2481 = vmatprep.subr.mxu0 0.0
        %2482 = vmatpush2.msra.mxu0 0.0
        %2483 = vmatprep.subr.mxu0 0.0
        %2484 = vmatpush2.msra.mxu0 0.0
        %2485 = vmatprep.subr.mxu0 0.0
        %2486 = vmatpush2.msra.mxu0 0.0
        %2487 = vmatprep.subr.mxu0 0.0
        %2488 = vmatpush2.msra.mxu0 0.0
        %2489 = vmatprep.subr.mxu0 0.0
        %2490 = vmatpush2.msra.mxu0 0.0
        %2491 = vmatprep.subr.mxu0 0.0
        %2492 = vmatpush2.msra.mxu0 0.0
        %2493 = vmatprep.mubr.f32.mxu0 0.0
        %2494 = vmatmul.mubr.f32.gmra.mxu0 %v2001
        %v2495 = vpop.f32.mrf.mxu0
        %v2496 = vadd.f32 %v1356, %v2495
        %v2497 = vpop.f32.mrf.mxu0
        %v2498 = vadd.f32 %v1358, %v2497
        %2499 = vdwg.mxu0
        %2500 = vmatprep.subr.mxu0 0.0
        %2501 = vmatpush1.msra.mxu0 0.0
        %2502 = vmatprep.subr.mxu0 0.0
        %2503 = vmatpush1.msra.mxu0 0.0
        %2504 = vmatprep.subr.mxu0 0.0
        %2505 = vmatpush1.msra.mxu0 0.0
        %2506 = vmatprep.subr.mxu0 0.0
        %2507 = vmatpush1.msra.mxu0 0.0
        %2508 = vmatprep.subr.mxu0 0.0
        %2509 = vmatpush1.msra.mxu0 0.0
        %2510 = vmatprep.subr.mxu0 0.0
        %2511 = vmatpush1.msra.mxu0 0.0
        %2512 = vmatprep.subr.mxu0 0.0
        %2513 = vmatpush1.msra.mxu0 0.0
        %2514 = vmatprep.subr.mxu0 0.0
        %2515 = vmatpush1.msra.mxu0 0.0
        %2516 = vmatprep.subr.mxu0 0.0
        %2517 = vmatpush1.msra.mxu0 0.0
        %2518 = vmatprep.subr.mxu0 0.0
        %2519 = vmatpush1.msra.mxu0 0.0
        %2520 = vmatprep.subr.mxu0 0.0
        %2521 = vmatpush1.msra.mxu0 0.0
        %2522 = vmatprep.subr.mxu0 0.0
        %2523 = vmatpush1.msra.mxu0 0.0
        %2524 = vmatprep.subr.mxu0 %v333
        %2525 = vmatpush1.msra.mxu0 %v332
        %2526 = vmatprep.subr.mxu0 %v301
        %2527 = vmatpush1.msra.mxu0 %v300
        %2528 = vmatprep.subr.mxu0 %v269
        %2529 = vmatpush1.msra.mxu0 %v268
        %2530 = vmatprep.subr.mxu0 %v237
        %2531 = vmatpush1.msra.mxu0 %v236
        %2532 = vmatprep.subr.mxu0 0.0
        %2533 = vmatpush2.msra.mxu0 0.0
        %2534 = vmatprep.subr.mxu0 0.0
        %2535 = vmatpush2.msra.mxu0 0.0
        %2536 = vmatprep.subr.mxu0 0.0
        %2537 = vmatpush2.msra.mxu0 0.0
        %2538 = vmatprep.subr.mxu0 0.0
        %2539 = vmatpush2.msra.mxu0 0.0
        %2540 = vmatprep.subr.mxu0 0.0
        %2541 = vmatpush2.msra.mxu0 0.0
        %2542 = vmatprep.subr.mxu0 0.0
        %2543 = vmatpush2.msra.mxu0 0.0
        %2544 = vmatprep.subr.mxu0 0.0
        %2545 = vmatpush2.msra.mxu0 0.0
        %2546 = vmatprep.subr.mxu0 0.0
        %2547 = vmatpush2.msra.mxu0 0.0
        %2548 = vmatprep.subr.mxu0 0.0
        %2549 = vmatpush2.msra.mxu0 0.0
        %2550 = vmatprep.subr.mxu0 0.0
        %2551 = vmatpush2.msra.mxu0 0.0
        %2552 = vmatprep.subr.mxu0 0.0
        %2553 = vmatpush2.msra.mxu0 0.0
        %2554 = vmatprep.subr.mxu0 0.0
        %2555 = vmatpush2.msra.mxu0 0.0
        %2556 = vmatprep.subr.mxu0 0.0
        %2557 = vmatpush2.msra.mxu0 0.0
        %2558 = vmatprep.subr.mxu0 0.0
        %2559 = vmatpush2.msra.mxu0 0.0
        %2560 = vmatprep.subr.mxu0 0.0
        %2561 = vmatpush2.msra.mxu0 0.0
        %2562 = vmatprep.subr.mxu0 0.0
        %2563 = vmatpush2.msra.mxu0 0.0
        %2564 = vmatprep.mubr.f32.mxu0 0.0
        %2565 = vmatmul.mubr.f32.gmra.mxu0 %v2001
        %v2566 = vpop.f32.mrf.mxu0
        %v2567 = vadd.f32 %v1427, %v2566
        %v2568 = vpop.f32.mrf.mxu0
        %v2569 = vadd.f32 %v1429, %v2568
        %2570 = vdwg.mxu0
        %2571 = vmatprep.subr.mxu0 0.0
        %2572 = vmatpush1.msra.mxu0 0.0
        %2573 = vmatprep.subr.mxu0 0.0
        %2574 = vmatpush1.msra.mxu0 0.0
        %2575 = vmatprep.subr.mxu0 0.0
        %2576 = vmatpush1.msra.mxu0 0.0
        %2577 = vmatprep.subr.mxu0 0.0
        %2578 = vmatpush1.msra.mxu0 0.0
        %2579 = vmatprep.subr.mxu0 0.0
        %2580 = vmatpush1.msra.mxu0 0.0
        %2581 = vmatprep.subr.mxu0 0.0
        %2582 = vmatpush1.msra.mxu0 0.0
        %2583 = vmatprep.subr.mxu0 0.0
        %2584 = vmatpush1.msra.mxu0 0.0
        %2585 = vmatprep.subr.mxu0 0.0
        %2586 = vmatpush1.msra.mxu0 0.0
        %2587 = vmatprep.subr.mxu0 0.0
        %2588 = vmatpush1.msra.mxu0 0.0
        %2589 = vmatprep.subr.mxu0 0.0
        %2590 = vmatpush1.msra.mxu0 0.0
        %2591 = vmatprep.subr.mxu0 0.0
        %2592 = vmatpush1.msra.mxu0 0.0
        %2593 = vmatprep.subr.mxu0 0.0
        %2594 = vmatpush1.msra.mxu0 0.0
        %2595 = vmatprep.subr.mxu0 %v335
        %2596 = vmatpush1.msra.mxu0 %v334
        %2597 = vmatprep.subr.mxu0 %v303
        %2598 = vmatpush1.msra.mxu0 %v302
        %2599 = vmatprep.subr.mxu0 %v271
        %2600 = vmatpush1.msra.mxu0 %v270
        %2601 = vmatprep.subr.mxu0 %v239
        %2602 = vmatpush1.msra.mxu0 %v238
        %2603 = vmatprep.subr.mxu0 0.0
        %2604 = vmatpush2.msra.mxu0 0.0
        %2605 = vmatprep.subr.mxu0 0.0
        %2606 = vmatpush2.msra.mxu0 0.0
        %2607 = vmatprep.subr.mxu0 0.0
        %2608 = vmatpush2.msra.mxu0 0.0
        %2609 = vmatprep.subr.mxu0 0.0
        %2610 = vmatpush2.msra.mxu0 0.0
        %2611 = vmatprep.subr.mxu0 0.0
        %2612 = vmatpush2.msra.mxu0 0.0
        %2613 = vmatprep.subr.mxu0 0.0
        %2614 = vmatpush2.msra.mxu0 0.0
        %2615 = vmatprep.subr.mxu0 0.0
        %2616 = vmatpush2.msra.mxu0 0.0
        %2617 = vmatprep.subr.mxu0 0.0
        %2618 = vmatpush2.msra.mxu0 0.0
        %2619 = vmatprep.subr.mxu0 0.0
        %2620 = vmatpush2.msra.mxu0 0.0
        %2621 = vmatprep.subr.mxu0 0.0
        %2622 = vmatpush2.msra.mxu0 0.0
        %2623 = vmatprep.subr.mxu0 0.0
        %2624 = vmatpush2.msra.mxu0 0.0
        %2625 = vmatprep.subr.mxu0 0.0
        %2626 = vmatpush2.msra.mxu0 0.0
        %2627 = vmatprep.subr.mxu0 0.0
        %2628 = vmatpush2.msra.mxu0 0.0
        %2629 = vmatprep.subr.mxu0 0.0
        %2630 = vmatpush2.msra.mxu0 0.0
        %2631 = vmatprep.subr.mxu0 0.0
        %2632 = vmatpush2.msra.mxu0 0.0
        %2633 = vmatprep.subr.mxu0 0.0
        %2634 = vmatpush2.msra.mxu0 0.0
        %2635 = vmatprep.mubr.f32.mxu0 0.0
        %2636 = vmatmul.mubr.f32.gmra.mxu0 %v2001
        %v2637 = vpop.f32.mrf.mxu0
        %v2638 = vadd.f32 %v1498, %v2637
        %v2639 = vpop.f32.mrf.mxu0
        %v2640 = vadd.f32 %v1500, %v2639
        %2641 = vdwg.mxu0
        %2642 = vmatprep.subr.mxu0 0.0
        %2643 = vmatpush1.msra.mxu0 0.0
        %2644 = vmatprep.subr.mxu0 0.0
        %2645 = vmatpush1.msra.mxu0 0.0
        %2646 = vmatprep.subr.mxu0 0.0
        %2647 = vmatpush1.msra.mxu0 0.0
        %2648 = vmatprep.subr.mxu0 0.0
        %2649 = vmatpush1.msra.mxu0 0.0
        %2650 = vmatprep.subr.mxu0 0.0
        %2651 = vmatpush1.msra.mxu0 0.0
        %2652 = vmatprep.subr.mxu0 0.0
        %2653 = vmatpush1.msra.mxu0 0.0
        %2654 = vmatprep.subr.mxu0 0.0
        %2655 = vmatpush1.msra.mxu0 0.0
        %2656 = vmatprep.subr.mxu0 0.0
        %2657 = vmatpush1.msra.mxu0 0.0
        %2658 = vmatprep.subr.mxu0 0.0
        %2659 = vmatpush1.msra.mxu0 0.0
        %2660 = vmatprep.subr.mxu0 0.0
        %2661 = vmatpush1.msra.mxu0 0.0
        %2662 = vmatprep.subr.mxu0 0.0
        %2663 = vmatpush1.msra.mxu0 0.0
        %2664 = vmatprep.subr.mxu0 0.0
        %2665 = vmatpush1.msra.mxu0 0.0
        %2666 = vmatprep.subr.mxu0 %v337
        %2667 = vmatpush1.msra.mxu0 %v336
        %2668 = vmatprep.subr.mxu0 %v305
        %2669 = vmatpush1.msra.mxu0 %v304
        %2670 = vmatprep.subr.mxu0 %v273
        %2671 = vmatpush1.msra.mxu0 %v272
        %2672 = vmatprep.subr.mxu0 %v241
        %2673 = vmatpush1.msra.mxu0 %v240
        %2674 = vmatprep.subr.mxu0 0.0
        %2675 = vmatpush2.msra.mxu0 0.0
        %2676 = vmatprep.subr.mxu0 0.0
        %2677 = vmatpush2.msra.mxu0 0.0
        %2678 = vmatprep.subr.mxu0 0.0
        %2679 = vmatpush2.msra.mxu0 0.0
        %2680 = vmatprep.subr.mxu0 0.0
        %2681 = vmatpush2.msra.mxu0 0.0
        %2682 = vmatprep.subr.mxu0 0.0
        %2683 = vmatpush2.msra.mxu0 0.0
        %2684 = vmatprep.subr.mxu0 0.0
        %2685 = vmatpush2.msra.mxu0 0.0
        %2686 = vmatprep.subr.mxu0 0.0
        %2687 = vmatpush2.msra.mxu0 0.0
        %2688 = vmatprep.subr.mxu0 0.0
        %2689 = vmatpush2.msra.mxu0 0.0
        %2690 = vmatprep.subr.mxu0 0.0
        %2691 = vmatpush2.msra.mxu0 0.0
        %2692 = vmatprep.subr.mxu0 0.0
        %2693 = vmatpush2.msra.mxu0 0.0
        %2694 = vmatprep.subr.mxu0 0.0
        %2695 = vmatpush2.msra.mxu0 0.0
        %2696 = vmatprep.subr.mxu0 0.0
        %2697 = vmatpush2.msra.mxu0 0.0
        %2698 = vmatprep.subr.mxu0 0.0
        %2699 = vmatpush2.msra.mxu0 0.0
        %2700 = vmatprep.subr.mxu0 0.0
        %2701 = vmatpush2.msra.mxu0 0.0
        %2702 = vmatprep.subr.mxu0 0.0
        %2703 = vmatpush2.msra.mxu0 0.0
        %2704 = vmatprep.subr.mxu0 0.0
        %2705 = vmatpush2.msra.mxu0 0.0
        %2706 = vmatprep.mubr.f32.mxu0 0.0
        %2707 = vmatmul.mubr.f32.gmra.mxu0 %v2001
        %v2708 = vpop.f32.mrf.mxu0
        %v2709 = vadd.f32 %v1569, %v2708
        %v2710 = vpop.f32.mrf.mxu0
        %v2711 = vadd.f32 %v1571, %v2710
        %2712 = vdwg.mxu0
        %2713 = vmatprep.subr.mxu0 0.0
        %2714 = vmatpush1.msra.mxu0 0.0
        %2715 = vmatprep.subr.mxu0 0.0
        %2716 = vmatpush1.msra.mxu0 0.0
        %2717 = vmatprep.subr.mxu0 0.0
        %2718 = vmatpush1.msra.mxu0 0.0
        %2719 = vmatprep.subr.mxu0 0.0
        %2720 = vmatpush1.msra.mxu0 0.0
        %2721 = vmatprep.subr.mxu0 0.0
        %2722 = vmatpush1.msra.mxu0 0.0
        %2723 = vmatprep.subr.mxu0 0.0
        %2724 = vmatpush1.msra.mxu0 0.0
        %2725 = vmatprep.subr.mxu0 0.0
        %2726 = vmatpush1.msra.mxu0 0.0
        %2727 = vmatprep.subr.mxu0 0.0
        %2728 = vmatpush1.msra.mxu0 0.0
        %2729 = vmatprep.subr.mxu0 0.0
        %2730 = vmatpush1.msra.mxu0 0.0
        %2731 = vmatprep.subr.mxu0 0.0
        %2732 = vmatpush1.msra.mxu0 0.0
        %2733 = vmatprep.subr.mxu0 0.0
        %2734 = vmatpush1.msra.mxu0 0.0
        %2735 = vmatprep.subr.mxu0 0.0
        %2736 = vmatpush1.msra.mxu0 0.0
        %2737 = vmatprep.subr.mxu0 %v339
        %2738 = vmatpush1.msra.mxu0 %v338
        %2739 = vmatprep.subr.mxu0 %v307
        %2740 = vmatpush1.msra.mxu0 %v306
        %2741 = vmatprep.subr.mxu0 %v275
        %2742 = vmatpush1.msra.mxu0 %v274
        %2743 = vmatprep.subr.mxu0 %v243
        %2744 = vmatpush1.msra.mxu0 %v242
        %2745 = vmatprep.subr.mxu0 0.0
        %2746 = vmatpush2.msra.mxu0 0.0
        %2747 = vmatprep.subr.mxu0 0.0
        %2748 = vmatpush2.msra.mxu0 0.0
        %2749 = vmatprep.subr.mxu0 0.0
        %2750 = vmatpush2.msra.mxu0 0.0
        %2751 = vmatprep.subr.mxu0 0.0
        %2752 = vmatpush2.msra.mxu0 0.0
        %2753 = vmatprep.subr.mxu0 0.0
        %2754 = vmatpush2.msra.mxu0 0.0
        %2755 = vmatprep.subr.mxu0 0.0
        %2756 = vmatpush2.msra.mxu0 0.0
        %2757 = vmatprep.subr.mxu0 0.0
        %2758 = vmatpush2.msra.mxu0 0.0
        %2759 = vmatprep.subr.mxu0 0.0
        %2760 = vmatpush2.msra.mxu0 0.0
        %2761 = vmatprep.subr.mxu0 0.0
        %2762 = vmatpush2.msra.mxu0 0.0
        %2763 = vmatprep.subr.mxu0 0.0
        %2764 = vmatpush2.msra.mxu0 0.0
        %2765 = vmatprep.subr.mxu0 0.0
        %2766 = vmatpush2.msra.mxu0 0.0
        %2767 = vmatprep.subr.mxu0 0.0
        %2768 = vmatpush2.msra.mxu0 0.0
        %2769 = vmatprep.subr.mxu0 0.0
        %2770 = vmatpush2.msra.mxu0 0.0
        %2771 = vmatprep.subr.mxu0 0.0
        %2772 = vmatpush2.msra.mxu0 0.0
        %2773 = vmatprep.subr.mxu0 0.0
        %2774 = vmatpush2.msra.mxu0 0.0
        %2775 = vmatprep.subr.mxu0 0.0
        %2776 = vmatpush2.msra.mxu0 0.0
        %2777 = vmatprep.mubr.f32.mxu0 0.0
        %2778 = vmatmul.mubr.f32.gmra.mxu0 %v2001
        %v2779 = vpop.f32.mrf.mxu0
        %v2780 = vadd.f32 %v1640, %v2779
        %v2781 = vpop.f32.mrf.mxu0
        %v2782 = vadd.f32 %v1642, %v2781
        %2783 = vdwg.mxu0
        %2784 = vmatprep.subr.mxu0 0.0
        %2785 = vmatpush1.msra.mxu0 0.0
        %2786 = vmatprep.subr.mxu0 0.0
        %2787 = vmatpush1.msra.mxu0 0.0
        %2788 = vmatprep.subr.mxu0 0.0
        %2789 = vmatpush1.msra.mxu0 0.0
        %2790 = vmatprep.subr.mxu0 0.0
        %2791 = vmatpush1.msra.mxu0 0.0
        %2792 = vmatprep.subr.mxu0 0.0
        %2793 = vmatpush1.msra.mxu0 0.0
        %2794 = vmatprep.subr.mxu0 0.0
        %2795 = vmatpush1.msra.mxu0 0.0
        %2796 = vmatprep.subr.mxu0 0.0
        %2797 = vmatpush1.msra.mxu0 0.0
        %2798 = vmatprep.subr.mxu0 0.0
        %2799 = vmatpush1.msra.mxu0 0.0
        %2800 = vmatprep.subr.mxu0 0.0
        %2801 = vmatpush1.msra.mxu0 0.0
        %2802 = vmatprep.subr.mxu0 0.0
        %2803 = vmatpush1.msra.mxu0 0.0
        %2804 = vmatprep.subr.mxu0 0.0
        %2805 = vmatpush1.msra.mxu0 0.0
        %2806 = vmatprep.subr.mxu0 0.0
        %2807 = vmatpush1.msra.mxu0 0.0
        %2808 = vmatprep.subr.mxu0 %v341
        %2809 = vmatpush1.msra.mxu0 %v340
        %2810 = vmatprep.subr.mxu0 %v309
        %2811 = vmatpush1.msra.mxu0 %v308
        %2812 = vmatprep.subr.mxu0 %v277
        %2813 = vmatpush1.msra.mxu0 %v276
        %2814 = vmatprep.subr.mxu0 %v245
        %2815 = vmatpush1.msra.mxu0 %v244
        %2816 = vmatprep.subr.mxu0 0.0
        %2817 = vmatpush2.msra.mxu0 0.0
        %2818 = vmatprep.subr.mxu0 0.0
        %2819 = vmatpush2.msra.mxu0 0.0
        %2820 = vmatprep.subr.mxu0 0.0
        %2821 = vmatpush2.msra.mxu0 0.0
        %2822 = vmatprep.subr.mxu0 0.0
        %2823 = vmatpush2.msra.mxu0 0.0
        %2824 = vmatprep.subr.mxu0 0.0
        %2825 = vmatpush2.msra.mxu0 0.0
        %2826 = vmatprep.subr.mxu0 0.0
        %2827 = vmatpush2.msra.mxu0 0.0
        %2828 = vmatprep.subr.mxu0 0.0
        %2829 = vmatpush2.msra.mxu0 0.0
        %2830 = vmatprep.subr.mxu0 0.0
        %2831 = vmatpush2.msra.mxu0 0.0
        %2832 = vmatprep.subr.mxu0 0.0
        %2833 = vmatpush2.msra.mxu0 0.0
        %2834 = vmatprep.subr.mxu0 0.0
        %2835 = vmatpush2.msra.mxu0 0.0
        %2836 = vmatprep.subr.mxu0 0.0
        %2837 = vmatpush2.msra.mxu0 0.0
        %2838 = vmatprep.subr.mxu0 0.0
        %2839 = vmatpush2.msra.mxu0 0.0
        %2840 = vmatprep.subr.mxu0 0.0
        %2841 = vmatpush2.msra.mxu0 0.0
        %2842 = vmatprep.subr.mxu0 0.0
        %2843 = vmatpush2.msra.mxu0 0.0
        %2844 = vmatprep.subr.mxu0 0.0
        %2845 = vmatpush2.msra.mxu0 0.0
        %2846 = vmatprep.subr.mxu0 0.0
        %2847 = vmatpush2.msra.mxu0 0.0
        %2848 = vmatprep.mubr.f32.mxu0 0.0
        %2849 = vmatmul.mubr.f32.gmra.mxu0 %v2001
        %v2850 = vpop.f32.mrf.mxu0
        %v2851 = vadd.f32 %v1711, %v2850
        %v2852 = vpop.f32.mrf.mxu0
        %v2853 = vadd.f32 %v1713, %v2852
        %2854 = vdwg.mxu0
        %2855 = vmatprep.subr.mxu0 0.0
        %2856 = vmatpush1.msra.mxu0 0.0
        %2857 = vmatprep.subr.mxu0 0.0
        %2858 = vmatpush1.msra.mxu0 0.0
        %2859 = vmatprep.subr.mxu0 0.0
        %2860 = vmatpush1.msra.mxu0 0.0
        %2861 = vmatprep.subr.mxu0 0.0
        %2862 = vmatpush1.msra.mxu0 0.0
        %2863 = vmatprep.subr.mxu0 0.0
        %2864 = vmatpush1.msra.mxu0 0.0
        %2865 = vmatprep.subr.mxu0 0.0
        %2866 = vmatpush1.msra.mxu0 0.0
        %2867 = vmatprep.subr.mxu0 0.0
        %2868 = vmatpush1.msra.mxu0 0.0
        %2869 = vmatprep.subr.mxu0 0.0
        %2870 = vmatpush1.msra.mxu0 0.0
        %2871 = vmatprep.subr.mxu0 0.0
        %2872 = vmatpush1.msra.mxu0 0.0
        %2873 = vmatprep.subr.mxu0 0.0
        %2874 = vmatpush1.msra.mxu0 0.0
        %2875 = vmatprep.subr.mxu0 0.0
        %2876 = vmatpush1.msra.mxu0 0.0
        %2877 = vmatprep.subr.mxu0 0.0
        %2878 = vmatpush1.msra.mxu0 0.0
        %2879 = vmatprep.subr.mxu0 %v343
        %2880 = vmatpush1.msra.mxu0 %v342
        %2881 = vmatprep.subr.mxu0 %v311
        %2882 = vmatpush1.msra.mxu0 %v310
        %2883 = vmatprep.subr.mxu0 %v279
        %2884 = vmatpush1.msra.mxu0 %v278
        %2885 = vmatprep.subr.mxu0 %v247
        %2886 = vmatpush1.msra.mxu0 %v246
        %2887 = vmatprep.subr.mxu0 0.0
        %2888 = vmatpush2.msra.mxu0 0.0
        %2889 = vmatprep.subr.mxu0 0.0
        %2890 = vmatpush2.msra.mxu0 0.0
        %2891 = vmatprep.subr.mxu0 0.0
        %2892 = vmatpush2.msra.mxu0 0.0
        %2893 = vmatprep.subr.mxu0 0.0
        %2894 = vmatpush2.msra.mxu0 0.0
        %2895 = vmatprep.subr.mxu0 0.0
        %2896 = vmatpush2.msra.mxu0 0.0
        %2897 = vmatprep.subr.mxu0 0.0
        %2898 = vmatpush2.msra.mxu0 0.0
        %2899 = vmatprep.subr.mxu0 0.0
        %2900 = vmatpush2.msra.mxu0 0.0
        %2901 = vmatprep.subr.mxu0 0.0
        %2902 = vmatpush2.msra.mxu0 0.0
        %2903 = vmatprep.subr.mxu0 0.0
        %2904 = vmatpush2.msra.mxu0 0.0
        %2905 = vmatprep.subr.mxu0 0.0
        %2906 = vmatpush2.msra.mxu0 0.0
        %2907 = vmatprep.subr.mxu0 0.0
        %2908 = vmatpush2.msra.mxu0 0.0
        %2909 = vmatprep.subr.mxu0 0.0
        %2910 = vmatpush2.msra.mxu0 0.0
        %2911 = vmatprep.subr.mxu0 0.0
        %2912 = vmatpush2.msra.mxu0 0.0
        %2913 = vmatprep.subr.mxu0 0.0
        %2914 = vmatpush2.msra.mxu0 0.0
        %2915 = vmatprep.subr.mxu0 0.0
        %2916 = vmatpush2.msra.mxu0 0.0
        %2917 = vmatprep.subr.mxu0 0.0
        %2918 = vmatpush2.msra.mxu0 0.0
        %2919 = vmatprep.mubr.f32.mxu0 0.0
        %2920 = vmatmul.mubr.f32.gmra.mxu0 %v2001
        %v2921 = vpop.f32.mrf.mxu0
        %v2922 = vadd.f32 %v1782, %v2921
        %v2923 = vpop.f32.mrf.mxu0
        %v2924 = vadd.f32 %v1784, %v2923
        %2925 = vdwg.mxu0
        %2926 = vmatprep.subr.mxu0 0.0
        %2927 = vmatpush1.msra.mxu0 0.0
        %2928 = vmatprep.subr.mxu0 0.0
        %2929 = vmatpush1.msra.mxu0 0.0
        %2930 = vmatprep.subr.mxu0 0.0
        %2931 = vmatpush1.msra.mxu0 0.0
        %2932 = vmatprep.subr.mxu0 0.0
        %2933 = vmatpush1.msra.mxu0 0.0
        %2934 = vmatprep.subr.mxu0 0.0
        %2935 = vmatpush1.msra.mxu0 0.0
        %2936 = vmatprep.subr.mxu0 0.0
        %2937 = vmatpush1.msra.mxu0 0.0
        %2938 = vmatprep.subr.mxu0 0.0
        %2939 = vmatpush1.msra.mxu0 0.0
        %2940 = vmatprep.subr.mxu0 0.0
        %2941 = vmatpush1.msra.mxu0 0.0
        %2942 = vmatprep.subr.mxu0 0.0
        %2943 = vmatpush1.msra.mxu0 0.0
        %2944 = vmatprep.subr.mxu0 0.0
        %2945 = vmatpush1.msra.mxu0 0.0
        %2946 = vmatprep.subr.mxu0 0.0
        %2947 = vmatpush1.msra.mxu0 0.0
        %2948 = vmatprep.subr.mxu0 0.0
        %2949 = vmatpush1.msra.mxu0 0.0
        %2950 = vmatprep.subr.mxu0 %v345
        %2951 = vmatpush1.msra.mxu0 %v344
        %2952 = vmatprep.subr.mxu0 %v313
        %2953 = vmatpush1.msra.mxu0 %v312
        %2954 = vmatprep.subr.mxu0 %v281
        %2955 = vmatpush1.msra.mxu0 %v280
        %2956 = vmatprep.subr.mxu0 %v249
        %2957 = vmatpush1.msra.mxu0 %v248
        %2958 = vmatprep.subr.mxu0 0.0
        %2959 = vmatpush2.msra.mxu0 0.0
        %2960 = vmatprep.subr.mxu0 0.0
        %2961 = vmatpush2.msra.mxu0 0.0
        %2962 = vmatprep.subr.mxu0 0.0
        %2963 = vmatpush2.msra.mxu0 0.0
        %2964 = vmatprep.subr.mxu0 0.0
        %2965 = vmatpush2.msra.mxu0 0.0
        %2966 = vmatprep.subr.mxu0 0.0
        %2967 = vmatpush2.msra.mxu0 0.0
        %2968 = vmatprep.subr.mxu0 0.0
        %2969 = vmatpush2.msra.mxu0 0.0
        %2970 = vmatprep.subr.mxu0 0.0
        %2971 = vmatpush2.msra.mxu0 0.0
        %2972 = vmatprep.subr.mxu0 0.0
        %2973 = vmatpush2.msra.mxu0 0.0
        %2974 = vmatprep.subr.mxu0 0.0
        %2975 = vmatpush2.msra.mxu0 0.0
        %2976 = vmatprep.subr.mxu0 0.0
        %2977 = vmatpush2.msra.mxu0 0.0
        %2978 = vmatprep.subr.mxu0 0.0
        %2979 = vmatpush2.msra.mxu0 0.0
        %2980 = vmatprep.subr.mxu0 0.0
        %2981 = vmatpush2.msra.mxu0 0.0
        %2982 = vmatprep.subr.mxu0 0.0
        %2983 = vmatpush2.msra.mxu0 0.0
        %2984 = vmatprep.subr.mxu0 0.0
        %2985 = vmatpush2.msra.mxu0 0.0
        %2986 = vmatprep.subr.mxu0 0.0
        %2987 = vmatpush2.msra.mxu0 0.0
        %2988 = vmatprep.subr.mxu0 0.0
        %2989 = vmatpush2.msra.mxu0 0.0
        %2990 = vmatprep.mubr.f32.mxu0 0.0
        %2991 = vmatmul.mubr.f32.gmra.mxu0 %v2001
        %v2992 = vpop.f32.mrf.mxu0
        %v2993 = vadd.f32 %v1853, %v2992
        %v2994 = vpop.f32.mrf.mxu0
        %v2995 = vadd.f32 %v1855, %v2994
        %2996 = vdwg.mxu0
        %2997 = vmatprep.subr.mxu0 0.0
        %2998 = vmatpush1.msra.mxu0 0.0
        %2999 = vmatprep.subr.mxu0 0.0
        %3000 = vmatpush1.msra.mxu0 0.0
        %3001 = vmatprep.subr.mxu0 0.0
        %3002 = vmatpush1.msra.mxu0 0.0
        %3003 = vmatprep.subr.mxu0 0.0
        %3004 = vmatpush1.msra.mxu0 0.0
        %3005 = vmatprep.subr.mxu0 0.0
        %3006 = vmatpush1.msra.mxu0 0.0
        %3007 = vmatprep.subr.mxu0 0.0
        %3008 = vmatpush1.msra.mxu0 0.0
        %3009 = vmatprep.subr.mxu0 0.0
        %3010 = vmatpush1.msra.mxu0 0.0
        %3011 = vmatprep.subr.mxu0 0.0
        %3012 = vmatpush1.msra.mxu0 0.0
        %3013 = vmatprep.subr.mxu0 0.0
        %3014 = vmatpush1.msra.mxu0 0.0
        %3015 = vmatprep.subr.mxu0 0.0
        %3016 = vmatpush1.msra.mxu0 0.0
        %3017 = vmatprep.subr.mxu0 0.0
        %3018 = vmatpush1.msra.mxu0 0.0
        %3019 = vmatprep.subr.mxu0 0.0
        %3020 = vmatpush1.msra.mxu0 0.0
        %3021 = vmatprep.subr.mxu0 %v347
        %3022 = vmatpush1.msra.mxu0 %v346
        %3023 = vmatprep.subr.mxu0 %v315
        %3024 = vmatpush1.msra.mxu0 %v314
        %3025 = vmatprep.subr.mxu0 %v283
        %3026 = vmatpush1.msra.mxu0 %v282
        %3027 = vmatprep.subr.mxu0 %v251
        %3028 = vmatpush1.msra.mxu0 %v250
        %3029 = vmatprep.subr.mxu0 0.0
        %3030 = vmatpush2.msra.mxu0 0.0
        %3031 = vmatprep.subr.mxu0 0.0
        %3032 = vmatpush2.msra.mxu0 0.0
        %3033 = vmatprep.subr.mxu0 0.0
        %3034 = vmatpush2.msra.mxu0 0.0
        %3035 = vmatprep.subr.mxu0 0.0
        %3036 = vmatpush2.msra.mxu0 0.0
        %3037 = vmatprep.subr.mxu0 0.0
        %3038 = vmatpush2.msra.mxu0 0.0
        %3039 = vmatprep.subr.mxu0 0.0
        %3040 = vmatpush2.msra.mxu0 0.0
        %3041 = vmatprep.subr.mxu0 0.0
        %3042 = vmatpush2.msra.mxu0 0.0
        %3043 = vmatprep.subr.mxu0 0.0
        %3044 = vmatpush2.msra.mxu0 0.0
        %3045 = vmatprep.subr.mxu0 0.0
        %3046 = vmatpush2.msra.mxu0 0.0
        %3047 = vmatprep.subr.mxu0 0.0
        %3048 = vmatpush2.msra.mxu0 0.0
        %3049 = vmatprep.subr.mxu0 0.0
        %3050 = vmatpush2.msra.mxu0 0.0
        %3051 = vmatprep.subr.mxu0 0.0
        %3052 = vmatpush2.msra.mxu0 0.0
        %3053 = vmatprep.subr.mxu0 0.0
        %3054 = vmatpush2.msra.mxu0 0.0
        %3055 = vmatprep.subr.mxu0 0.0
        %3056 = vmatpush2.msra.mxu0 0.0
        %3057 = vmatprep.subr.mxu0 0.0
        %3058 = vmatpush2.msra.mxu0 0.0
        %3059 = vmatprep.subr.mxu0 0.0
        %3060 = vmatpush2.msra.mxu0 0.0
        %3061 = vmatprep.mubr.f32.mxu0 0.0
        %3062 = vmatmul.mubr.f32.gmra.mxu0 %v2001
        %v3063 = vpop.f32.mrf.mxu0
        %v3064 = vadd.f32 %v1924, %v3063
        %v3065 = vpop.f32.mrf.mxu0
        %v3066 = vadd.f32 %v1926, %v3065
        %3067 = vdwg.mxu0
        %3068 = vmatprep.subr.mxu0 0.0
        %3069 = vmatpush1.msra.mxu0 0.0
        %3070 = vmatprep.subr.mxu0 0.0
        %3071 = vmatpush1.msra.mxu0 0.0
        %3072 = vmatprep.subr.mxu0 0.0
        %3073 = vmatpush1.msra.mxu0 0.0
        %3074 = vmatprep.subr.mxu0 0.0
        %3075 = vmatpush1.msra.mxu0 0.0
        %3076 = vmatprep.subr.mxu0 0.0
        %3077 = vmatpush1.msra.mxu0 0.0
        %3078 = vmatprep.subr.mxu0 0.0
        %3079 = vmatpush1.msra.mxu0 0.0
        %3080 = vmatprep.subr.mxu0 0.0
        %3081 = vmatpush1.msra.mxu0 0.0
        %3082 = vmatprep.subr.mxu0 0.0
        %3083 = vmatpush1.msra.mxu0 0.0
        %3084 = vmatprep.subr.mxu0 0.0
        %3085 = vmatpush1.msra.mxu0 0.0
        %3086 = vmatprep.subr.mxu0 0.0
        %3087 = vmatpush1.msra.mxu0 0.0
        %3088 = vmatprep.subr.mxu0 0.0
        %3089 = vmatpush1.msra.mxu0 0.0
        %3090 = vmatprep.subr.mxu0 0.0
        %3091 = vmatpush1.msra.mxu0 0.0
        %3092 = vmatprep.subr.mxu0 %v349
        %3093 = vmatpush1.msra.mxu0 %v348
        %3094 = vmatprep.subr.mxu0 %v317
        %3095 = vmatpush1.msra.mxu0 %v316
        %3096 = vmatprep.subr.mxu0 %v285
        %3097 = vmatpush1.msra.mxu0 %v284
        %3098 = vmatprep.subr.mxu0 %v253
        %3099 = vmatpush1.msra.mxu0 %v252
        %3100 = vmatprep.subr.mxu0 0.0
        %3101 = vmatpush2.msra.mxu0 0.0
        %3102 = vmatprep.subr.mxu0 0.0
        %3103 = vmatpush2.msra.mxu0 0.0
        %3104 = vmatprep.subr.mxu0 0.0
        %3105 = vmatpush2.msra.mxu0 0.0
        %3106 = vmatprep.subr.mxu0 0.0
        %3107 = vmatpush2.msra.mxu0 0.0
        %3108 = vmatprep.subr.mxu0 0.0
        %3109 = vmatpush2.msra.mxu0 0.0
        %3110 = vmatprep.subr.mxu0 0.0
        %3111 = vmatpush2.msra.mxu0 0.0
        %3112 = vmatprep.subr.mxu0 0.0
        %3113 = vmatpush2.msra.mxu0 0.0
        %3114 = vmatprep.subr.mxu0 0.0
        %3115 = vmatpush2.msra.mxu0 0.0
        %3116 = vmatprep.subr.mxu0 0.0
        %3117 = vmatpush2.msra.mxu0 0.0
        %3118 = vmatprep.subr.mxu0 0.0
        %3119 = vmatpush2.msra.mxu0 0.0
        %3120 = vmatprep.subr.mxu0 0.0
        %3121 = vmatpush2.msra.mxu0 0.0
        %3122 = vmatprep.subr.mxu0 0.0
        %3123 = vmatpush2.msra.mxu0 0.0
        %3124 = vmatprep.subr.mxu0 0.0
        %3125 = vmatpush2.msra.mxu0 0.0
        %3126 = vmatprep.subr.mxu0 0.0
        %3127 = vmatpush2.msra.mxu0 0.0
        %3128 = vmatprep.subr.mxu0 0.0
        %3129 = vmatpush2.msra.mxu0 0.0
        %3130 = vmatprep.subr.mxu0 0.0
        %3131 = vmatpush2.msra.mxu0 0.0
        %3132 = vmatprep.mubr.f32.mxu0 0.0
        %3133 = vmatmul.mubr.f32.gmra.mxu0 %v2001
        %v3134 = vpop.f32.mrf.mxu0
        %v3135 = vadd.f32 %v1995, %v3134
        %v3136 = vpop.f32.mrf.mxu0
        %v3137 = vadd.f32 %v1997, %v3136
        %3138 = vdwg.mxu0
        %3139 = vst [vmem:[%s214] sm:$0xff] %v2070
        %3140 = vst [vmem:[%s214 + $0x8] sm:$0xff] %v2072
        %3141 = vst [vmem:[%s214 + $0x10] sm:$0xff] %v2141
        %3142 = vst [vmem:[%s214 + $0x18] sm:$0xff] %v2143
        %3143 = vst [vmem:[%s214 + $0x20] sm:$0xff] %v2212
        %3144 = vst [vmem:[%s214 + $0x28] sm:$0xff] %v2214
        %3145 = vst [vmem:[%s214 + $0x30] sm:$0xff] %v2283
        %3146 = vst [vmem:[%s214 + $0x38] sm:$0xff] %v2285
        %3147 = vst [vmem:[%s214 + $0x40] sm:$0xff] %v2354
        %3148 = vst [vmem:[%s214 + $0x48] sm:$0xff] %v2356
        %3149 = vst [vmem:[%s214 + $0x50] sm:$0xff] %v2425
        %3150 = vst [vmem:[%s214 + $0x58] sm:$0xff] %v2427
        %3151 = vst [vmem:[%s214 + $0x60] sm:$0xff] %v2496
        %3152 = vst [vmem:[%s214 + $0x68] sm:$0xff] %v2498
        %3153 = vst [vmem:[%s214 + $0x70] sm:$0xff] %v2567
        %3154 = vst [vmem:[%s214 + $0x78] sm:$0xff] %v2569
        %3155 = vst [vmem:[%s214 + $0x80] sm:$0xff] %v2638
        %3156 = vst [vmem:[%s214 + $0x88] sm:$0xff] %v2640
        %3157 = vst [vmem:[%s214 + $0x90] sm:$0xff] %v2709
        %3158 = vst [vmem:[%s214 + $0x98] sm:$0xff] %v2711
        %3159 = vst [vmem:[%s214 + $0xa0] sm:$0xff] %v2780
        %3160 = vst [vmem:[%s214 + $0xa8] sm:$0xff] %v2782
        %3161 = vst [vmem:[%s214 + $0xb0] sm:$0xff] %v2851
        %3162 = vst [vmem:[%s214 + $0xb8] sm:$0xff] %v2853
        %3163 = vst [vmem:[%s214 + $0xc0] sm:$0xff] %v2922
        %3164 = vst [vmem:[%s214 + $0xc8] sm:$0xff] %v2924
        %3165 = vst [vmem:[%s214 + $0xd0] sm:$0xff] %v2993
        %3166 = vst [vmem:[%s214 + $0xd8] sm:$0xff] %v2995
        %3167 = vst [vmem:[%s214 + $0xe0] sm:$0xff] %v3064
        %3168 = vst [vmem:[%s214 + $0xe8] sm:$0xff] %v3066
        %3169 = vst [vmem:[%s214 + $0xf0] sm:$0xff] %v3135
        %3170 = vst [vmem:[%s214 + $0xf8] sm:$0xff] %v3137
        %3172 = vrot.lane.b32.xlu0 %v3137, 32
        %v3173 = vpop.permute.xlu0 %3172
        %3175 = vst.msk [vmem:[#allocation2] sm:$0xff] %vm1999, %v3173
        %s3176 = sand.u32 %s97, 1
        %s3177 = scalar_lea.sflag [#allocation5], %s3176
        %s3178 = sand.u32 %s97, 1
        %s3179 = smul.addr %s3178, 256
        %s3180 = scalar_lea.vmem [#allocation9], %s3179
        // Predicated region
        $region49: #{tpu_custom_call.1} parent=31 // pred_check
          %p3181 = pneg %p107
        $region50: #{tpu_custom_call.1} parent=31 // pred_check_branch
          %3183 = sbr.rel (%p3181) target = $region52
        $region51: #{tpu_custom_call.1} parent=31 // pred_region
          %s3185 = ssub.s32 4096, 4096
          %3186 = vsyncadd %s3177, %s3185
          %s3187 = smul.addr %s21, 32
          %s3188 = smul.addr %s3187, 128
          %s3189 = scalar_lea.hbm %s3, %s3188
          %s3191 = sshll.u32 %s3180, 4
          %s3192 = int_to_ptr.vmem [resolvable:$true] %s3191
          %3194 = dma.vmem_to_hbm [thread:$0]  %s3192, 4096, %s3189, %s3177
        $region52: #{tpu_custom_call.1} parent=31 // pred_fallthru
          _
      $region32: #{tpu_custom_call.1} parent=5 // pred_fallthru
        _
      %p3195 = scmp.le.s32.totalorder 2, %s16
      // Predicated region
      $region53: #{tpu_custom_call.1} parent=5 // pred_check
        %p3196 = pneg %p3195
      $region54: #{tpu_custom_call.1} parent=5 // pred_check_branch
        %3198 = sbr.rel (%p3196) target = $region56
      $region55: #{tpu_custom_call.1} parent=5 // pred_region
        %s3199 = ssub.s32 %s16, 2
        // Predicated region
        $region57: #{tpu_custom_call.1} parent=55 // pred_check
          %p3200 = pneg %p113
        $region58: #{tpu_custom_call.1} parent=55 // pred_check_branch
          %3202 = sbr.rel (%p3200) target = $region60
        $region59: #{tpu_custom_call.1} parent=55 // pred_region
          %s3203 = sand.u32 %s98, 1
          %s3204 = scalar_lea.sflag [#allocation5], %s3203
          %s3205 = sand.u32 %s98, 1
          %s3206 = smul.addr %s3205, 256
          %s3207 = scalar_lea.vmem [#allocation9], %s3206
          %3208 = dma.done %s3204, 4096
        $region60: #{tpu_custom_call.1} parent=55 // pred_fallthru
          _
      $region56: #{tpu_custom_call.1} parent=5 // pred_fallthru
        _
    $region6: #{tpu_custom_call.1} parent=1 // loop_footer
      %s20 = sadd.s32 1, %s16
    $region7: #{tpu_custom_call.1} parent=1 // loop_footer_branch
      %15 = sbr.rel target = $region3
    $region8: #{tpu_custom_call.1} parent=1 // loop_exit
      _
    %3209 = vsyncpa [#allocation4], 1
    %s3210 = scalar_lea.sflag [#allocation4], 1
    %3211 = vsyncpa %s3210, 1
    %3212 = vsyncpa [#allocation7], 1
    %3213 = vsyncpa [#allocation5], 1
    %s3214 = scalar_lea.sflag [#allocation5], 1
    %3215 = vsyncpa %s3214, 1

</llo_original>
